<compile_context>
chip_gen: v7x
topology: tpu7x:2x2x1
jax: 0.10.0
libtpu: 0.0.40
codegen_flags: <defaults>
</compile_context>

<pallas_src>
import functools

import jax
import jax.numpy as jnp
from jax import lax
from jax.experimental import pallas as pl
from jax.experimental.pallas import tpu as pltpu


def _round_up(n, m):
    return ((n + m - 1) // m) * m


def _mlp_kernel(x_ref, w1_ref, b1_ref, w2_ref, b2_ref, w3_ref, b3_ref, o_ref,
                *, compute_dtype, precision):
    # Cast x to the MXU operand dtype *inside* the kernel (saves a wrapper-side
    # HBM pass over x). Biases stay f32 and are added to the f32 accumulator.
    x = x_ref[...].astype(compute_dtype)

    # fc1 + ReLU  (f32 accumulation on the MXU)
    h1 = jnp.dot(x, w1_ref[...], preferred_element_type=jnp.float32,
                 precision=precision)
    h1 = jnp.maximum(h1 + b1_ref[...], 0.0).astype(compute_dtype)

    # fc2 + ReLU
    h2 = jnp.dot(h1, w2_ref[...], preferred_element_type=jnp.float32,
                 precision=precision)
    h2 = jnp.maximum(h2 + b2_ref[...], 0.0).astype(compute_dtype)

    # fc3 (no activation)
    out = jnp.dot(h2, w3_ref[...], preferred_element_type=jnp.float32,
                  precision=precision)
    o_ref[...] = (out + b3_ref[...]).astype(o_ref.dtype)


def prepare_params(params, compute_dtype=jnp.bfloat16):
    """One-time parameter preparation (do this once, outside the hot path).

    MXU operands (weights) are stored in `compute_dtype` (bf16 recommended on
    v6e/v7x); biases are stored in f32 and added to the f32 accumulator.
    """
    return {
        "w1": params["w1"].astype(compute_dtype),
        "w2": params["w2"].astype(compute_dtype),
        "w3": params["w3"].astype(compute_dtype),
        "b1": params["b1"].astype(jnp.float32),
        "b2": params["b2"].astype(jnp.float32),
        "b3": params["b3"].astype(jnp.float32),
    }


def predictor_forward(x, prepared, *, tile_b=None, out_dtype=jnp.float32):
    """y = fc3(relu(fc2(relu(fc1(x))))).

    x: (B, conv_output_size) f32 (cast to the weights' dtype inside the kernel).
    prepared: output of `prepare_params` (weights pre-transposed to
      (in, out) layout, already cast).
    out_dtype: output dtype (f32 default; bf16 halves output writeback bytes
      on HBM-bound v7x if the consumer accepts it).
    """
    w1, b1 = prepared["w1"], prepared["b1"]
    w2, b2 = prepared["w2"], prepared["b2"]
    w3, b3 = prepared["w3"], prepared["b3"]

    B, D_in = x.shape
    H = w1.shape[1]
    D_out = w3.shape[1]

    compute_dtype = w1.dtype
    # Tight MXU precision only for the f32 verification path; bf16 operands
    # use the default (single-pass) MXU mode.
    precision = (lax.Precision.HIGHEST
                 if compute_dtype == jnp.float32 else None)

    # Grid-step heuristic (dispatch/per-step overhead dominates at small B):
    #   * B <= 1024: single grid step with block == full array (no batch pad,
    #     no output slice, no (8,128) divisibility needed).
    #   * B  > 1024: 1024-row tiles (x tile ~2.25 MiB f32, double-buffered
    #     ~4.5 MiB; well inside the 32 MiB default scoped VMEM on all gens).
    #     On v7x this also yields >= 2 "parallel" steps to feed both TCs.
    if tile_b is None:
        tile_b = B if B <= 1024 else 1024

    # Pad the batch only when a multi-step grid needs it; padded rows are
    # zeros and get sliced off the output.
    B_pad = _round_up(B, tile_b)
    if B_pad != B:
        x = jnp.pad(x, ((0, B_pad - B), (0, 0)))

    grid = (B_pad // tile_b,)

    # Weights/biases are grid-constant (constant index_map) so Pallas fetches
    # them once; at ~0.2-0.4 MiB total their buffering is negligible.
    full = lambda shape: pl.BlockSpec(shape, lambda i: (0, 0))

    kernel = functools.partial(_mlp_kernel,
                               compute_dtype=compute_dtype,
                               precision=precision)

    out = pl.pallas_call(
        kernel,
        out_shape=jax.ShapeDtypeStruct((B_pad, D_out), out_dtype),
        grid_spec=pltpu.PrefetchScalarGridSpec(
            num_scalar_prefetch=0,
            grid=grid,
            in_specs=[
                pl.BlockSpec((tile_b, D_in), lambda i: (i, 0)),  # x tile (f32)
                full((D_in, H)),   # w1
                full((1, H)),      # b1
                full((H, H)),      # w2
                full((1, H)),      # b2
                full((H, D_out)),  # w3
                full((1, D_out)),  # b3
            ],
            out_specs=pl.BlockSpec((tile_b, D_out), lambda i: (i, 0)),
        ),
        compiler_params=pltpu.CompilerParams(
            dimension_semantics=("parallel",),
        ),
    )(x, w1, b1, w2, b2, w3, b3)

    return out[:B] if B_pad != B else out


def init_params(key, conv_output_size, hidden_size, dim_out):
    """Deterministic synthetic init, matching nn.Linear shapes.

    PyTorch nn.Linear stores weight as (out, in); we keep the math identical
    (y = x @ W.T + b) by storing the transposed (in, out) layout directly.
    """
    k1, k2, k3, k4, k5, k6 = jax.random.split(key, 6)
    scale1 = 1.0 / jnp.sqrt(conv_output_size)
    scale2 = 1.0 / jnp.sqrt(hidden_size)
    return {
        "w1": jax.random.uniform(k1, (conv_output_size, hidden_size),
                                 jnp.float32, -scale1, scale1),
        "b1": jax.random.uniform(k2, (1, hidden_size), jnp.float32,
                                 -scale1, scale1),
        "w2": jax.random.uniform(k3, (hidden_size, hidden_size),
                                 jnp.float32, -scale2, scale2),
        "b2": jax.random.uniform(k4, (1, hidden_size), jnp.float32,
                                 -scale2, scale2),
        "w3": jax.random.uniform(k5, (hidden_size, dim_out),
                                 jnp.float32, -scale2, scale2),
        "b3": jax.random.uniform(k6, (1, dim_out), jnp.float32,
                                 -scale2, scale2),
    }


def predictor_ref(x, p):
    h1 = jnp.maximum(x @ p["w1"] + p["b1"], 0.0)
    h2 = jnp.maximum(h1 @ p["w2"] + p["b2"], 0.0)
    return h2 @ p["w3"] + p["b3"]


if __name__ == "__main__":
    # args.architecture == 'data-efficient' -> conv_output_size = 576
    CONV_OUT = 576
    HIDDEN = 128      # args.hidden_size
    DIM_OUT = 128     # default dim_out
    BATCH = 20        # not a multiple of 8: exercises the tile_b = B path

    key = jax.random.PRNGKey(0)
    kx, kp = jax.random.split(key)
    x = jax.random.normal(kx, (BATCH, CONV_OUT), jnp.float32)
    params = init_params(kp, CONV_OUT, HIDDEN, DIM_OUT)

    ref = predictor_ref(x, params)

    # f32 operands (HIGHEST MXU precision inside the kernel): tight check of
    # the single-step (tile_b = B, no pad, no slice) path.
    prepared_f32 = prepare_params(params, compute_dtype=jnp.float32)
    out_f32 = jax.block_until_ready(predictor_forward(x, prepared_f32))
    assert out_f32.shape == (BATCH, DIM_OUT)
    assert jnp.allclose(out_f32, ref, atol=1e-4, rtol=1e-4), \
        "f32 mismatch vs reference"

    # bf16 operands (default; MXU-native on v6e/v7x), f32 accumulation.
    prepared_bf16 = prepare_params(params)  # one-time cast, reused per call
    out_bf16 = jax.block_until_ready(predictor_forward(x, prepared_bf16))
    assert out_bf16.shape == (BATCH, DIM_OUT)
    assert jnp.allclose(out_bf16, ref, atol=5e-2, rtol=5e-2), \
        "bf16 mismatch vs reference"

    # Multi-step / batch-padding path (forced small tile): 2 "parallel" grid
    # steps, padded rows sliced off the output.
    out_multi = jax.block_until_ready(
        predictor_forward(x, prepared_bf16, tile_b=16))
    assert out_multi.shape == (BATCH, DIM_OUT)
    assert jnp.allclose(out_multi, ref, atol=5e-2, rtol=5e-2), \
        "multi-step mismatch vs reference"

    print("KERNEL_OK")
</pallas_src>

<mosaic_0001>
module attributes {stable_mosaic.version = 11 : i64} {
  func.func @_mlp_kernel(%arg0: i32, %arg1: memref<20x576xf32, #tpu.memory_space<vmem>>, %arg2: memref<576x128xf32, #tpu.memory_space<vmem>>, %arg3: memref<1x128xf32, #tpu.memory_space<vmem>>, %arg4: memref<128x128xf32, #tpu.memory_space<vmem>>, %arg5: memref<1x128xf32, #tpu.memory_space<vmem>>, %arg6: memref<128x128xf32, #tpu.memory_space<vmem>>, %arg7: memref<1x128xf32, #tpu.memory_space<vmem>>, %arg8: memref<20x128xf32, #tpu.memory_space<vmem>>) attributes {dimension_semantics = [#tpu.dimension_semantics<parallel>], iteration_bounds = array<i64: 1>, scalar_prefetch = 0 : i64, scratch_operands = 0 : i64, tpu.core_type = #tpu.core_type<tc>, window_params = [{transform_indices = @transform_0, window_bounds = array<i64: 20, 576>}, {pipeline_mode = #tpu.pipeline_mode<synchronous>, transform_indices = @transform_1, window_bounds = array<i64: 576, 128>}, {pipeline_mode = #tpu.pipeline_mode<synchronous>, transform_indices = @transform_2, window_bounds = array<i64: 1, 128>}, {pipeline_mode = #tpu.pipeline_mode<synchronous>, transform_indices = @transform_3, window_bounds = array<i64: 128, 128>}, {pipeline_mode = #tpu.pipeline_mode<synchronous>, transform_indices = @transform_4, window_bounds = array<i64: 1, 128>}, {pipeline_mode = #tpu.pipeline_mode<synchronous>, transform_indices = @transform_5, window_bounds = array<i64: 128, 128>}, {pipeline_mode = #tpu.pipeline_mode<synchronous>, transform_indices = @transform_6, window_bounds = array<i64: 1, 128>}, {transform_indices = @transform_7, window_bounds = array<i64: 20, 128>}]} {
    %c0 = arith.constant 0 : index
    %c0_0 = arith.constant 0 : index
    %0 = vector.load %arg1[%c0, %c0_0] : memref<20x576xf32, #tpu.memory_space<vmem>>, vector<20x576xf32>
    %c0_1 = arith.constant 0 : index
    %c0_2 = arith.constant 0 : index
    %1 = vector.load %arg2[%c0_1, %c0_2] : memref<576x128xf32, #tpu.memory_space<vmem>>, vector<576x128xf32>
    %cst = arith.constant dense<0.000000e+00> : vector<20x128xf32>
    %2 = tpu.matmul %0, %1, %cst {dimension_numbers = #tpu.dot_dimension_numbers<[1], [0], [0], [1], [0, 0, 1, 1], [], []>, precision = #tpu.contract_precision<fp32>} : vector<20x576xf32>, vector<576x128xf32>, vector<20x128xf32> -> vector<20x128xf32>
    %c0_3 = arith.constant 0 : index
    %c0_4 = arith.constant 0 : index
    %3 = vector.load %arg3[%c0_3, %c0_4] : memref<1x128xf32, #tpu.memory_space<vmem>>, vector<1x128xf32>
    %4 = vector.broadcast %3 : vector<1x128xf32> to vector<20x128xf32>
    %5 = arith.addf %2, %4 : vector<20x128xf32>
    %cst_5 = arith.constant 0.000000e+00 : f32
    %6 = vector.broadcast %cst_5 : f32 to vector<20x128xf32>
    %7 = arith.maximumf %5, %6 : vector<20x128xf32>
    %c0_6 = arith.constant 0 : index
    %c0_7 = arith.constant 0 : index
    %8 = vector.load %arg4[%c0_6, %c0_7] : memref<128x128xf32, #tpu.memory_space<vmem>>, vector<128x128xf32>
    %cst_8 = arith.constant dense<0.000000e+00> : vector<20x128xf32>
    %9 = tpu.matmul %7, %8, %cst_8 {dimension_numbers = #tpu.dot_dimension_numbers<[1], [0], [0], [1], [0, 0, 1, 1], [], []>, precision = #tpu.contract_precision<fp32>} : vector<20x128xf32>, vector<128x128xf32>, vector<20x128xf32> -> vector<20x128xf32>
    %c0_9 = arith.constant 0 : index
    %c0_10 = arith.constant 0 : index
    %10 = vector.load %arg5[%c0_9, %c0_10] : memref<1x128xf32, #tpu.memory_space<vmem>>, vector<1x128xf32>
    %11 = vector.broadcast %10 : vector<1x128xf32> to vector<20x128xf32>
    %12 = arith.addf %9, %11 : vector<20x128xf32>
    %cst_11 = arith.constant 0.000000e+00 : f32
    %13 = vector.broadcast %cst_11 : f32 to vector<20x128xf32>
    %14 = arith.maximumf %12, %13 : vector<20x128xf32>
    %c0_12 = arith.constant 0 : index
    %c0_13 = arith.constant 0 : index
    %15 = vector.load %arg6[%c0_12, %c0_13] : memref<128x128xf32, #tpu.memory_space<vmem>>, vector<128x128xf32>
    %cst_14 = arith.constant dense<0.000000e+00> : vector<20x128xf32>
    %16 = tpu.matmul %14, %15, %cst_14 {dimension_numbers = #tpu.dot_dimension_numbers<[1], [0], [0], [1], [0, 0, 1, 1], [], []>, precision = #tpu.contract_precision<fp32>} : vector<20x128xf32>, vector<128x128xf32>, vector<20x128xf32> -> vector<20x128xf32>
    %c0_15 = arith.constant 0 : index
    %c0_16 = arith.constant 0 : index
    %17 = vector.load %arg7[%c0_15, %c0_16] : memref<1x128xf32, #tpu.memory_space<vmem>>, vector<1x128xf32>
    %18 = vector.broadcast %17 : vector<1x128xf32> to vector<20x128xf32>
    %19 = arith.addf %16, %18 : vector<20x128xf32>
    %c0_17 = arith.constant 0 : index
    %c0_18 = arith.constant 0 : index
    %20 = vector.load %arg8[%c0_17, %c0_18] : memref<20x128xf32, #tpu.memory_space<vmem>>, vector<20x128xf32>
    tpu.vector_store %arg8[%c0_17, %c0_18], %19 {strides = array<i32>} : memref<20x128xf32, #tpu.memory_space<vmem>>, vector<20x128xf32>,
    return
  }
  func.func @transform_0(%arg0: i32) -> (i32, i32) {
    %c0_i32 = arith.constant 0 : i32
    %c0_i32_0 = arith.constant 0 : i32
    return %arg0, %c0_i32 : i32, i32
  }
  func.func @transform_1(%arg0: i32) -> (i32, i32) {
    %c0_i32 = arith.constant 0 : i32
    %c0_i32_0 = arith.constant 0 : i32
    %c0_i32_1 = arith.constant 0 : i32
    return %c0_i32, %c0_i32_0 : i32, i32
  }
  func.func @transform_2(%arg0: i32) -> (i32, i32) {
    %c0_i32 = arith.constant 0 : i32
    %c0_i32_0 = arith.constant 0 : i32
    %c0_i32_1 = arith.constant 0 : i32
    return %c0_i32, %c0_i32_0 : i32, i32
  }
  func.func @transform_3(%arg0: i32) -> (i32, i32) {
    %c0_i32 = arith.constant 0 : i32
    %c0_i32_0 = arith.constant 0 : i32
    %c0_i32_1 = arith.constant 0 : i32
    return %c0_i32, %c0_i32_0 : i32, i32
  }
  func.func @transform_4(%arg0: i32) -> (i32, i32) {
    %c0_i32 = arith.constant 0 : i32
    %c0_i32_0 = arith.constant 0 : i32
    %c0_i32_1 = arith.constant 0 : i32
    return %c0_i32, %c0_i32_0 : i32, i32
  }
  func.func @transform_5(%arg0: i32) -> (i32, i32) {
    %c0_i32 = arith.constant 0 : i32
    %c0_i32_0 = arith.constant 0 : i32
    %c0_i32_1 = arith.constant 0 : i32
    return %c0_i32, %c0_i32_0 : i32, i32
  }
  func.func @transform_6(%arg0: i32) -> (i32, i32) {
    %c0_i32 = arith.constant 0 : i32
    %c0_i32_0 = arith.constant 0 : i32
    %c0_i32_1 = arith.constant 0 : i32
    return %c0_i32, %c0_i32_0 : i32, i32
  }
  func.func @transform_7(%arg0: i32) -> (i32, i32) {
    %c0_i32 = arith.constant 0 : i32
    %c0_i32_0 = arith.constant 0 : i32
    return %arg0, %c0_i32 : i32, i32
  }
}

</mosaic_0001>

<llo_original>
// kernel: tpu_custom_call.1
$region0: #{tpu_custom_call.1}
  #allocation0 [shape = 'u32[]', space=smem, size = 0x4, offset = 0x4, fixed_abs, tag = 'smem constant byte address 0x4 - core index']
  #allocation1 [shape = 'u32[144,128]{1,0:T(1,128)}', space=vmem, size = 0x12000, scoped, tag = 'internal scratch']
  %s0 = inlined_call_operand.hbm [shape: f32[20,576], index: 0, kind: input, shape index: {}]
  %s1 = inlined_call_operand.hbm [shape: f32[576,128], index: 1, kind: input, shape index: {}]
  %s2 = inlined_call_operand.vmem [shape: f32[1,128], index: 2, kind: input, shape index: {}]
  %s3 = inlined_call_operand.hbm [shape: f32[128,128], index: 3, kind: input, shape index: {}]
  %s4 = inlined_call_operand.vmem [shape: f32[1,128], index: 4, kind: input, shape index: {}]
  %s5 = inlined_call_operand.hbm [shape: f32[128,128], index: 5, kind: input, shape index: {}]
  %s6 = inlined_call_operand.vmem [shape: f32[1,128], index: 6, kind: input, shape index: {}]
  %s7 = inlined_call_operand.hbm [shape: f32[20,128], index: 7, kind: output, shape index: {}]
  %s8 = sld [smem:[#allocation0]]
  $region54: #{tpu_custom_call.1} parent=0
    _
  %s10 = ssub.s32 1, %s8
  %s11 = scalar_select 0, %s10, %s8
  $region1: #{tpu_custom_call.1} parent=0
    #allocation2 [shape = 'u8[61440]{0}', space=vmem, size = 0xf000, scoped, tag = 'input window, operand 0, single buffered']
    #allocation3 [shape = 's32[1]{0}', space=sflag, size = 0x4, scoped, tag = 'scoped memory for tpu_custom_call.1']
    #allocation4 [shape = 's32[1]{0}', space=sflag, size = 0x4, scoped, tag = 'scoped memory for tpu_custom_call.1']
    #allocation5 [shape = 'u8[294912]{0}', space=vmem, size = 0x48000, scoped, tag = 'input window, operand 1, single buffered']
    #allocation6 [shape = 's32[1]{0}', space=sflag, size = 0x4, scoped, tag = 'scoped memory for tpu_custom_call.1']
    #allocation7 [shape = 'u8[65536]{0}', space=vmem, size = 0x10000, scoped, tag = 'input window, operand 3, single buffered']
    #allocation8 [shape = 'u8[65536]{0}', space=vmem, size = 0x10000, scoped, tag = 'input window, operand 5, single buffered']
    #allocation9 [shape = 's32[1]{0}', space=sflag, size = 0x4, scoped, tag = 'scoped memory for tpu_custom_call.1']
    #allocation10 [shape = 'u8[12288]{0}', space=vmem, size = 0x3000, scoped, tag = 'output window, operand 0, single buffered']
    %12 = vsyncpa [#allocation3], 0
    %13 = vsyncpa [#allocation6], 0
    %14 = vsyncpa [#allocation9], 0
    %15 = vsyncpa [#allocation4], 0
    // Predicated region
    $region2: #{tpu_custom_call.1} parent=1 // pred_check
      _
    $region3: #{tpu_custom_call.1} parent=1 // pred_check_branch
      %17 = sbr.rel (0) target = $region5
    $region4: #{tpu_custom_call.1} parent=1 // pred_region
      %s19 = ssub.s32 1920, 1920
      %20 = vsyncadd [#allocation3], %s19
      %s21 = sshll.u32 [#allocation2], 4
      %s22 = int_to_ptr.vmem [resolvable:$true] %s21
      %27 = dma.hbm_to_vmem [thread:$0]  %s0, 1920, %s22, [#allocation3], 640, 640, 40
    $region5: #{tpu_custom_call.1} parent=1 // pred_fallthru
      _
    // Predicated region
    $region6: #{tpu_custom_call.1} parent=1 // pred_check
      _
    $region7: #{tpu_custom_call.1} parent=1 // pred_check_branch
      %29 = sbr.rel (0) target = $region9
    $region8: #{tpu_custom_call.1} parent=1 // pred_region
      %s31 = ssub.s32 9216, 9216
      %32 = vsyncadd [#allocation6], %s31
      %s33 = sshll.u32 [#allocation5], 4
      %s34 = int_to_ptr.vmem [resolvable:$true] %s33
      %39 = dma.hbm_to_vmem [thread:$0]  %s1, 9216, %s34, [#allocation6], 128, 128, 8
    $region9: #{tpu_custom_call.1} parent=1 // pred_fallthru
      _
    // Predicated region
    $region10: #{tpu_custom_call.1} parent=1 // pred_check
      _
    $region11: #{tpu_custom_call.1} parent=1 // pred_check_branch
      %41 = sbr.rel (0) target = $region13
    $region12: #{tpu_custom_call.1} parent=1 // pred_region
      _
    $region13: #{tpu_custom_call.1} parent=1 // pred_fallthru
      _
    // Predicated region
    $region14: #{tpu_custom_call.1} parent=1 // pred_check
      _
    $region15: #{tpu_custom_call.1} parent=1 // pred_check_branch
      %43 = sbr.rel (0) target = $region17
    $region16: #{tpu_custom_call.1} parent=1 // pred_region
      %s45 = ssub.s32 2048, 2048
      %46 = vsyncadd [#allocation6], %s45
      %s47 = sshll.u32 [#allocation7], 4
      %s48 = int_to_ptr.vmem [resolvable:$true] %s47
      %53 = dma.hbm_to_vmem [thread:$0]  %s3, 2048, %s48, [#allocation6], 128, 128, 8
    $region17: #{tpu_custom_call.1} parent=1 // pred_fallthru
      _
    // Predicated region
    $region18: #{tpu_custom_call.1} parent=1 // pred_check
      _
    $region19: #{tpu_custom_call.1} parent=1 // pred_check_branch
      %55 = sbr.rel (0) target = $region21
    $region20: #{tpu_custom_call.1} parent=1 // pred_region
      _
    $region21: #{tpu_custom_call.1} parent=1 // pred_fallthru
      _
    // Predicated region
    $region22: #{tpu_custom_call.1} parent=1 // pred_check
      _
    $region23: #{tpu_custom_call.1} parent=1 // pred_check_branch
      %57 = sbr.rel (0) target = $region25
    $region24: #{tpu_custom_call.1} parent=1 // pred_region
      %s59 = ssub.s32 2048, 2048
      %60 = vsyncadd [#allocation9], %s59
      %s61 = sshll.u32 [#allocation8], 4
      %s62 = int_to_ptr.vmem [resolvable:$true] %s61
      %67 = dma.hbm_to_vmem [thread:$0]  %s5, 2048, %s62, [#allocation9], 128, 128, 8
    $region25: #{tpu_custom_call.1} parent=1 // pred_fallthru
      _
    // Predicated region
    $region26: #{tpu_custom_call.1} parent=1 // pred_check
      _
    $region27: #{tpu_custom_call.1} parent=1 // pred_check_branch
      %69 = sbr.rel (0) target = $region29
    $region28: #{tpu_custom_call.1} parent=1 // pred_region
      _
    $region29: #{tpu_custom_call.1} parent=1 // pred_fallthru
      _
    // Predicated region
    $region30: #{tpu_custom_call.1} parent=1 // pred_check
      _
    $region31: #{tpu_custom_call.1} parent=1 // pred_check_branch
      %71 = sbr.rel (0) target = $region33
    $region32: #{tpu_custom_call.1} parent=1 // pred_region
      %72 = dma.done [#allocation3], 1920
    $region33: #{tpu_custom_call.1} parent=1 // pred_fallthru
      _
    // Predicated region
    $region34: #{tpu_custom_call.1} parent=1 // pred_check
      _
    $region35: #{tpu_custom_call.1} parent=1 // pred_check_branch
      %74 = sbr.rel (0) target = $region37
    $region36: #{tpu_custom_call.1} parent=1 // pred_region
      %75 = dma.done [#allocation6], 9216
    $region37: #{tpu_custom_call.1} parent=1 // pred_fallthru
      _
    // Predicated region
    $region38: #{tpu_custom_call.1} parent=1 // pred_check
      _
    $region39: #{tpu_custom_call.1} parent=1 // pred_check_branch
      %77 = sbr.rel (0) target = $region41
    $region40: #{tpu_custom_call.1} parent=1 // pred_region
      %78 = dma.done [#allocation6], 2048
    $region41: #{tpu_custom_call.1} parent=1 // pred_fallthru
      _
    // Predicated region
    $region42: #{tpu_custom_call.1} parent=1 // pred_check
      _
    $region43: #{tpu_custom_call.1} parent=1 // pred_check_branch
      %80 = sbr.rel (0) target = $region45
    $region44: #{tpu_custom_call.1} parent=1 // pred_region
      %81 = dma.done [#allocation9], 2048
    $region45: #{tpu_custom_call.1} parent=1 // pred_fallthru
      _
    %v82 = vld [vmem:[#allocation2] sm:$0xff]
    %v83 = vld [vmem:[#allocation2 + $0x8] sm:$0xff]
    %v84 = vld [vmem:[#allocation2 + $0x10] sm:$0xff]
    %v85 = vld [vmem:[#allocation2 + $0x18] sm:$0xff]
    %v86 = vld [vmem:[#allocation2 + $0x20] sm:$0xff]
    %v87 = vld [vmem:[#allocation2 + $0x28] sm:$0xff]
    %v88 = vld [vmem:[#allocation2 + $0x30] sm:$0xff]
    %v89 = vld [vmem:[#allocation2 + $0x38] sm:$0xff]
    %v90 = vld [vmem:[#allocation2 + $0x40] sm:$0xff]
    %v91 = vld [vmem:[#allocation2 + $0x48] sm:$0xff]
    %v92 = vld [vmem:[#allocation2 + $0x50] sm:$0xf]
    %v93 = vld [vmem:[#allocation2 + $0x58] sm:$0xf]
    %v94 = vld [vmem:[#allocation2 + $0x60] sm:$0xf]
    %v95 = vld [vmem:[#allocation2 + $0x68] sm:$0xf]
    %v96 = vld [vmem:[#allocation2 + $0x70] sm:$0xf]
    %v97 = vld [vmem:[#allocation5] sm:$0xff]
    %v98 = vld [vmem:[#allocation5 + $0x8] sm:$0xff]
    %v99 = vld [vmem:[#allocation5 + $0x10] sm:$0xff]
    %v100 = vld [vmem:[#allocation5 + $0x18] sm:$0xff]
    %v101 = vld [vmem:[#allocation5 + $0x20] sm:$0xff]
    %v102 = vld [vmem:[#allocation5 + $0x28] sm:$0xff]
    %v103 = vld [vmem:[#allocation5 + $0x30] sm:$0xff]
    %v104 = vld [vmem:[#allocation5 + $0x38] sm:$0xff]
    %v105 = vld [vmem:[#allocation5 + $0x40] sm:$0xff]
    %v106 = vld [vmem:[#allocation5 + $0x48] sm:$0xff]
    %v107 = vld [vmem:[#allocation5 + $0x50] sm:$0xff]
    %v108 = vld [vmem:[#allocation5 + $0x58] sm:$0xff]
    %v109 = vld [vmem:[#allocation5 + $0x60] sm:$0xff]
    %v110 = vld [vmem:[#allocation5 + $0x68] sm:$0xff]
    %v111 = vld [vmem:[#allocation5 + $0x70] sm:$0xff]
    %v112 = vld [vmem:[#allocation5 + $0x78] sm:$0xff]
    %v113 = vld [vmem:[#allocation5 + $0x80] sm:$0xff]
    %v114 = vld [vmem:[#allocation5 + $0x88] sm:$0xff]
    %v115 = vld [vmem:[#allocation5 + $0x90] sm:$0xff]
    %v116 = vld [vmem:[#allocation5 + $0x98] sm:$0xff]
    %v117 = vld [vmem:[#allocation5 + $0xa0] sm:$0xff]
    %v118 = vld [vmem:[#allocation5 + $0xa8] sm:$0xff]
    %v119 = vld [vmem:[#allocation5 + $0xb0] sm:$0xff]
    %v120 = vld [vmem:[#allocation5 + $0xb8] sm:$0xff]
    %v121 = vld [vmem:[#allocation5 + $0xc0] sm:$0xff]
    %v122 = vld [vmem:[#allocation5 + $0xc8] sm:$0xff]
    %v123 = vld [vmem:[#allocation5 + $0xd0] sm:$0xff]
    %v124 = vld [vmem:[#allocation5 + $0xd8] sm:$0xff]
    %v125 = vld [vmem:[#allocation5 + $0xe0] sm:$0xff]
    %v126 = vld [vmem:[#allocation5 + $0xe8] sm:$0xff]
    %v127 = vld [vmem:[#allocation5 + $0xf0] sm:$0xff]
    %v128 = vld [vmem:[#allocation5 + $0xf8] sm:$0xff]
    %v129 = vld [vmem:[#allocation5 + $0x100] sm:$0xff]
    %v130 = vld [vmem:[#allocation5 + $0x108] sm:$0xff]
    %v131 = vld [vmem:[#allocation5 + $0x110] sm:$0xff]
    %v132 = vld [vmem:[#allocation5 + $0x118] sm:$0xff]
    %v133 = vld [vmem:[#allocation5 + $0x120] sm:$0xff]
    %v134 = vld [vmem:[#allocation5 + $0x128] sm:$0xff]
    %v135 = vld [vmem:[#allocation5 + $0x130] sm:$0xff]
    %v136 = vld [vmem:[#allocation5 + $0x138] sm:$0xff]
    %v137 = vld [vmem:[#allocation5 + $0x140] sm:$0xff]
    %v138 = vld [vmem:[#allocation5 + $0x148] sm:$0xff]
    %v139 = vld [vmem:[#allocation5 + $0x150] sm:$0xff]
    %v140 = vld [vmem:[#allocation5 + $0x158] sm:$0xff]
    %v141 = vld [vmem:[#allocation5 + $0x160] sm:$0xff]
    %v142 = vld [vmem:[#allocation5 + $0x168] sm:$0xff]
    %v143 = vld [vmem:[#allocation5 + $0x170] sm:$0xff]
    %v144 = vld [vmem:[#allocation5 + $0x178] sm:$0xff]
    %v145 = vld [vmem:[#allocation5 + $0x180] sm:$0xff]
    %v146 = vld [vmem:[#allocation5 + $0x188] sm:$0xff]
    %v147 = vld [vmem:[#allocation5 + $0x190] sm:$0xff]
    %v148 = vld [vmem:[#allocation5 + $0x198] sm:$0xff]
    %v149 = vld [vmem:[#allocation5 + $0x1a0] sm:$0xff]
    %v150 = vld [vmem:[#allocation5 + $0x1a8] sm:$0xff]
    %v151 = vld [vmem:[#allocation5 + $0x1b0] sm:$0xff]
    %v152 = vld [vmem:[#allocation5 + $0x1b8] sm:$0xff]
    %v153 = vld [vmem:[#allocation5 + $0x1c0] sm:$0xff]
    %v154 = vld [vmem:[#allocation5 + $0x1c8] sm:$0xff]
    %v155 = vld [vmem:[#allocation5 + $0x1d0] sm:$0xff]
    %v156 = vld [vmem:[#allocation5 + $0x1d8] sm:$0xff]
    %v157 = vld [vmem:[#allocation5 + $0x1e0] sm:$0xff]
    %v158 = vld [vmem:[#allocation5 + $0x1e8] sm:$0xff]
    %v159 = vld [vmem:[#allocation5 + $0x1f0] sm:$0xff]
    %v160 = vld [vmem:[#allocation5 + $0x1f8] sm:$0xff]
    %v161 = vld [vmem:[#allocation5 + $0x200] sm:$0xff]
    %v162 = vld [vmem:[#allocation5 + $0x208] sm:$0xff]
    %v163 = vld [vmem:[#allocation5 + $0x210] sm:$0xff]
    %v164 = vld [vmem:[#allocation5 + $0x218] sm:$0xff]
    %v165 = vld [vmem:[#allocation5 + $0x220] sm:$0xff]
    %v166 = vld [vmem:[#allocation5 + $0x228] sm:$0xff]
    %v167 = vld [vmem:[#allocation5 + $0x230] sm:$0xff]
    %v168 = vld [vmem:[#allocation5 + $0x238] sm:$0xff]
    %v169 = vld [vmem:[%s2] sm:$0x1]
    %v171 = vlaneseq
    %v172 = vshrl.u32 %v171, 7
    %v173 = vsub.s32 0, %v172
    %v174 = vrot.slane %v169, %v173
    %vm176 = vcmask 523264
    %v178 = vsel %vm176, %v86, 0
    %v181 = vsel %vm176, %v91, 0
    %v184 = vsel %vm176, %v96, 0
    %186 = vmatprep.subr.mxu0 0.0
    %v187 = vand.u32 %v97, 4294901760
    %188 = vmatpush1.msra.mxu0 %v187
    %189 = vmatprep.subr.mxu0 0.0
    %v190 = vand.u32 %v98, 4294901760
    %191 = vmatpush1.msra.mxu0 %v190
    %192 = vmatprep.subr.mxu0 0.0
    %v193 = vand.u32 %v99, 4294901760
    %194 = vmatpush1.msra.mxu0 %v193
    %195 = vmatprep.subr.mxu0 0.0
    %v196 = vand.u32 %v100, 4294901760
    %197 = vmatpush1.msra.mxu0 %v196
    %198 = vmatprep.subr.mxu0 0.0
    %v199 = vand.u32 %v101, 4294901760
    %200 = vmatpush1.msra.mxu0 %v199
    %201 = vmatprep.subr.mxu0 0.0
    %v202 = vand.u32 %v102, 4294901760
    %203 = vmatpush1.msra.mxu0 %v202
    %204 = vmatprep.subr.mxu0 0.0
    %v205 = vand.u32 %v103, 4294901760
    %206 = vmatpush1.msra.mxu0 %v205
    %207 = vmatprep.subr.mxu0 0.0
    %v208 = vand.u32 %v104, 4294901760
    %209 = vmatpush1.msra.mxu0 %v208
    %210 = vmatprep.subr.mxu0 0.0
    %v211 = vand.u32 %v105, 4294901760
    %212 = vmatpush1.msra.mxu0 %v211
    %213 = vmatprep.subr.mxu0 0.0
    %v214 = vand.u32 %v106, 4294901760
    %215 = vmatpush1.msra.mxu0 %v214
    %216 = vmatprep.subr.mxu0 0.0
    %v217 = vand.u32 %v107, 4294901760
    %218 = vmatpush1.msra.mxu0 %v217
    %219 = vmatprep.subr.mxu0 0.0
    %v220 = vand.u32 %v108, 4294901760
    %221 = vmatpush1.msra.mxu0 %v220
    %222 = vmatprep.subr.mxu0 0.0
    %v223 = vand.u32 %v109, 4294901760
    %224 = vmatpush1.msra.mxu0 %v223
    %225 = vmatprep.subr.mxu0 0.0
    %v226 = vand.u32 %v110, 4294901760
    %227 = vmatpush1.msra.mxu0 %v226
    %228 = vmatprep.subr.mxu0 0.0
    %v229 = vand.u32 %v111, 4294901760
    %230 = vmatpush1.msra.mxu0 %v229
    %231 = vmatprep.subr.mxu0 0.0
    %v232 = vand.u32 %v112, 4294901760
    %233 = vmatpush1.msra.mxu0 %v232
    %234 = vmatprep.subr.mxu0 0.0
    %v235 = vand.u32 %v113, 4294901760
    %236 = vmatpush1.msra.mxu0 %v235
    %237 = vmatprep.subr.mxu0 0.0
    %v238 = vand.u32 %v114, 4294901760
    %239 = vmatpush1.msra.mxu0 %v238
    %240 = vmatprep.subr.mxu0 0.0
    %v241 = vand.u32 %v115, 4294901760
    %242 = vmatpush1.msra.mxu0 %v241
    %243 = vmatprep.subr.mxu0 0.0
    %v244 = vand.u32 %v116, 4294901760
    %245 = vmatpush1.msra.mxu0 %v244
    %246 = vmatprep.subr.mxu0 0.0
    %v247 = vand.u32 %v117, 4294901760
    %248 = vmatpush1.msra.mxu0 %v247
    %249 = vmatprep.subr.mxu0 0.0
    %v250 = vand.u32 %v118, 4294901760
    %251 = vmatpush1.msra.mxu0 %v250
    %252 = vmatprep.subr.mxu0 0.0
    %v253 = vand.u32 %v119, 4294901760
    %254 = vmatpush1.msra.mxu0 %v253
    %255 = vmatprep.subr.mxu0 0.0
    %v256 = vand.u32 %v120, 4294901760
    %257 = vmatpush1.msra.mxu0 %v256
    %258 = vmatprep.subr.mxu0 0.0
    %v259 = vand.u32 %v121, 4294901760
    %260 = vmatpush1.msra.mxu0 %v259
    %261 = vmatprep.subr.mxu0 0.0
    %v262 = vand.u32 %v122, 4294901760
    %263 = vmatpush1.msra.mxu0 %v262
    %264 = vmatprep.subr.mxu0 0.0
    %v265 = vand.u32 %v123, 4294901760
    %266 = vmatpush1.msra.mxu0 %v265
    %267 = vmatprep.subr.mxu0 0.0
    %v268 = vand.u32 %v124, 4294901760
    %269 = vmatpush1.msra.mxu0 %v268
    %270 = vmatprep.subr.mxu0 0.0
    %v271 = vand.u32 %v125, 4294901760
    %272 = vmatpush1.msra.mxu0 %v271
    %273 = vmatprep.subr.mxu0 0.0
    %v274 = vand.u32 %v126, 4294901760
    %275 = vmatpush1.msra.mxu0 %v274
    %276 = vmatprep.subr.mxu0 0.0
    %v277 = vand.u32 %v127, 4294901760
    %278 = vmatpush1.msra.mxu0 %v277
    %279 = vmatprep.subr.mxu0 0.0
    %v280 = vand.u32 %v128, 4294901760
    %281 = vmatpush1.msra.mxu0 %v280
    %v282 = vand.u32 %v83, 4294901760
    %v283 = vsub.f32 %v83, %v282
    %v284 = vand.u32 %v283, 4294901760
    %v285 = vsub.f32 %v283, %v284
    %v286 = vand.u32 %v285, 4294901760
    %287 = vmatprep.mubr.f32.mxu0 %v286
    %v288 = vand.u32 %v82, 4294901760
    %v289 = vsub.f32 %v82, %v288
    %v290 = vand.u32 %v289, 4294901760
    %v291 = vsub.f32 %v289, %v290
    %v292 = vand.u32 %v291, 4294901760
    %293 = vmatmul.mubr.f32.gmra.mrb[0].mxu0 %v292
    %v294 = vpop.f32.mrb[0].mxu0
    %v295 = vadd.f32 %v174, %v294
    %v296 = vpop.f32.mrb[0].mxu0
    %v297 = vand.u32 %v88, 4294901760
    %v298 = vsub.f32 %v88, %v297
    %v299 = vand.u32 %v298, 4294901760
    %v300 = vsub.f32 %v298, %v299
    %v301 = vand.u32 %v300, 4294901760
    %302 = vmatprep.mubr.f32.mxu0 %v301
    %v303 = vand.u32 %v87, 4294901760
    %v304 = vsub.f32 %v87, %v303
    %v305 = vand.u32 %v304, 4294901760
    %v306 = vsub.f32 %v304, %v305
    %v307 = vand.u32 %v306, 4294901760
    %308 = vmatmul.mubr.f32.gmra.mrb[0].mxu0 %v307
    %v309 = vpop.f32.mrb[0].mxu0
    %v310 = vadd.f32 %v174, %v309
    %v311 = vpop.f32.mrb[0].mxu0
    %v312 = vand.u32 %v93, 4294901760
    %v313 = vsub.f32 %v93, %v312
    %v314 = vand.u32 %v313, 4294901760
    %v315 = vsub.f32 %v313, %v314
    %v316 = vand.u32 %v315, 4294901760
    %317 = vmatprep.mubr.f32.mxu0 %v316
    %v318 = vand.u32 %v92, 4294901760
    %v319 = vsub.f32 %v92, %v318
    %v320 = vand.u32 %v319, 4294901760
    %v321 = vsub.f32 %v319, %v320
    %v322 = vand.u32 %v321, 4294901760
    %323 = vmatmul.mubr.f32.gmra.mrb[0].mxu0 %v322
    %v324 = vpop.f32.mrb[0].mxu0
    %v325 = vadd.f32 %v174, %v324
    %v326 = vpop.f32.mrb[0].mxu0
    %327 = vdwg.mxu0
    %328 = vmatprep.subr.mxu0 0.0
    %v329 = vand.u32 %v97, 4294901760
    %v330 = vsub.f32 %v97, %v329
    %v331 = vand.u32 %v330, 4294901760
    %v332 = vsub.f32 %v330, %v331
    %v333 = vand.u32 %v332, 4294901760
    %334 = vmatpush1.msra.mxu0 %v333
    %335 = vmatprep.subr.mxu0 0.0
    %v336 = vand.u32 %v98, 4294901760
    %v337 = vsub.f32 %v98, %v336
    %v338 = vand.u32 %v337, 4294901760
    %v339 = vsub.f32 %v337, %v338
    %v340 = vand.u32 %v339, 4294901760
    %341 = vmatpush1.msra.mxu0 %v340
    %342 = vmatprep.subr.mxu0 0.0
    %v343 = vand.u32 %v99, 4294901760
    %v344 = vsub.f32 %v99, %v343
    %v345 = vand.u32 %v344, 4294901760
    %v346 = vsub.f32 %v344, %v345
    %v347 = vand.u32 %v346, 4294901760
    %348 = vmatpush1.msra.mxu0 %v347
    %349 = vmatprep.subr.mxu0 0.0
    %v350 = vand.u32 %v100, 4294901760
    %v351 = vsub.f32 %v100, %v350
    %v352 = vand.u32 %v351, 4294901760
    %v353 = vsub.f32 %v351, %v352
    %v354 = vand.u32 %v353, 4294901760
    %355 = vmatpush1.msra.mxu0 %v354
    %356 = vmatprep.subr.mxu0 0.0
    %v357 = vand.u32 %v101, 4294901760
    %v358 = vsub.f32 %v101, %v357
    %v359 = vand.u32 %v358, 4294901760
    %v360 = vsub.f32 %v358, %v359
    %v361 = vand.u32 %v360, 4294901760
    %362 = vmatpush1.msra.mxu0 %v361
    %363 = vmatprep.subr.mxu0 0.0
    %v364 = vand.u32 %v102, 4294901760
    %v365 = vsub.f32 %v102, %v364
    %v366 = vand.u32 %v365, 4294901760
    %v367 = vsub.f32 %v365, %v366
    %v368 = vand.u32 %v367, 4294901760
    %369 = vmatpush1.msra.mxu0 %v368
    %370 = vmatprep.subr.mxu0 0.0
    %v371 = vand.u32 %v103, 4294901760
    %v372 = vsub.f32 %v103, %v371
    %v373 = vand.u32 %v372, 4294901760
    %v374 = vsub.f32 %v372, %v373
    %v375 = vand.u32 %v374, 4294901760
    %376 = vmatpush1.msra.mxu0 %v375
    %377 = vmatprep.subr.mxu0 0.0
    %v378 = vand.u32 %v104, 4294901760
    %v379 = vsub.f32 %v104, %v378
    %v380 = vand.u32 %v379, 4294901760
    %v381 = vsub.f32 %v379, %v380
    %v382 = vand.u32 %v381, 4294901760
    %383 = vmatpush1.msra.mxu0 %v382
    %384 = vmatprep.subr.mxu0 0.0
    %v385 = vand.u32 %v105, 4294901760
    %v386 = vsub.f32 %v105, %v385
    %v387 = vand.u32 %v386, 4294901760
    %v388 = vsub.f32 %v386, %v387
    %v389 = vand.u32 %v388, 4294901760
    %390 = vmatpush1.msra.mxu0 %v389
    %391 = vmatprep.subr.mxu0 0.0
    %v392 = vand.u32 %v106, 4294901760
    %v393 = vsub.f32 %v106, %v392
    %v394 = vand.u32 %v393, 4294901760
    %v395 = vsub.f32 %v393, %v394
    %v396 = vand.u32 %v395, 4294901760
    %397 = vmatpush1.msra.mxu0 %v396
    %398 = vmatprep.subr.mxu0 0.0
    %v399 = vand.u32 %v107, 4294901760
    %v400 = vsub.f32 %v107, %v399
    %v401 = vand.u32 %v400, 4294901760
    %v402 = vsub.f32 %v400, %v401
    %v403 = vand.u32 %v402, 4294901760
    %404 = vmatpush1.msra.mxu0 %v403
    %405 = vmatprep.subr.mxu0 0.0
    %v406 = vand.u32 %v108, 4294901760
    %v407 = vsub.f32 %v108, %v406
    %v408 = vand.u32 %v407, 4294901760
    %v409 = vsub.f32 %v407, %v408
    %v410 = vand.u32 %v409, 4294901760
    %411 = vmatpush1.msra.mxu0 %v410
    %412 = vmatprep.subr.mxu0 0.0
    %v413 = vand.u32 %v109, 4294901760
    %v414 = vsub.f32 %v109, %v413
    %v415 = vand.u32 %v414, 4294901760
    %v416 = vsub.f32 %v414, %v415
    %v417 = vand.u32 %v416, 4294901760
    %418 = vmatpush1.msra.mxu0 %v417
    %419 = vmatprep.subr.mxu0 0.0
    %v420 = vand.u32 %v110, 4294901760
    %v421 = vsub.f32 %v110, %v420
    %v422 = vand.u32 %v421, 4294901760
    %v423 = vsub.f32 %v421, %v422
    %v424 = vand.u32 %v423, 4294901760
    %425 = vmatpush1.msra.mxu0 %v424
    %426 = vmatprep.subr.mxu0 0.0
    %v427 = vand.u32 %v111, 4294901760
    %v428 = vsub.f32 %v111, %v427
    %v429 = vand.u32 %v428, 4294901760
    %v430 = vsub.f32 %v428, %v429
    %v431 = vand.u32 %v430, 4294901760
    %432 = vmatpush1.msra.mxu0 %v431
    %433 = vmatprep.subr.mxu0 0.0
    %v434 = vand.u32 %v112, 4294901760
    %v435 = vsub.f32 %v112, %v434
    %v436 = vand.u32 %v435, 4294901760
    %v437 = vsub.f32 %v435, %v436
    %v438 = vand.u32 %v437, 4294901760
    %439 = vmatpush1.msra.mxu0 %v438
    %440 = vmatprep.subr.mxu0 0.0
    %v441 = vand.u32 %v113, 4294901760
    %v442 = vsub.f32 %v113, %v441
    %v443 = vand.u32 %v442, 4294901760
    %v444 = vsub.f32 %v442, %v443
    %v445 = vand.u32 %v444, 4294901760
    %446 = vmatpush1.msra.mxu0 %v445
    %447 = vmatprep.subr.mxu0 0.0
    %v448 = vand.u32 %v114, 4294901760
    %v449 = vsub.f32 %v114, %v448
    %v450 = vand.u32 %v449, 4294901760
    %v451 = vsub.f32 %v449, %v450
    %v452 = vand.u32 %v451, 4294901760
    %453 = vmatpush1.msra.mxu0 %v452
    %454 = vmatprep.subr.mxu0 0.0
    %v455 = vand.u32 %v115, 4294901760
    %v456 = vsub.f32 %v115, %v455
    %v457 = vand.u32 %v456, 4294901760
    %v458 = vsub.f32 %v456, %v457
    %v459 = vand.u32 %v458, 4294901760
    %460 = vmatpush1.msra.mxu0 %v459
    %461 = vmatprep.subr.mxu0 0.0
    %v462 = vand.u32 %v116, 4294901760
    %v463 = vsub.f32 %v116, %v462
    %v464 = vand.u32 %v463, 4294901760
    %v465 = vsub.f32 %v463, %v464
    %v466 = vand.u32 %v465, 4294901760
    %467 = vmatpush1.msra.mxu0 %v466
    %468 = vmatprep.subr.mxu0 0.0
    %v469 = vand.u32 %v117, 4294901760
    %v470 = vsub.f32 %v117, %v469
    %v471 = vand.u32 %v470, 4294901760
    %v472 = vsub.f32 %v470, %v471
    %v473 = vand.u32 %v472, 4294901760
    %474 = vmatpush1.msra.mxu0 %v473
    %475 = vmatprep.subr.mxu0 0.0
    %v476 = vand.u32 %v118, 4294901760
    %v477 = vsub.f32 %v118, %v476
    %v478 = vand.u32 %v477, 4294901760
    %v479 = vsub.f32 %v477, %v478
    %v480 = vand.u32 %v479, 4294901760
    %481 = vmatpush1.msra.mxu0 %v480
    %482 = vmatprep.subr.mxu0 0.0
    %v483 = vand.u32 %v119, 4294901760
    %v484 = vsub.f32 %v119, %v483
    %v485 = vand.u32 %v484, 4294901760
    %v486 = vsub.f32 %v484, %v485
    %v487 = vand.u32 %v486, 4294901760
    %488 = vmatpush1.msra.mxu0 %v487
    %489 = vmatprep.subr.mxu0 0.0
    %v490 = vand.u32 %v120, 4294901760
    %v491 = vsub.f32 %v120, %v490
    %v492 = vand.u32 %v491, 4294901760
    %v493 = vsub.f32 %v491, %v492
    %v494 = vand.u32 %v493, 4294901760
    %495 = vmatpush1.msra.mxu0 %v494
    %496 = vmatprep.subr.mxu0 0.0
    %v497 = vand.u32 %v121, 4294901760
    %v498 = vsub.f32 %v121, %v497
    %v499 = vand.u32 %v498, 4294901760
    %v500 = vsub.f32 %v498, %v499
    %v501 = vand.u32 %v500, 4294901760
    %502 = vmatpush1.msra.mxu0 %v501
    %503 = vmatprep.subr.mxu0 0.0
    %v504 = vand.u32 %v122, 4294901760
    %v505 = vsub.f32 %v122, %v504
    %v506 = vand.u32 %v505, 4294901760
    %v507 = vsub.f32 %v505, %v506
    %v508 = vand.u32 %v507, 4294901760
    %509 = vmatpush1.msra.mxu0 %v508
    %510 = vmatprep.subr.mxu0 0.0
    %v511 = vand.u32 %v123, 4294901760
    %v512 = vsub.f32 %v123, %v511
    %v513 = vand.u32 %v512, 4294901760
    %v514 = vsub.f32 %v512, %v513
    %v515 = vand.u32 %v514, 4294901760
    %516 = vmatpush1.msra.mxu0 %v515
    %517 = vmatprep.subr.mxu0 0.0
    %v518 = vand.u32 %v124, 4294901760
    %v519 = vsub.f32 %v124, %v518
    %v520 = vand.u32 %v519, 4294901760
    %v521 = vsub.f32 %v519, %v520
    %v522 = vand.u32 %v521, 4294901760
    %523 = vmatpush1.msra.mxu0 %v522
    %524 = vmatprep.subr.mxu0 0.0
    %v525 = vand.u32 %v125, 4294901760
    %v526 = vsub.f32 %v125, %v525
    %v527 = vand.u32 %v526, 4294901760
    %v528 = vsub.f32 %v526, %v527
    %v529 = vand.u32 %v528, 4294901760
    %530 = vmatpush1.msra.mxu0 %v529
    %531 = vmatprep.subr.mxu0 0.0
    %v532 = vand.u32 %v126, 4294901760
    %v533 = vsub.f32 %v126, %v532
    %v534 = vand.u32 %v533, 4294901760
    %v535 = vsub.f32 %v533, %v534
    %v536 = vand.u32 %v535, 4294901760
    %537 = vmatpush1.msra.mxu0 %v536
    %538 = vmatprep.subr.mxu0 0.0
    %v539 = vand.u32 %v127, 4294901760
    %v540 = vsub.f32 %v127, %v539
    %v541 = vand.u32 %v540, 4294901760
    %v542 = vsub.f32 %v540, %v541
    %v543 = vand.u32 %v542, 4294901760
    %544 = vmatpush1.msra.mxu0 %v543
    %545 = vmatprep.subr.mxu0 0.0
    %v546 = vand.u32 %v128, 4294901760
    %v547 = vsub.f32 %v128, %v546
    %v548 = vand.u32 %v547, 4294901760
    %v549 = vsub.f32 %v547, %v548
    %v550 = vand.u32 %v549, 4294901760
    %551 = vmatpush1.msra.mxu0 %v550
    %v552 = vand.u32 %v83, 4294901760
    %553 = vmatprep.mubr.f32.mxu0 %v552
    %v554 = vand.u32 %v82, 4294901760
    %555 = vmatmul.mubr.f32.gmra.mrb[0].mxu0 %v554
    %v556 = vpop.f32.mrb[0].mxu0
    %v557 = vadd.f32 %v295, %v556
    %v558 = vpop.f32.mrb[0].mxu0
    %v559 = vand.u32 %v88, 4294901760
    %560 = vmatprep.mubr.f32.mxu0 %v559
    %v561 = vand.u32 %v87, 4294901760
    %562 = vmatmul.mubr.f32.gmra.mrb[0].mxu0 %v561
    %v563 = vpop.f32.mrb[0].mxu0
    %v564 = vadd.f32 %v310, %v563
    %v565 = vpop.f32.mrb[0].mxu0
    %v566 = vand.u32 %v93, 4294901760
    %567 = vmatprep.mubr.f32.mxu0 %v566
    %v568 = vand.u32 %v92, 4294901760
    %569 = vmatmul.mubr.f32.gmra.mrb[0].mxu0 %v568
    %v570 = vpop.f32.mrb[0].mxu0
    %v571 = vadd.f32 %v325, %v570
    %v572 = vpop.f32.mrb[0].mxu0
    %573 = vdwg.mxu0
    %574 = vmatprep.subr.mxu0 0.0
    %v575 = vand.u32 %v97, 4294901760
    %v576 = vsub.f32 %v97, %v575
    %577 = vmatpush1.msra.mxu0 %v576
    %578 = vmatprep.subr.mxu0 0.0
    %v579 = vand.u32 %v98, 4294901760
    %v580 = vsub.f32 %v98, %v579
    %581 = vmatpush1.msra.mxu0 %v580
    %582 = vmatprep.subr.mxu0 0.0
    %v583 = vand.u32 %v99, 4294901760
    %v584 = vsub.f32 %v99, %v583
    %585 = vmatpush1.msra.mxu0 %v584
    %586 = vmatprep.subr.mxu0 0.0
    %v587 = vand.u32 %v100, 4294901760
    %v588 = vsub.f32 %v100, %v587
    %589 = vmatpush1.msra.mxu0 %v588
    %590 = vmatprep.subr.mxu0 0.0
    %v591 = vand.u32 %v101, 4294901760
    %v592 = vsub.f32 %v101, %v591
    %593 = vmatpush1.msra.mxu0 %v592
    %594 = vmatprep.subr.mxu0 0.0
    %v595 = vand.u32 %v102, 4294901760
    %v596 = vsub.f32 %v102, %v595
    %597 = vmatpush1.msra.mxu0 %v596
    %598 = vmatprep.subr.mxu0 0.0
    %v599 = vand.u32 %v103, 4294901760
    %v600 = vsub.f32 %v103, %v599
    %601 = vmatpush1.msra.mxu0 %v600
    %602 = vmatprep.subr.mxu0 0.0
    %v603 = vand.u32 %v104, 4294901760
    %v604 = vsub.f32 %v104, %v603
    %605 = vmatpush1.msra.mxu0 %v604
    %606 = vmatprep.subr.mxu0 0.0
    %v607 = vand.u32 %v105, 4294901760
    %v608 = vsub.f32 %v105, %v607
    %609 = vmatpush1.msra.mxu0 %v608
    %610 = vmatprep.subr.mxu0 0.0
    %v611 = vand.u32 %v106, 4294901760
    %v612 = vsub.f32 %v106, %v611
    %613 = vmatpush1.msra.mxu0 %v612
    %614 = vmatprep.subr.mxu0 0.0
    %v615 = vand.u32 %v107, 4294901760
    %v616 = vsub.f32 %v107, %v615
    %617 = vmatpush1.msra.mxu0 %v616
    %618 = vmatprep.subr.mxu0 0.0
    %v619 = vand.u32 %v108, 4294901760
    %v620 = vsub.f32 %v108, %v619
    %621 = vmatpush1.msra.mxu0 %v620
    %622 = vmatprep.subr.mxu0 0.0
    %v623 = vand.u32 %v109, 4294901760
    %v624 = vsub.f32 %v109, %v623
    %625 = vmatpush1.msra.mxu0 %v624
    %626 = vmatprep.subr.mxu0 0.0
    %v627 = vand.u32 %v110, 4294901760
    %v628 = vsub.f32 %v110, %v627
    %629 = vmatpush1.msra.mxu0 %v628
    %630 = vmatprep.subr.mxu0 0.0
    %v631 = vand.u32 %v111, 4294901760
    %v632 = vsub.f32 %v111, %v631
    %633 = vmatpush1.msra.mxu0 %v632
    %634 = vmatprep.subr.mxu0 0.0
    %v635 = vand.u32 %v112, 4294901760
    %v636 = vsub.f32 %v112, %v635
    %637 = vmatpush1.msra.mxu0 %v636
    %638 = vmatprep.subr.mxu0 0.0
    %v639 = vand.u32 %v113, 4294901760
    %v640 = vsub.f32 %v113, %v639
    %641 = vmatpush1.msra.mxu0 %v640
    %642 = vmatprep.subr.mxu0 0.0
    %v643 = vand.u32 %v114, 4294901760
    %v644 = vsub.f32 %v114, %v643
    %645 = vmatpush1.msra.mxu0 %v644
    %646 = vmatprep.subr.mxu0 0.0
    %v647 = vand.u32 %v115, 4294901760
    %v648 = vsub.f32 %v115, %v647
    %649 = vmatpush1.msra.mxu0 %v648
    %650 = vmatprep.subr.mxu0 0.0
    %v651 = vand.u32 %v116, 4294901760
    %v652 = vsub.f32 %v116, %v651
    %653 = vmatpush1.msra.mxu0 %v652
    %654 = vmatprep.subr.mxu0 0.0
    %v655 = vand.u32 %v117, 4294901760
    %v656 = vsub.f32 %v117, %v655
    %657 = vmatpush1.msra.mxu0 %v656
    %658 = vmatprep.subr.mxu0 0.0
    %v659 = vand.u32 %v118, 4294901760
    %v660 = vsub.f32 %v118, %v659
    %661 = vmatpush1.msra.mxu0 %v660
    %662 = vmatprep.subr.mxu0 0.0
    %v663 = vand.u32 %v119, 4294901760
    %v664 = vsub.f32 %v119, %v663
    %665 = vmatpush1.msra.mxu0 %v664
    %666 = vmatprep.subr.mxu0 0.0
    %v667 = vand.u32 %v120, 4294901760
    %v668 = vsub.f32 %v120, %v667
    %669 = vmatpush1.msra.mxu0 %v668
    %670 = vmatprep.subr.mxu0 0.0
    %v671 = vand.u32 %v121, 4294901760
    %v672 = vsub.f32 %v121, %v671
    %673 = vmatpush1.msra.mxu0 %v672
    %674 = vmatprep.subr.mxu0 0.0
    %v675 = vand.u32 %v122, 4294901760
    %v676 = vsub.f32 %v122, %v675
    %677 = vmatpush1.msra.mxu0 %v676
    %678 = vmatprep.subr.mxu0 0.0
    %v679 = vand.u32 %v123, 4294901760
    %v680 = vsub.f32 %v123, %v679
    %681 = vmatpush1.msra.mxu0 %v680
    %682 = vmatprep.subr.mxu0 0.0
    %v683 = vand.u32 %v124, 4294901760
    %v684 = vsub.f32 %v124, %v683
    %685 = vmatpush1.msra.mxu0 %v684
    %686 = vmatprep.subr.mxu0 0.0
    %v687 = vand.u32 %v125, 4294901760
    %v688 = vsub.f32 %v125, %v687
    %689 = vmatpush1.msra.mxu0 %v688
    %690 = vmatprep.subr.mxu0 0.0
    %v691 = vand.u32 %v126, 4294901760
    %v692 = vsub.f32 %v126, %v691
    %693 = vmatpush1.msra.mxu0 %v692
    %694 = vmatprep.subr.mxu0 0.0
    %v695 = vand.u32 %v127, 4294901760
    %v696 = vsub.f32 %v127, %v695
    %697 = vmatpush1.msra.mxu0 %v696
    %698 = vmatprep.subr.mxu0 0.0
    %v699 = vand.u32 %v128, 4294901760
    %v700 = vsub.f32 %v128, %v699
    %701 = vmatpush1.msra.mxu0 %v700
    %v702 = vand.u32 %v83, 4294901760
    %v703 = vsub.f32 %v83, %v702
    %704 = vmatprep.mubr.f32.mxu0 %v703
    %v705 = vand.u32 %v82, 4294901760
    %v706 = vsub.f32 %v82, %v705
    %707 = vmatmul.mubr.f32.gmra.mrb[0].mxu0 %v706
    %v708 = vpop.f32.mrb[0].mxu0
    %v709 = vadd.f32 %v557, %v708
    %v710 = vpop.f32.mrb[0].mxu0
    %v711 = vand.u32 %v88, 4294901760
    %v712 = vsub.f32 %v88, %v711
    %713 = vmatprep.mubr.f32.mxu0 %v712
    %v714 = vand.u32 %v87, 4294901760
    %v715 = vsub.f32 %v87, %v714
    %716 = vmatmul.mubr.f32.gmra.mrb[0].mxu0 %v715
    %v717 = vpop.f32.mrb[0].mxu0
    %v718 = vadd.f32 %v564, %v717
    %v719 = vpop.f32.mrb[0].mxu0
    %v720 = vand.u32 %v93, 4294901760
    %v721 = vsub.f32 %v93, %v720
    %722 = vmatprep.mubr.f32.mxu0 %v721
    %v723 = vand.u32 %v92, 4294901760
    %v724 = vsub.f32 %v92, %v723
    %725 = vmatmul.mubr.f32.gmra.mrb[0].mxu0 %v724
    %v726 = vpop.f32.mrb[0].mxu0
    %v727 = vadd.f32 %v571, %v726
    %v728 = vpop.f32.mrb[0].mxu0
    %729 = vdwg.mxu0
    %730 = vmatprep.subr.mxu0 0.0
    %v731 = vand.u32 %v97, 4294901760
    %732 = vmatpush1.msra.mxu0 %v731
    %733 = vmatprep.subr.mxu0 0.0
    %v734 = vand.u32 %v98, 4294901760
    %735 = vmatpush1.msra.mxu0 %v734
    %736 = vmatprep.subr.mxu0 0.0
    %v737 = vand.u32 %v99, 4294901760
    %738 = vmatpush1.msra.mxu0 %v737
    %739 = vmatprep.subr.mxu0 0.0
    %v740 = vand.u32 %v100, 4294901760
    %741 = vmatpush1.msra.mxu0 %v740
    %742 = vmatprep.subr.mxu0 0.0
    %v743 = vand.u32 %v101, 4294901760
    %744 = vmatpush1.msra.mxu0 %v743
    %745 = vmatprep.subr.mxu0 0.0
    %v746 = vand.u32 %v102, 4294901760
    %747 = vmatpush1.msra.mxu0 %v746
    %748 = vmatprep.subr.mxu0 0.0
    %v749 = vand.u32 %v103, 4294901760
    %750 = vmatpush1.msra.mxu0 %v749
    %751 = vmatprep.subr.mxu0 0.0
    %v752 = vand.u32 %v104, 4294901760
    %753 = vmatpush1.msra.mxu0 %v752
    %754 = vmatprep.subr.mxu0 0.0
    %v755 = vand.u32 %v105, 4294901760
    %756 = vmatpush1.msra.mxu0 %v755
    %757 = vmatprep.subr.mxu0 0.0
    %v758 = vand.u32 %v106, 4294901760
    %759 = vmatpush1.msra.mxu0 %v758
    %760 = vmatprep.subr.mxu0 0.0
    %v761 = vand.u32 %v107, 4294901760
    %762 = vmatpush1.msra.mxu0 %v761
    %763 = vmatprep.subr.mxu0 0.0
    %v764 = vand.u32 %v108, 4294901760
    %765 = vmatpush1.msra.mxu0 %v764
    %766 = vmatprep.subr.mxu0 0.0
    %v767 = vand.u32 %v109, 4294901760
    %768 = vmatpush1.msra.mxu0 %v767
    %769 = vmatprep.subr.mxu0 0.0
    %v770 = vand.u32 %v110, 4294901760
    %771 = vmatpush1.msra.mxu0 %v770
    %772 = vmatprep.subr.mxu0 0.0
    %v773 = vand.u32 %v111, 4294901760
    %774 = vmatpush1.msra.mxu0 %v773
    %775 = vmatprep.subr.mxu0 0.0
    %v776 = vand.u32 %v112, 4294901760
    %777 = vmatpush1.msra.mxu0 %v776
    %778 = vmatprep.subr.mxu0 0.0
    %v779 = vand.u32 %v113, 4294901760
    %780 = vmatpush1.msra.mxu0 %v779
    %781 = vmatprep.subr.mxu0 0.0
    %v782 = vand.u32 %v114, 4294901760
    %783 = vmatpush1.msra.mxu0 %v782
    %784 = vmatprep.subr.mxu0 0.0
    %v785 = vand.u32 %v115, 4294901760
    %786 = vmatpush1.msra.mxu0 %v785
    %787 = vmatprep.subr.mxu0 0.0
    %v788 = vand.u32 %v116, 4294901760
    %789 = vmatpush1.msra.mxu0 %v788
    %790 = vmatprep.subr.mxu0 0.0
    %v791 = vand.u32 %v117, 4294901760
    %792 = vmatpush1.msra.mxu0 %v791
    %793 = vmatprep.subr.mxu0 0.0
    %v794 = vand.u32 %v118, 4294901760
    %795 = vmatpush1.msra.mxu0 %v794
    %796 = vmatprep.subr.mxu0 0.0
    %v797 = vand.u32 %v119, 4294901760
    %798 = vmatpush1.msra.mxu0 %v797
    %799 = vmatprep.subr.mxu0 0.0
    %v800 = vand.u32 %v120, 4294901760
    %801 = vmatpush1.msra.mxu0 %v800
    %802 = vmatprep.subr.mxu0 0.0
    %v803 = vand.u32 %v121, 4294901760
    %804 = vmatpush1.msra.mxu0 %v803
    %805 = vmatprep.subr.mxu0 0.0
    %v806 = vand.u32 %v122, 4294901760
    %807 = vmatpush1.msra.mxu0 %v806
    %808 = vmatprep.subr.mxu0 0.0
    %v809 = vand.u32 %v123, 4294901760
    %810 = vmatpush1.msra.mxu0 %v809
    %811 = vmatprep.subr.mxu0 0.0
    %v812 = vand.u32 %v124, 4294901760
    %813 = vmatpush1.msra.mxu0 %v812
    %814 = vmatprep.subr.mxu0 0.0
    %v815 = vand.u32 %v125, 4294901760
    %816 = vmatpush1.msra.mxu0 %v815
    %817 = vmatprep.subr.mxu0 0.0
    %v818 = vand.u32 %v126, 4294901760
    %819 = vmatpush1.msra.mxu0 %v818
    %820 = vmatprep.subr.mxu0 0.0
    %v821 = vand.u32 %v127, 4294901760
    %822 = vmatpush1.msra.mxu0 %v821
    %823 = vmatprep.subr.mxu0 0.0
    %v824 = vand.u32 %v128, 4294901760
    %825 = vmatpush1.msra.mxu0 %v824
    %v826 = vand.u32 %v83, 4294901760
    %v827 = vsub.f32 %v83, %v826
    %v828 = vand.u32 %v827, 4294901760
    %829 = vmatprep.mubr.f32.mxu0 %v828
    %v830 = vand.u32 %v82, 4294901760
    %v831 = vsub.f32 %v82, %v830
    %v832 = vand.u32 %v831, 4294901760
    %833 = vmatmul.mubr.f32.gmra.mrb[0].mxu0 %v832
    %v834 = vpop.f32.mrb[0].mxu0
    %v835 = vadd.f32 %v709, %v834
    %v836 = vpop.f32.mrb[0].mxu0
    %v837 = vand.u32 %v88, 4294901760
    %v838 = vsub.f32 %v88, %v837
    %v839 = vand.u32 %v838, 4294901760
    %840 = vmatprep.mubr.f32.mxu0 %v839
    %v841 = vand.u32 %v87, 4294901760
    %v842 = vsub.f32 %v87, %v841
    %v843 = vand.u32 %v842, 4294901760
    %844 = vmatmul.mubr.f32.gmra.mrb[0].mxu0 %v843
    %v845 = vpop.f32.mrb[0].mxu0
    %v846 = vadd.f32 %v718, %v845
    %v847 = vpop.f32.mrb[0].mxu0
    %v848 = vand.u32 %v93, 4294901760
    %v849 = vsub.f32 %v93, %v848
    %v850 = vand.u32 %v849, 4294901760
    %851 = vmatprep.mubr.f32.mxu0 %v850
    %v852 = vand.u32 %v92, 4294901760
    %v853 = vsub.f32 %v92, %v852
    %v854 = vand.u32 %v853, 4294901760
    %855 = vmatmul.mubr.f32.gmra.mrb[0].mxu0 %v854
    %v856 = vpop.f32.mrb[0].mxu0
    %v857 = vadd.f32 %v727, %v856
    %v858 = vpop.f32.mrb[0].mxu0
    %859 = vdwg.mxu0
    %860 = vmatprep.subr.mxu0 0.0
    %v861 = vand.u32 %v97, 4294901760
    %v862 = vsub.f32 %v97, %v861
    %v863 = vand.u32 %v862, 4294901760
    %864 = vmatpush1.msra.mxu0 %v863
    %865 = vmatprep.subr.mxu0 0.0
    %v866 = vand.u32 %v98, 4294901760
    %v867 = vsub.f32 %v98, %v866
    %v868 = vand.u32 %v867, 4294901760
    %869 = vmatpush1.msra.mxu0 %v868
    %870 = vmatprep.subr.mxu0 0.0
    %v871 = vand.u32 %v99, 4294901760
    %v872 = vsub.f32 %v99, %v871
    %v873 = vand.u32 %v872, 4294901760
    %874 = vmatpush1.msra.mxu0 %v873
    %875 = vmatprep.subr.mxu0 0.0
    %v876 = vand.u32 %v100, 4294901760
    %v877 = vsub.f32 %v100, %v876
    %v878 = vand.u32 %v877, 4294901760
    %879 = vmatpush1.msra.mxu0 %v878
    %880 = vmatprep.subr.mxu0 0.0
    %v881 = vand.u32 %v101, 4294901760
    %v882 = vsub.f32 %v101, %v881
    %v883 = vand.u32 %v882, 4294901760
    %884 = vmatpush1.msra.mxu0 %v883
    %885 = vmatprep.subr.mxu0 0.0
    %v886 = vand.u32 %v102, 4294901760
    %v887 = vsub.f32 %v102, %v886
    %v888 = vand.u32 %v887, 4294901760
    %889 = vmatpush1.msra.mxu0 %v888
    %890 = vmatprep.subr.mxu0 0.0
    %v891 = vand.u32 %v103, 4294901760
    %v892 = vsub.f32 %v103, %v891
    %v893 = vand.u32 %v892, 4294901760
    %894 = vmatpush1.msra.mxu0 %v893
    %895 = vmatprep.subr.mxu0 0.0
    %v896 = vand.u32 %v104, 4294901760
    %v897 = vsub.f32 %v104, %v896
    %v898 = vand.u32 %v897, 4294901760
    %899 = vmatpush1.msra.mxu0 %v898
    %900 = vmatprep.subr.mxu0 0.0
    %v901 = vand.u32 %v105, 4294901760
    %v902 = vsub.f32 %v105, %v901
    %v903 = vand.u32 %v902, 4294901760
    %904 = vmatpush1.msra.mxu0 %v903
    %905 = vmatprep.subr.mxu0 0.0
    %v906 = vand.u32 %v106, 4294901760
    %v907 = vsub.f32 %v106, %v906
    %v908 = vand.u32 %v907, 4294901760
    %909 = vmatpush1.msra.mxu0 %v908
    %910 = vmatprep.subr.mxu0 0.0
    %v911 = vand.u32 %v107, 4294901760
    %v912 = vsub.f32 %v107, %v911
    %v913 = vand.u32 %v912, 4294901760
    %914 = vmatpush1.msra.mxu0 %v913
    %915 = vmatprep.subr.mxu0 0.0
    %v916 = vand.u32 %v108, 4294901760
    %v917 = vsub.f32 %v108, %v916
    %v918 = vand.u32 %v917, 4294901760
    %919 = vmatpush1.msra.mxu0 %v918
    %920 = vmatprep.subr.mxu0 0.0
    %v921 = vand.u32 %v109, 4294901760
    %v922 = vsub.f32 %v109, %v921
    %v923 = vand.u32 %v922, 4294901760
    %924 = vmatpush1.msra.mxu0 %v923
    %925 = vmatprep.subr.mxu0 0.0
    %v926 = vand.u32 %v110, 4294901760
    %v927 = vsub.f32 %v110, %v926
    %v928 = vand.u32 %v927, 4294901760
    %929 = vmatpush1.msra.mxu0 %v928
    %930 = vmatprep.subr.mxu0 0.0
    %v931 = vand.u32 %v111, 4294901760
    %v932 = vsub.f32 %v111, %v931
    %v933 = vand.u32 %v932, 4294901760
    %934 = vmatpush1.msra.mxu0 %v933
    %935 = vmatprep.subr.mxu0 0.0
    %v936 = vand.u32 %v112, 4294901760
    %v937 = vsub.f32 %v112, %v936
    %v938 = vand.u32 %v937, 4294901760
    %939 = vmatpush1.msra.mxu0 %v938
    %940 = vmatprep.subr.mxu0 0.0
    %v941 = vand.u32 %v113, 4294901760
    %v942 = vsub.f32 %v113, %v941
    %v943 = vand.u32 %v942, 4294901760
    %944 = vmatpush1.msra.mxu0 %v943
    %945 = vmatprep.subr.mxu0 0.0
    %v946 = vand.u32 %v114, 4294901760
    %v947 = vsub.f32 %v114, %v946
    %v948 = vand.u32 %v947, 4294901760
    %949 = vmatpush1.msra.mxu0 %v948
    %950 = vmatprep.subr.mxu0 0.0
    %v951 = vand.u32 %v115, 4294901760
    %v952 = vsub.f32 %v115, %v951
    %v953 = vand.u32 %v952, 4294901760
    %954 = vmatpush1.msra.mxu0 %v953
    %955 = vmatprep.subr.mxu0 0.0
    %v956 = vand.u32 %v116, 4294901760
    %v957 = vsub.f32 %v116, %v956
    %v958 = vand.u32 %v957, 4294901760
    %959 = vmatpush1.msra.mxu0 %v958
    %960 = vmatprep.subr.mxu0 0.0
    %v961 = vand.u32 %v117, 4294901760
    %v962 = vsub.f32 %v117, %v961
    %v963 = vand.u32 %v962, 4294901760
    %964 = vmatpush1.msra.mxu0 %v963
    %965 = vmatprep.subr.mxu0 0.0
    %v966 = vand.u32 %v118, 4294901760
    %v967 = vsub.f32 %v118, %v966
    %v968 = vand.u32 %v967, 4294901760
    %969 = vmatpush1.msra.mxu0 %v968
    %970 = vmatprep.subr.mxu0 0.0
    %v971 = vand.u32 %v119, 4294901760
    %v972 = vsub.f32 %v119, %v971
    %v973 = vand.u32 %v972, 4294901760
    %974 = vmatpush1.msra.mxu0 %v973
    %975 = vmatprep.subr.mxu0 0.0
    %v976 = vand.u32 %v120, 4294901760
    %v977 = vsub.f32 %v120, %v976
    %v978 = vand.u32 %v977, 4294901760
    %979 = vmatpush1.msra.mxu0 %v978
    %980 = vmatprep.subr.mxu0 0.0
    %v981 = vand.u32 %v121, 4294901760
    %v982 = vsub.f32 %v121, %v981
    %v983 = vand.u32 %v982, 4294901760
    %984 = vmatpush1.msra.mxu0 %v983
    %985 = vmatprep.subr.mxu0 0.0
    %v986 = vand.u32 %v122, 4294901760
    %v987 = vsub.f32 %v122, %v986
    %v988 = vand.u32 %v987, 4294901760
    %989 = vmatpush1.msra.mxu0 %v988
    %990 = vmatprep.subr.mxu0 0.0
    %v991 = vand.u32 %v123, 4294901760
    %v992 = vsub.f32 %v123, %v991
    %v993 = vand.u32 %v992, 4294901760
    %994 = vmatpush1.msra.mxu0 %v993
    %995 = vmatprep.subr.mxu0 0.0
    %v996 = vand.u32 %v124, 4294901760
    %v997 = vsub.f32 %v124, %v996
    %v998 = vand.u32 %v997, 4294901760
    %999 = vmatpush1.msra.mxu0 %v998
    %1000 = vmatprep.subr.mxu0 0.0
    %v1001 = vand.u32 %v125, 4294901760
    %v1002 = vsub.f32 %v125, %v1001
    %v1003 = vand.u32 %v1002, 4294901760
    %1004 = vmatpush1.msra.mxu0 %v1003
    %1005 = vmatprep.subr.mxu0 0.0
    %v1006 = vand.u32 %v126, 4294901760
    %v1007 = vsub.f32 %v126, %v1006
    %v1008 = vand.u32 %v1007, 4294901760
    %1009 = vmatpush1.msra.mxu0 %v1008
    %1010 = vmatprep.subr.mxu0 0.0
    %v1011 = vand.u32 %v127, 4294901760
    %v1012 = vsub.f32 %v127, %v1011
    %v1013 = vand.u32 %v1012, 4294901760
    %1014 = vmatpush1.msra.mxu0 %v1013
    %1015 = vmatprep.subr.mxu0 0.0
    %v1016 = vand.u32 %v128, 4294901760
    %v1017 = vsub.f32 %v128, %v1016
    %v1018 = vand.u32 %v1017, 4294901760
    %1019 = vmatpush1.msra.mxu0 %v1018
    %v1020 = vand.u32 %v83, 4294901760
    %1021 = vmatprep.mubr.f32.mxu0 %v1020
    %v1022 = vand.u32 %v82, 4294901760
    %1023 = vmatmul.mubr.f32.gmra.mrb[0].mxu0 %v1022
    %v1024 = vpop.f32.mrb[0].mxu0
    %v1025 = vadd.f32 %v835, %v1024
    %v1026 = vpop.f32.mrb[0].mxu0
    %v1027 = vand.u32 %v88, 4294901760
    %1028 = vmatprep.mubr.f32.mxu0 %v1027
    %v1029 = vand.u32 %v87, 4294901760
    %1030 = vmatmul.mubr.f32.gmra.mrb[0].mxu0 %v1029
    %v1031 = vpop.f32.mrb[0].mxu0
    %v1032 = vadd.f32 %v846, %v1031
    %v1033 = vpop.f32.mrb[0].mxu0
    %v1034 = vand.u32 %v93, 4294901760
    %1035 = vmatprep.mubr.f32.mxu0 %v1034
    %v1036 = vand.u32 %v92, 4294901760
    %1037 = vmatmul.mubr.f32.gmra.mrb[0].mxu0 %v1036
    %v1038 = vpop.f32.mrb[0].mxu0
    %v1039 = vadd.f32 %v857, %v1038
    %v1040 = vpop.f32.mrb[0].mxu0
    %1041 = vdwg.mxu0
    %1042 = vmatprep.subr.mxu0 0.0
    %v1043 = vand.u32 %v97, 4294901760
    %1044 = vmatpush1.msra.mxu0 %v1043
    %1045 = vmatprep.subr.mxu0 0.0
    %v1046 = vand.u32 %v98, 4294901760
    %1047 = vmatpush1.msra.mxu0 %v1046
    %1048 = vmatprep.subr.mxu0 0.0
    %v1049 = vand.u32 %v99, 4294901760
    %1050 = vmatpush1.msra.mxu0 %v1049
    %1051 = vmatprep.subr.mxu0 0.0
    %v1052 = vand.u32 %v100, 4294901760
    %1053 = vmatpush1.msra.mxu0 %v1052
    %1054 = vmatprep.subr.mxu0 0.0
    %v1055 = vand.u32 %v101, 4294901760
    %1056 = vmatpush1.msra.mxu0 %v1055
    %1057 = vmatprep.subr.mxu0 0.0
    %v1058 = vand.u32 %v102, 4294901760
    %1059 = vmatpush1.msra.mxu0 %v1058
    %1060 = vmatprep.subr.mxu0 0.0
    %v1061 = vand.u32 %v103, 4294901760
    %1062 = vmatpush1.msra.mxu0 %v1061
    %1063 = vmatprep.subr.mxu0 0.0
    %v1064 = vand.u32 %v104, 4294901760
    %1065 = vmatpush1.msra.mxu0 %v1064
    %1066 = vmatprep.subr.mxu0 0.0
    %v1067 = vand.u32 %v105, 4294901760
    %1068 = vmatpush1.msra.mxu0 %v1067
    %1069 = vmatprep.subr.mxu0 0.0
    %v1070 = vand.u32 %v106, 4294901760
    %1071 = vmatpush1.msra.mxu0 %v1070
    %1072 = vmatprep.subr.mxu0 0.0
    %v1073 = vand.u32 %v107, 4294901760
    %1074 = vmatpush1.msra.mxu0 %v1073
    %1075 = vmatprep.subr.mxu0 0.0
    %v1076 = vand.u32 %v108, 4294901760
    %1077 = vmatpush1.msra.mxu0 %v1076
    %1078 = vmatprep.subr.mxu0 0.0
    %v1079 = vand.u32 %v109, 4294901760
    %1080 = vmatpush1.msra.mxu0 %v1079
    %1081 = vmatprep.subr.mxu0 0.0
    %v1082 = vand.u32 %v110, 4294901760
    %1083 = vmatpush1.msra.mxu0 %v1082
    %1084 = vmatprep.subr.mxu0 0.0
    %v1085 = vand.u32 %v111, 4294901760
    %1086 = vmatpush1.msra.mxu0 %v1085
    %1087 = vmatprep.subr.mxu0 0.0
    %v1088 = vand.u32 %v112, 4294901760
    %1089 = vmatpush1.msra.mxu0 %v1088
    %1090 = vmatprep.subr.mxu0 0.0
    %v1091 = vand.u32 %v113, 4294901760
    %1092 = vmatpush1.msra.mxu0 %v1091
    %1093 = vmatprep.subr.mxu0 0.0
    %v1094 = vand.u32 %v114, 4294901760
    %1095 = vmatpush1.msra.mxu0 %v1094
    %1096 = vmatprep.subr.mxu0 0.0
    %v1097 = vand.u32 %v115, 4294901760
    %1098 = vmatpush1.msra.mxu0 %v1097
    %1099 = vmatprep.subr.mxu0 0.0
    %v1100 = vand.u32 %v116, 4294901760
    %1101 = vmatpush1.msra.mxu0 %v1100
    %1102 = vmatprep.subr.mxu0 0.0
    %v1103 = vand.u32 %v117, 4294901760
    %1104 = vmatpush1.msra.mxu0 %v1103
    %1105 = vmatprep.subr.mxu0 0.0
    %v1106 = vand.u32 %v118, 4294901760
    %1107 = vmatpush1.msra.mxu0 %v1106
    %1108 = vmatprep.subr.mxu0 0.0
    %v1109 = vand.u32 %v119, 4294901760
    %1110 = vmatpush1.msra.mxu0 %v1109
    %1111 = vmatprep.subr.mxu0 0.0
    %v1112 = vand.u32 %v120, 4294901760
    %1113 = vmatpush1.msra.mxu0 %v1112
    %1114 = vmatprep.subr.mxu0 0.0
    %v1115 = vand.u32 %v121, 4294901760
    %1116 = vmatpush1.msra.mxu0 %v1115
    %1117 = vmatprep.subr.mxu0 0.0
    %v1118 = vand.u32 %v122, 4294901760
    %1119 = vmatpush1.msra.mxu0 %v1118
    %1120 = vmatprep.subr.mxu0 0.0
    %v1121 = vand.u32 %v123, 4294901760
    %1122 = vmatpush1.msra.mxu0 %v1121
    %1123 = vmatprep.subr.mxu0 0.0
    %v1124 = vand.u32 %v124, 4294901760
    %1125 = vmatpush1.msra.mxu0 %v1124
    %1126 = vmatprep.subr.mxu0 0.0
    %v1127 = vand.u32 %v125, 4294901760
    %1128 = vmatpush1.msra.mxu0 %v1127
    %1129 = vmatprep.subr.mxu0 0.0
    %v1130 = vand.u32 %v126, 4294901760
    %1131 = vmatpush1.msra.mxu0 %v1130
    %1132 = vmatprep.subr.mxu0 0.0
    %v1133 = vand.u32 %v127, 4294901760
    %1134 = vmatpush1.msra.mxu0 %v1133
    %1135 = vmatprep.subr.mxu0 0.0
    %v1136 = vand.u32 %v128, 4294901760
    %1137 = vmatpush1.msra.mxu0 %v1136
    %v1138 = vand.u32 %v83, 4294901760
    %1139 = vmatprep.mubr.f32.mxu0 %v1138
    %v1140 = vand.u32 %v82, 4294901760
    %1141 = vmatmul.mubr.f32.gmra.mrb[0].mxu0 %v1140
    %v1142 = vpop.f32.mrb[0].mxu0
    %v1143 = vadd.f32 %v1025, %v1142
    %v1144 = vpop.f32.mrb[0].mxu0
    %v1145 = vand.u32 %v88, 4294901760
    %1146 = vmatprep.mubr.f32.mxu0 %v1145
    %v1147 = vand.u32 %v87, 4294901760
    %1148 = vmatmul.mubr.f32.gmra.mrb[0].mxu0 %v1147
    %v1149 = vpop.f32.mrb[0].mxu0
    %v1150 = vadd.f32 %v1032, %v1149
    %v1151 = vpop.f32.mrb[0].mxu0
    %v1152 = vand.u32 %v93, 4294901760
    %1153 = vmatprep.mubr.f32.mxu0 %v1152
    %v1154 = vand.u32 %v92, 4294901760
    %1155 = vmatmul.mubr.f32.gmra.mrb[0].mxu0 %v1154
    %v1156 = vpop.f32.mrb[0].mxu0
    %v1157 = vadd.f32 %v1039, %v1156
    %v1158 = vpop.f32.mrb[0].mxu0
    %1159 = vdwg.mxu0
    %1160 = vmatprep.subr.mxu0 0.0
    %v1161 = vand.u32 %v129, 4294901760
    %1162 = vmatpush1.msra.mxu0 %v1161
    %1163 = vmatprep.subr.mxu0 0.0
    %v1164 = vand.u32 %v130, 4294901760
    %1165 = vmatpush1.msra.mxu0 %v1164
    %1166 = vmatprep.subr.mxu0 0.0
    %v1167 = vand.u32 %v131, 4294901760
    %1168 = vmatpush1.msra.mxu0 %v1167
    %1169 = vmatprep.subr.mxu0 0.0
    %v1170 = vand.u32 %v132, 4294901760
    %1171 = vmatpush1.msra.mxu0 %v1170
    %1172 = vmatprep.subr.mxu0 0.0
    %v1173 = vand.u32 %v133, 4294901760
    %1174 = vmatpush1.msra.mxu0 %v1173
    %1175 = vmatprep.subr.mxu0 0.0
    %v1176 = vand.u32 %v134, 4294901760
    %1177 = vmatpush1.msra.mxu0 %v1176
    %1178 = vmatprep.subr.mxu0 0.0
    %v1179 = vand.u32 %v135, 4294901760
    %1180 = vmatpush1.msra.mxu0 %v1179
    %1181 = vmatprep.subr.mxu0 0.0
    %v1182 = vand.u32 %v136, 4294901760
    %1183 = vmatpush1.msra.mxu0 %v1182
    %1184 = vmatprep.subr.mxu0 0.0
    %v1185 = vand.u32 %v137, 4294901760
    %1186 = vmatpush1.msra.mxu0 %v1185
    %1187 = vmatprep.subr.mxu0 0.0
    %v1188 = vand.u32 %v138, 4294901760
    %1189 = vmatpush1.msra.mxu0 %v1188
    %1190 = vmatprep.subr.mxu0 0.0
    %v1191 = vand.u32 %v139, 4294901760
    %1192 = vmatpush1.msra.mxu0 %v1191
    %1193 = vmatprep.subr.mxu0 0.0
    %v1194 = vand.u32 %v140, 4294901760
    %1195 = vmatpush1.msra.mxu0 %v1194
    %1196 = vmatprep.subr.mxu0 0.0
    %v1197 = vand.u32 %v141, 4294901760
    %1198 = vmatpush1.msra.mxu0 %v1197
    %1199 = vmatprep.subr.mxu0 0.0
    %v1200 = vand.u32 %v142, 4294901760
    %1201 = vmatpush1.msra.mxu0 %v1200
    %1202 = vmatprep.subr.mxu0 0.0
    %v1203 = vand.u32 %v143, 4294901760
    %1204 = vmatpush1.msra.mxu0 %v1203
    %1205 = vmatprep.subr.mxu0 0.0
    %v1206 = vand.u32 %v144, 4294901760
    %1207 = vmatpush1.msra.mxu0 %v1206
    %1208 = vmatprep.subr.mxu0 0.0
    %v1209 = vand.u32 %v145, 4294901760
    %1210 = vmatpush1.msra.mxu0 %v1209
    %1211 = vmatprep.subr.mxu0 0.0
    %v1212 = vand.u32 %v146, 4294901760
    %1213 = vmatpush1.msra.mxu0 %v1212
    %1214 = vmatprep.subr.mxu0 0.0
    %v1215 = vand.u32 %v147, 4294901760
    %1216 = vmatpush1.msra.mxu0 %v1215
    %1217 = vmatprep.subr.mxu0 0.0
    %v1218 = vand.u32 %v148, 4294901760
    %1219 = vmatpush1.msra.mxu0 %v1218
    %1220 = vmatprep.subr.mxu0 0.0
    %v1221 = vand.u32 %v149, 4294901760
    %1222 = vmatpush1.msra.mxu0 %v1221
    %1223 = vmatprep.subr.mxu0 0.0
    %v1224 = vand.u32 %v150, 4294901760
    %1225 = vmatpush1.msra.mxu0 %v1224
    %1226 = vmatprep.subr.mxu0 0.0
    %v1227 = vand.u32 %v151, 4294901760
    %1228 = vmatpush1.msra.mxu0 %v1227
    %1229 = vmatprep.subr.mxu0 0.0
    %v1230 = vand.u32 %v152, 4294901760
    %1231 = vmatpush1.msra.mxu0 %v1230
    %1232 = vmatprep.subr.mxu0 0.0
    %v1233 = vand.u32 %v153, 4294901760
    %1234 = vmatpush1.msra.mxu0 %v1233
    %1235 = vmatprep.subr.mxu0 0.0
    %v1236 = vand.u32 %v154, 4294901760
    %1237 = vmatpush1.msra.mxu0 %v1236
    %1238 = vmatprep.subr.mxu0 0.0
    %v1239 = vand.u32 %v155, 4294901760
    %1240 = vmatpush1.msra.mxu0 %v1239
    %1241 = vmatprep.subr.mxu0 0.0
    %v1242 = vand.u32 %v156, 4294901760
    %1243 = vmatpush1.msra.mxu0 %v1242
    %1244 = vmatprep.subr.mxu0 0.0
    %v1245 = vand.u32 %v157, 4294901760
    %1246 = vmatpush1.msra.mxu0 %v1245
    %1247 = vmatprep.subr.mxu0 0.0
    %v1248 = vand.u32 %v158, 4294901760
    %1249 = vmatpush1.msra.mxu0 %v1248
    %1250 = vmatprep.subr.mxu0 0.0
    %v1251 = vand.u32 %v159, 4294901760
    %1252 = vmatpush1.msra.mxu0 %v1251
    %1253 = vmatprep.subr.mxu0 0.0
    %v1254 = vand.u32 %v160, 4294901760
    %1255 = vmatpush1.msra.mxu0 %v1254
    %v1256 = vand.u32 %v85, 4294901760
    %v1257 = vsub.f32 %v85, %v1256
    %v1258 = vand.u32 %v1257, 4294901760
    %v1259 = vsub.f32 %v1257, %v1258
    %v1260 = vand.u32 %v1259, 4294901760
    %1261 = vmatprep.mubr.f32.mxu0 %v1260
    %v1262 = vand.u32 %v84, 4294901760
    %v1263 = vsub.f32 %v84, %v1262
    %v1264 = vand.u32 %v1263, 4294901760
    %v1265 = vsub.f32 %v1263, %v1264
    %v1266 = vand.u32 %v1265, 4294901760
    %1267 = vmatmul.mubr.f32.gmra.mrb[0].mxu0 %v1266
    %v1268 = vpop.f32.mrb[0].mxu0
    %v1269 = vadd.f32 %v1143, %v1268
    %v1270 = vpop.f32.mrb[0].mxu0
    %v1271 = vand.u32 %v90, 4294901760
    %v1272 = vsub.f32 %v90, %v1271
    %v1273 = vand.u32 %v1272, 4294901760
    %v1274 = vsub.f32 %v1272, %v1273
    %v1275 = vand.u32 %v1274, 4294901760
    %1276 = vmatprep.mubr.f32.mxu0 %v1275
    %v1277 = vand.u32 %v89, 4294901760
    %v1278 = vsub.f32 %v89, %v1277
    %v1279 = vand.u32 %v1278, 4294901760
    %v1280 = vsub.f32 %v1278, %v1279
    %v1281 = vand.u32 %v1280, 4294901760
    %1282 = vmatmul.mubr.f32.gmra.mrb[0].mxu0 %v1281
    %v1283 = vpop.f32.mrb[0].mxu0
    %v1284 = vadd.f32 %v1150, %v1283
    %v1285 = vpop.f32.mrb[0].mxu0
    %v1286 = vand.u32 %v95, 4294901760
    %v1287 = vsub.f32 %v95, %v1286
    %v1288 = vand.u32 %v1287, 4294901760
    %v1289 = vsub.f32 %v1287, %v1288
    %v1290 = vand.u32 %v1289, 4294901760
    %1291 = vmatprep.mubr.f32.mxu0 %v1290
    %v1292 = vand.u32 %v94, 4294901760
    %v1293 = vsub.f32 %v94, %v1292
    %v1294 = vand.u32 %v1293, 4294901760
    %v1295 = vsub.f32 %v1293, %v1294
    %v1296 = vand.u32 %v1295, 4294901760
    %1297 = vmatmul.mubr.f32.gmra.mrb[0].mxu0 %v1296
    %v1298 = vpop.f32.mrb[0].mxu0
    %v1299 = vadd.f32 %v1157, %v1298
    %v1300 = vpop.f32.mrb[0].mxu0
    %1301 = vdwg.mxu0
    %1302 = vmatprep.subr.mxu0 0.0
    %v1303 = vand.u32 %v129, 4294901760
    %v1304 = vsub.f32 %v129, %v1303
    %v1305 = vand.u32 %v1304, 4294901760
    %v1306 = vsub.f32 %v1304, %v1305
    %v1307 = vand.u32 %v1306, 4294901760
    %1308 = vmatpush1.msra.mxu0 %v1307
    %1309 = vmatprep.subr.mxu0 0.0
    %v1310 = vand.u32 %v130, 4294901760
    %v1311 = vsub.f32 %v130, %v1310
    %v1312 = vand.u32 %v1311, 4294901760
    %v1313 = vsub.f32 %v1311, %v1312
    %v1314 = vand.u32 %v1313, 4294901760
    %1315 = vmatpush1.msra.mxu0 %v1314
    %1316 = vmatprep.subr.mxu0 0.0
    %v1317 = vand.u32 %v131, 4294901760
    %v1318 = vsub.f32 %v131, %v1317
    %v1319 = vand.u32 %v1318, 4294901760
    %v1320 = vsub.f32 %v1318, %v1319
    %v1321 = vand.u32 %v1320, 4294901760
    %1322 = vmatpush1.msra.mxu0 %v1321
    %1323 = vmatprep.subr.mxu0 0.0
    %v1324 = vand.u32 %v132, 4294901760
    %v1325 = vsub.f32 %v132, %v1324
    %v1326 = vand.u32 %v1325, 4294901760
    %v1327 = vsub.f32 %v1325, %v1326
    %v1328 = vand.u32 %v1327, 4294901760
    %1329 = vmatpush1.msra.mxu0 %v1328
    %1330 = vmatprep.subr.mxu0 0.0
    %v1331 = vand.u32 %v133, 4294901760
    %v1332 = vsub.f32 %v133, %v1331
    %v1333 = vand.u32 %v1332, 4294901760
    %v1334 = vsub.f32 %v1332, %v1333
    %v1335 = vand.u32 %v1334, 4294901760
    %1336 = vmatpush1.msra.mxu0 %v1335
    %1337 = vmatprep.subr.mxu0 0.0
    %v1338 = vand.u32 %v134, 4294901760
    %v1339 = vsub.f32 %v134, %v1338
    %v1340 = vand.u32 %v1339, 4294901760
    %v1341 = vsub.f32 %v1339, %v1340
    %v1342 = vand.u32 %v1341, 4294901760
    %1343 = vmatpush1.msra.mxu0 %v1342
    %1344 = vmatprep.subr.mxu0 0.0
    %v1345 = vand.u32 %v135, 4294901760
    %v1346 = vsub.f32 %v135, %v1345
    %v1347 = vand.u32 %v1346, 4294901760
    %v1348 = vsub.f32 %v1346, %v1347
    %v1349 = vand.u32 %v1348, 4294901760
    %1350 = vmatpush1.msra.mxu0 %v1349
    %1351 = vmatprep.subr.mxu0 0.0
    %v1352 = vand.u32 %v136, 4294901760
    %v1353 = vsub.f32 %v136, %v1352
    %v1354 = vand.u32 %v1353, 4294901760
    %v1355 = vsub.f32 %v1353, %v1354
    %v1356 = vand.u32 %v1355, 4294901760
    %1357 = vmatpush1.msra.mxu0 %v1356
    %1358 = vmatprep.subr.mxu0 0.0
    %v1359 = vand.u32 %v137, 4294901760
    %v1360 = vsub.f32 %v137, %v1359
    %v1361 = vand.u32 %v1360, 4294901760
    %v1362 = vsub.f32 %v1360, %v1361
    %v1363 = vand.u32 %v1362, 4294901760
    %1364 = vmatpush1.msra.mxu0 %v1363
    %1365 = vmatprep.subr.mxu0 0.0
    %v1366 = vand.u32 %v138, 4294901760
    %v1367 = vsub.f32 %v138, %v1366
    %v1368 = vand.u32 %v1367, 4294901760
    %v1369 = vsub.f32 %v1367, %v1368
    %v1370 = vand.u32 %v1369, 4294901760
    %1371 = vmatpush1.msra.mxu0 %v1370
    %1372 = vmatprep.subr.mxu0 0.0
    %v1373 = vand.u32 %v139, 4294901760
    %v1374 = vsub.f32 %v139, %v1373
    %v1375 = vand.u32 %v1374, 4294901760
    %v1376 = vsub.f32 %v1374, %v1375
    %v1377 = vand.u32 %v1376, 4294901760
    %1378 = vmatpush1.msra.mxu0 %v1377
    %1379 = vmatprep.subr.mxu0 0.0
    %v1380 = vand.u32 %v140, 4294901760
    %v1381 = vsub.f32 %v140, %v1380
    %v1382 = vand.u32 %v1381, 4294901760
    %v1383 = vsub.f32 %v1381, %v1382
    %v1384 = vand.u32 %v1383, 4294901760
    %1385 = vmatpush1.msra.mxu0 %v1384
    %1386 = vmatprep.subr.mxu0 0.0
    %v1387 = vand.u32 %v141, 4294901760
    %v1388 = vsub.f32 %v141, %v1387
    %v1389 = vand.u32 %v1388, 4294901760
    %v1390 = vsub.f32 %v1388, %v1389
    %v1391 = vand.u32 %v1390, 4294901760
    %1392 = vmatpush1.msra.mxu0 %v1391
    %1393 = vmatprep.subr.mxu0 0.0
    %v1394 = vand.u32 %v142, 4294901760
    %v1395 = vsub.f32 %v142, %v1394
    %v1396 = vand.u32 %v1395, 4294901760
    %v1397 = vsub.f32 %v1395, %v1396
    %v1398 = vand.u32 %v1397, 4294901760
    %1399 = vmatpush1.msra.mxu0 %v1398
    %1400 = vmatprep.subr.mxu0 0.0
    %v1401 = vand.u32 %v143, 4294901760
    %v1402 = vsub.f32 %v143, %v1401
    %v1403 = vand.u32 %v1402, 4294901760
    %v1404 = vsub.f32 %v1402, %v1403
    %v1405 = vand.u32 %v1404, 4294901760
    %1406 = vmatpush1.msra.mxu0 %v1405
    %1407 = vmatprep.subr.mxu0 0.0
    %v1408 = vand.u32 %v144, 4294901760
    %v1409 = vsub.f32 %v144, %v1408
    %v1410 = vand.u32 %v1409, 4294901760
    %v1411 = vsub.f32 %v1409, %v1410
    %v1412 = vand.u32 %v1411, 4294901760
    %1413 = vmatpush1.msra.mxu0 %v1412
    %1414 = vmatprep.subr.mxu0 0.0
    %v1415 = vand.u32 %v145, 4294901760
    %v1416 = vsub.f32 %v145, %v1415
    %v1417 = vand.u32 %v1416, 4294901760
    %v1418 = vsub.f32 %v1416, %v1417
    %v1419 = vand.u32 %v1418, 4294901760
    %1420 = vmatpush1.msra.mxu0 %v1419
    %1421 = vmatprep.subr.mxu0 0.0
    %v1422 = vand.u32 %v146, 4294901760
    %v1423 = vsub.f32 %v146, %v1422
    %v1424 = vand.u32 %v1423, 4294901760
    %v1425 = vsub.f32 %v1423, %v1424
    %v1426 = vand.u32 %v1425, 4294901760
    %1427 = vmatpush1.msra.mxu0 %v1426
    %1428 = vmatprep.subr.mxu0 0.0
    %v1429 = vand.u32 %v147, 4294901760
    %v1430 = vsub.f32 %v147, %v1429
    %v1431 = vand.u32 %v1430, 4294901760
    %v1432 = vsub.f32 %v1430, %v1431
    %v1433 = vand.u32 %v1432, 4294901760
    %1434 = vmatpush1.msra.mxu0 %v1433
    %1435 = vmatprep.subr.mxu0 0.0
    %v1436 = vand.u32 %v148, 4294901760
    %v1437 = vsub.f32 %v148, %v1436
    %v1438 = vand.u32 %v1437, 4294901760
    %v1439 = vsub.f32 %v1437, %v1438
    %v1440 = vand.u32 %v1439, 4294901760
    %1441 = vmatpush1.msra.mxu0 %v1440
    %1442 = vmatprep.subr.mxu0 0.0
    %v1443 = vand.u32 %v149, 4294901760
    %v1444 = vsub.f32 %v149, %v1443
    %v1445 = vand.u32 %v1444, 4294901760
    %v1446 = vsub.f32 %v1444, %v1445
    %v1447 = vand.u32 %v1446, 4294901760
    %1448 = vmatpush1.msra.mxu0 %v1447
    %1449 = vmatprep.subr.mxu0 0.0
    %v1450 = vand.u32 %v150, 4294901760
    %v1451 = vsub.f32 %v150, %v1450
    %v1452 = vand.u32 %v1451, 4294901760
    %v1453 = vsub.f32 %v1451, %v1452
    %v1454 = vand.u32 %v1453, 4294901760
    %1455 = vmatpush1.msra.mxu0 %v1454
    %1456 = vmatprep.subr.mxu0 0.0
    %v1457 = vand.u32 %v151, 4294901760
    %v1458 = vsub.f32 %v151, %v1457
    %v1459 = vand.u32 %v1458, 4294901760
    %v1460 = vsub.f32 %v1458, %v1459
    %v1461 = vand.u32 %v1460, 4294901760
    %1462 = vmatpush1.msra.mxu0 %v1461
    %1463 = vmatprep.subr.mxu0 0.0
    %v1464 = vand.u32 %v152, 4294901760
    %v1465 = vsub.f32 %v152, %v1464
    %v1466 = vand.u32 %v1465, 4294901760
    %v1467 = vsub.f32 %v1465, %v1466
    %v1468 = vand.u32 %v1467, 4294901760
    %1469 = vmatpush1.msra.mxu0 %v1468
    %1470 = vmatprep.subr.mxu0 0.0
    %v1471 = vand.u32 %v153, 4294901760
    %v1472 = vsub.f32 %v153, %v1471
    %v1473 = vand.u32 %v1472, 4294901760
    %v1474 = vsub.f32 %v1472, %v1473
    %v1475 = vand.u32 %v1474, 4294901760
    %1476 = vmatpush1.msra.mxu0 %v1475
    %1477 = vmatprep.subr.mxu0 0.0
    %v1478 = vand.u32 %v154, 4294901760
    %v1479 = vsub.f32 %v154, %v1478
    %v1480 = vand.u32 %v1479, 4294901760
    %v1481 = vsub.f32 %v1479, %v1480
    %v1482 = vand.u32 %v1481, 4294901760
    %1483 = vmatpush1.msra.mxu0 %v1482
    %1484 = vmatprep.subr.mxu0 0.0
    %v1485 = vand.u32 %v155, 4294901760
    %v1486 = vsub.f32 %v155, %v1485
    %v1487 = vand.u32 %v1486, 4294901760
    %v1488 = vsub.f32 %v1486, %v1487
    %v1489 = vand.u32 %v1488, 4294901760
    %1490 = vmatpush1.msra.mxu0 %v1489
    %1491 = vmatprep.subr.mxu0 0.0
    %v1492 = vand.u32 %v156, 4294901760
    %v1493 = vsub.f32 %v156, %v1492
    %v1494 = vand.u32 %v1493, 4294901760
    %v1495 = vsub.f32 %v1493, %v1494
    %v1496 = vand.u32 %v1495, 4294901760
    %1497 = vmatpush1.msra.mxu0 %v1496
    %1498 = vmatprep.subr.mxu0 0.0
    %v1499 = vand.u32 %v157, 4294901760
    %v1500 = vsub.f32 %v157, %v1499
    %v1501 = vand.u32 %v1500, 4294901760
    %v1502 = vsub.f32 %v1500, %v1501
    %v1503 = vand.u32 %v1502, 4294901760
    %1504 = vmatpush1.msra.mxu0 %v1503
    %1505 = vmatprep.subr.mxu0 0.0
    %v1506 = vand.u32 %v158, 4294901760
    %v1507 = vsub.f32 %v158, %v1506
    %v1508 = vand.u32 %v1507, 4294901760
    %v1509 = vsub.f32 %v1507, %v1508
    %v1510 = vand.u32 %v1509, 4294901760
    %1511 = vmatpush1.msra.mxu0 %v1510
    %1512 = vmatprep.subr.mxu0 0.0
    %v1513 = vand.u32 %v159, 4294901760
    %v1514 = vsub.f32 %v159, %v1513
    %v1515 = vand.u32 %v1514, 4294901760
    %v1516 = vsub.f32 %v1514, %v1515
    %v1517 = vand.u32 %v1516, 4294901760
    %1518 = vmatpush1.msra.mxu0 %v1517
    %1519 = vmatprep.subr.mxu0 0.0
    %v1520 = vand.u32 %v160, 4294901760
    %v1521 = vsub.f32 %v160, %v1520
    %v1522 = vand.u32 %v1521, 4294901760
    %v1523 = vsub.f32 %v1521, %v1522
    %v1524 = vand.u32 %v1523, 4294901760
    %1525 = vmatpush1.msra.mxu0 %v1524
    %v1526 = vand.u32 %v85, 4294901760
    %1527 = vmatprep.mubr.f32.mxu0 %v1526
    %v1528 = vand.u32 %v84, 4294901760
    %1529 = vmatmul.mubr.f32.gmra.mrb[0].mxu0 %v1528
    %v1530 = vpop.f32.mrb[0].mxu0
    %v1531 = vadd.f32 %v1269, %v1530
    %v1532 = vpop.f32.mrb[0].mxu0
    %v1533 = vand.u32 %v90, 4294901760
    %1534 = vmatprep.mubr.f32.mxu0 %v1533
    %v1535 = vand.u32 %v89, 4294901760
    %1536 = vmatmul.mubr.f32.gmra.mrb[0].mxu0 %v1535
    %v1537 = vpop.f32.mrb[0].mxu0
    %v1538 = vadd.f32 %v1284, %v1537
    %v1539 = vpop.f32.mrb[0].mxu0
    %v1540 = vand.u32 %v95, 4294901760
    %1541 = vmatprep.mubr.f32.mxu0 %v1540
    %v1542 = vand.u32 %v94, 4294901760
    %1543 = vmatmul.mubr.f32.gmra.mrb[0].mxu0 %v1542
    %v1544 = vpop.f32.mrb[0].mxu0
    %v1545 = vadd.f32 %v1299, %v1544
    %v1546 = vpop.f32.mrb[0].mxu0
    %1547 = vdwg.mxu0
    %1548 = vmatprep.subr.mxu0 0.0
    %v1549 = vand.u32 %v129, 4294901760
    %v1550 = vsub.f32 %v129, %v1549
    %1551 = vmatpush1.msra.mxu0 %v1550
    %1552 = vmatprep.subr.mxu0 0.0
    %v1553 = vand.u32 %v130, 4294901760
    %v1554 = vsub.f32 %v130, %v1553
    %1555 = vmatpush1.msra.mxu0 %v1554
    %1556 = vmatprep.subr.mxu0 0.0
    %v1557 = vand.u32 %v131, 4294901760
    %v1558 = vsub.f32 %v131, %v1557
    %1559 = vmatpush1.msra.mxu0 %v1558
    %1560 = vmatprep.subr.mxu0 0.0
    %v1561 = vand.u32 %v132, 4294901760
    %v1562 = vsub.f32 %v132, %v1561
    %1563 = vmatpush1.msra.mxu0 %v1562
    %1564 = vmatprep.subr.mxu0 0.0
    %v1565 = vand.u32 %v133, 4294901760
    %v1566 = vsub.f32 %v133, %v1565
    %1567 = vmatpush1.msra.mxu0 %v1566
    %1568 = vmatprep.subr.mxu0 0.0
    %v1569 = vand.u32 %v134, 4294901760
    %v1570 = vsub.f32 %v134, %v1569
    %1571 = vmatpush1.msra.mxu0 %v1570
    %1572 = vmatprep.subr.mxu0 0.0
    %v1573 = vand.u32 %v135, 4294901760
    %v1574 = vsub.f32 %v135, %v1573
    %1575 = vmatpush1.msra.mxu0 %v1574
    %1576 = vmatprep.subr.mxu0 0.0
    %v1577 = vand.u32 %v136, 4294901760
    %v1578 = vsub.f32 %v136, %v1577
    %1579 = vmatpush1.msra.mxu0 %v1578
    %1580 = vmatprep.subr.mxu0 0.0
    %v1581 = vand.u32 %v137, 4294901760
    %v1582 = vsub.f32 %v137, %v1581
    %1583 = vmatpush1.msra.mxu0 %v1582
    %1584 = vmatprep.subr.mxu0 0.0
    %v1585 = vand.u32 %v138, 4294901760
    %v1586 = vsub.f32 %v138, %v1585
    %1587 = vmatpush1.msra.mxu0 %v1586
    %1588 = vmatprep.subr.mxu0 0.0
    %v1589 = vand.u32 %v139, 4294901760
    %v1590 = vsub.f32 %v139, %v1589
    %1591 = vmatpush1.msra.mxu0 %v1590
    %1592 = vmatprep.subr.mxu0 0.0
    %v1593 = vand.u32 %v140, 4294901760
    %v1594 = vsub.f32 %v140, %v1593
    %1595 = vmatpush1.msra.mxu0 %v1594
    %1596 = vmatprep.subr.mxu0 0.0
    %v1597 = vand.u32 %v141, 4294901760
    %v1598 = vsub.f32 %v141, %v1597
    %1599 = vmatpush1.msra.mxu0 %v1598
    %1600 = vmatprep.subr.mxu0 0.0
    %v1601 = vand.u32 %v142, 4294901760
    %v1602 = vsub.f32 %v142, %v1601
    %1603 = vmatpush1.msra.mxu0 %v1602
    %1604 = vmatprep.subr.mxu0 0.0
    %v1605 = vand.u32 %v143, 4294901760
    %v1606 = vsub.f32 %v143, %v1605
    %1607 = vmatpush1.msra.mxu0 %v1606
    %1608 = vmatprep.subr.mxu0 0.0
    %v1609 = vand.u32 %v144, 4294901760
    %v1610 = vsub.f32 %v144, %v1609
    %1611 = vmatpush1.msra.mxu0 %v1610
    %1612 = vmatprep.subr.mxu0 0.0
    %v1613 = vand.u32 %v145, 4294901760
    %v1614 = vsub.f32 %v145, %v1613
    %1615 = vmatpush1.msra.mxu0 %v1614
    %1616 = vmatprep.subr.mxu0 0.0
    %v1617 = vand.u32 %v146, 4294901760
    %v1618 = vsub.f32 %v146, %v1617
    %1619 = vmatpush1.msra.mxu0 %v1618
    %1620 = vmatprep.subr.mxu0 0.0
    %v1621 = vand.u32 %v147, 4294901760
    %v1622 = vsub.f32 %v147, %v1621
    %1623 = vmatpush1.msra.mxu0 %v1622
    %1624 = vmatprep.subr.mxu0 0.0
    %v1625 = vand.u32 %v148, 4294901760
    %v1626 = vsub.f32 %v148, %v1625
    %1627 = vmatpush1.msra.mxu0 %v1626
    %1628 = vmatprep.subr.mxu0 0.0
    %v1629 = vand.u32 %v149, 4294901760
    %v1630 = vsub.f32 %v149, %v1629
    %1631 = vmatpush1.msra.mxu0 %v1630
    %1632 = vmatprep.subr.mxu0 0.0
    %v1633 = vand.u32 %v150, 4294901760
    %v1634 = vsub.f32 %v150, %v1633
    %1635 = vmatpush1.msra.mxu0 %v1634
    %1636 = vmatprep.subr.mxu0 0.0
    %v1637 = vand.u32 %v151, 4294901760
    %v1638 = vsub.f32 %v151, %v1637
    %1639 = vmatpush1.msra.mxu0 %v1638
    %1640 = vmatprep.subr.mxu0 0.0
    %v1641 = vand.u32 %v152, 4294901760
    %v1642 = vsub.f32 %v152, %v1641
    %1643 = vmatpush1.msra.mxu0 %v1642
    %1644 = vmatprep.subr.mxu0 0.0
    %v1645 = vand.u32 %v153, 4294901760
    %v1646 = vsub.f32 %v153, %v1645
    %1647 = vmatpush1.msra.mxu0 %v1646
    %1648 = vmatprep.subr.mxu0 0.0
    %v1649 = vand.u32 %v154, 4294901760
    %v1650 = vsub.f32 %v154, %v1649
    %1651 = vmatpush1.msra.mxu0 %v1650
    %1652 = vmatprep.subr.mxu0 0.0
    %v1653 = vand.u32 %v155, 4294901760
    %v1654 = vsub.f32 %v155, %v1653
    %1655 = vmatpush1.msra.mxu0 %v1654
    %1656 = vmatprep.subr.mxu0 0.0
    %v1657 = vand.u32 %v156, 4294901760
    %v1658 = vsub.f32 %v156, %v1657
    %1659 = vmatpush1.msra.mxu0 %v1658
    %1660 = vmatprep.subr.mxu0 0.0
    %v1661 = vand.u32 %v157, 4294901760
    %v1662 = vsub.f32 %v157, %v1661
    %1663 = vmatpush1.msra.mxu0 %v1662
    %1664 = vmatprep.subr.mxu0 0.0
    %v1665 = vand.u32 %v158, 4294901760
    %v1666 = vsub.f32 %v158, %v1665
    %1667 = vmatpush1.msra.mxu0 %v1666
    %1668 = vmatprep.subr.mxu0 0.0
    %v1669 = vand.u32 %v159, 4294901760
    %v1670 = vsub.f32 %v159, %v1669
    %1671 = vmatpush1.msra.mxu0 %v1670
    %1672 = vmatprep.subr.mxu0 0.0
    %v1673 = vand.u32 %v160, 4294901760
    %v1674 = vsub.f32 %v160, %v1673
    %1675 = vmatpush1.msra.mxu0 %v1674
    %v1676 = vand.u32 %v85, 4294901760
    %v1677 = vsub.f32 %v85, %v1676
    %1678 = vmatprep.mubr.f32.mxu0 %v1677
    %v1679 = vand.u32 %v84, 4294901760
    %v1680 = vsub.f32 %v84, %v1679
    %1681 = vmatmul.mubr.f32.gmra.mrb[0].mxu0 %v1680
    %v1682 = vpop.f32.mrb[0].mxu0
    %v1683 = vadd.f32 %v1531, %v1682
    %v1684 = vpop.f32.mrb[0].mxu0
    %v1685 = vand.u32 %v90, 4294901760
    %v1686 = vsub.f32 %v90, %v1685
    %1687 = vmatprep.mubr.f32.mxu0 %v1686
    %v1688 = vand.u32 %v89, 4294901760
    %v1689 = vsub.f32 %v89, %v1688
    %1690 = vmatmul.mubr.f32.gmra.mrb[0].mxu0 %v1689
    %v1691 = vpop.f32.mrb[0].mxu0
    %v1692 = vadd.f32 %v1538, %v1691
    %v1693 = vpop.f32.mrb[0].mxu0
    %v1694 = vand.u32 %v95, 4294901760
    %v1695 = vsub.f32 %v95, %v1694
    %1696 = vmatprep.mubr.f32.mxu0 %v1695
    %v1697 = vand.u32 %v94, 4294901760
    %v1698 = vsub.f32 %v94, %v1697
    %1699 = vmatmul.mubr.f32.gmra.mrb[0].mxu0 %v1698
    %v1700 = vpop.f32.mrb[0].mxu0
    %v1701 = vadd.f32 %v1545, %v1700
    %v1702 = vpop.f32.mrb[0].mxu0
    %1703 = vdwg.mxu0
    %1704 = vmatprep.subr.mxu0 0.0
    %v1705 = vand.u32 %v129, 4294901760
    %1706 = vmatpush1.msra.mxu0 %v1705
    %1707 = vmatprep.subr.mxu0 0.0
    %v1708 = vand.u32 %v130, 4294901760
    %1709 = vmatpush1.msra.mxu0 %v1708
    %1710 = vmatprep.subr.mxu0 0.0
    %v1711 = vand.u32 %v131, 4294901760
    %1712 = vmatpush1.msra.mxu0 %v1711
    %1713 = vmatprep.subr.mxu0 0.0
    %v1714 = vand.u32 %v132, 4294901760
    %1715 = vmatpush1.msra.mxu0 %v1714
    %1716 = vmatprep.subr.mxu0 0.0
    %v1717 = vand.u32 %v133, 4294901760
    %1718 = vmatpush1.msra.mxu0 %v1717
    %1719 = vmatprep.subr.mxu0 0.0
    %v1720 = vand.u32 %v134, 4294901760
    %1721 = vmatpush1.msra.mxu0 %v1720
    %1722 = vmatprep.subr.mxu0 0.0
    %v1723 = vand.u32 %v135, 4294901760
    %1724 = vmatpush1.msra.mxu0 %v1723
    %1725 = vmatprep.subr.mxu0 0.0
    %v1726 = vand.u32 %v136, 4294901760
    %1727 = vmatpush1.msra.mxu0 %v1726
    %1728 = vmatprep.subr.mxu0 0.0
    %v1729 = vand.u32 %v137, 4294901760
    %1730 = vmatpush1.msra.mxu0 %v1729
    %1731 = vmatprep.subr.mxu0 0.0
    %v1732 = vand.u32 %v138, 4294901760
    %1733 = vmatpush1.msra.mxu0 %v1732
    %1734 = vmatprep.subr.mxu0 0.0
    %v1735 = vand.u32 %v139, 4294901760
    %1736 = vmatpush1.msra.mxu0 %v1735
    %1737 = vmatprep.subr.mxu0 0.0
    %v1738 = vand.u32 %v140, 4294901760
    %1739 = vmatpush1.msra.mxu0 %v1738
    %1740 = vmatprep.subr.mxu0 0.0
    %v1741 = vand.u32 %v141, 4294901760
    %1742 = vmatpush1.msra.mxu0 %v1741
    %1743 = vmatprep.subr.mxu0 0.0
    %v1744 = vand.u32 %v142, 4294901760
    %1745 = vmatpush1.msra.mxu0 %v1744
    %1746 = vmatprep.subr.mxu0 0.0
    %v1747 = vand.u32 %v143, 4294901760
    %1748 = vmatpush1.msra.mxu0 %v1747
    %1749 = vmatprep.subr.mxu0 0.0
    %v1750 = vand.u32 %v144, 4294901760
    %1751 = vmatpush1.msra.mxu0 %v1750
    %1752 = vmatprep.subr.mxu0 0.0
    %v1753 = vand.u32 %v145, 4294901760
    %1754 = vmatpush1.msra.mxu0 %v1753
    %1755 = vmatprep.subr.mxu0 0.0
    %v1756 = vand.u32 %v146, 4294901760
    %1757 = vmatpush1.msra.mxu0 %v1756
    %1758 = vmatprep.subr.mxu0 0.0
    %v1759 = vand.u32 %v147, 4294901760
    %1760 = vmatpush1.msra.mxu0 %v1759
    %1761 = vmatprep.subr.mxu0 0.0
    %v1762 = vand.u32 %v148, 4294901760
    %1763 = vmatpush1.msra.mxu0 %v1762
    %1764 = vmatprep.subr.mxu0 0.0
    %v1765 = vand.u32 %v149, 4294901760
    %1766 = vmatpush1.msra.mxu0 %v1765
    %1767 = vmatprep.subr.mxu0 0.0
    %v1768 = vand.u32 %v150, 4294901760
    %1769 = vmatpush1.msra.mxu0 %v1768
    %1770 = vmatprep.subr.mxu0 0.0
    %v1771 = vand.u32 %v151, 4294901760
    %1772 = vmatpush1.msra.mxu0 %v1771
    %1773 = vmatprep.subr.mxu0 0.0
    %v1774 = vand.u32 %v152, 4294901760
    %1775 = vmatpush1.msra.mxu0 %v1774
    %1776 = vmatprep.subr.mxu0 0.0
    %v1777 = vand.u32 %v153, 4294901760
    %1778 = vmatpush1.msra.mxu0 %v1777
    %1779 = vmatprep.subr.mxu0 0.0
    %v1780 = vand.u32 %v154, 4294901760
    %1781 = vmatpush1.msra.mxu0 %v1780
    %1782 = vmatprep.subr.mxu0 0.0
    %v1783 = vand.u32 %v155, 4294901760
    %1784 = vmatpush1.msra.mxu0 %v1783
    %1785 = vmatprep.subr.mxu0 0.0
    %v1786 = vand.u32 %v156, 4294901760
    %1787 = vmatpush1.msra.mxu0 %v1786
    %1788 = vmatprep.subr.mxu0 0.0
    %v1789 = vand.u32 %v157, 4294901760
    %1790 = vmatpush1.msra.mxu0 %v1789
    %1791 = vmatprep.subr.mxu0 0.0
    %v1792 = vand.u32 %v158, 4294901760
    %1793 = vmatpush1.msra.mxu0 %v1792
    %1794 = vmatprep.subr.mxu0 0.0
    %v1795 = vand.u32 %v159, 4294901760
    %1796 = vmatpush1.msra.mxu0 %v1795
    %1797 = vmatprep.subr.mxu0 0.0
    %v1798 = vand.u32 %v160, 4294901760
    %1799 = vmatpush1.msra.mxu0 %v1798
    %v1800 = vand.u32 %v85, 4294901760
    %v1801 = vsub.f32 %v85, %v1800
    %v1802 = vand.u32 %v1801, 4294901760
    %1803 = vmatprep.mubr.f32.mxu0 %v1802
    %v1804 = vand.u32 %v84, 4294901760
    %v1805 = vsub.f32 %v84, %v1804
    %v1806 = vand.u32 %v1805, 4294901760
    %1807 = vmatmul.mubr.f32.gmra.mrb[0].mxu0 %v1806
    %v1808 = vpop.f32.mrb[0].mxu0
    %v1809 = vadd.f32 %v1683, %v1808
    %v1810 = vpop.f32.mrb[0].mxu0
    %v1811 = vand.u32 %v90, 4294901760
    %v1812 = vsub.f32 %v90, %v1811
    %v1813 = vand.u32 %v1812, 4294901760
    %1814 = vmatprep.mubr.f32.mxu0 %v1813
    %v1815 = vand.u32 %v89, 4294901760
    %v1816 = vsub.f32 %v89, %v1815
    %v1817 = vand.u32 %v1816, 4294901760
    %1818 = vmatmul.mubr.f32.gmra.mrb[0].mxu0 %v1817
    %v1819 = vpop.f32.mrb[0].mxu0
    %v1820 = vadd.f32 %v1692, %v1819
    %v1821 = vpop.f32.mrb[0].mxu0
    %v1822 = vand.u32 %v95, 4294901760
    %v1823 = vsub.f32 %v95, %v1822
    %v1824 = vand.u32 %v1823, 4294901760
    %1825 = vmatprep.mubr.f32.mxu0 %v1824
    %v1826 = vand.u32 %v94, 4294901760
    %v1827 = vsub.f32 %v94, %v1826
    %v1828 = vand.u32 %v1827, 4294901760
    %1829 = vmatmul.mubr.f32.gmra.mrb[0].mxu0 %v1828
    %v1830 = vpop.f32.mrb[0].mxu0
    %v1831 = vadd.f32 %v1701, %v1830
    %v1832 = vpop.f32.mrb[0].mxu0
    %1833 = vdwg.mxu0
    %1834 = vmatprep.subr.mxu0 0.0
    %v1835 = vand.u32 %v129, 4294901760
    %v1836 = vsub.f32 %v129, %v1835
    %v1837 = vand.u32 %v1836, 4294901760
    %1838 = vmatpush1.msra.mxu0 %v1837
    %1839 = vmatprep.subr.mxu0 0.0
    %v1840 = vand.u32 %v130, 4294901760
    %v1841 = vsub.f32 %v130, %v1840
    %v1842 = vand.u32 %v1841, 4294901760
    %1843 = vmatpush1.msra.mxu0 %v1842
    %1844 = vmatprep.subr.mxu0 0.0
    %v1845 = vand.u32 %v131, 4294901760
    %v1846 = vsub.f32 %v131, %v1845
    %v1847 = vand.u32 %v1846, 4294901760
    %1848 = vmatpush1.msra.mxu0 %v1847
    %1849 = vmatprep.subr.mxu0 0.0
    %v1850 = vand.u32 %v132, 4294901760
    %v1851 = vsub.f32 %v132, %v1850
    %v1852 = vand.u32 %v1851, 4294901760
    %1853 = vmatpush1.msra.mxu0 %v1852
    %1854 = vmatprep.subr.mxu0 0.0
    %v1855 = vand.u32 %v133, 4294901760
    %v1856 = vsub.f32 %v133, %v1855
    %v1857 = vand.u32 %v1856, 4294901760
    %1858 = vmatpush1.msra.mxu0 %v1857
    %1859 = vmatprep.subr.mxu0 0.0
    %v1860 = vand.u32 %v134, 4294901760
    %v1861 = vsub.f32 %v134, %v1860
    %v1862 = vand.u32 %v1861, 4294901760
    %1863 = vmatpush1.msra.mxu0 %v1862
    %1864 = vmatprep.subr.mxu0 0.0
    %v1865 = vand.u32 %v135, 4294901760
    %v1866 = vsub.f32 %v135, %v1865
    %v1867 = vand.u32 %v1866, 4294901760
    %1868 = vmatpush1.msra.mxu0 %v1867
    %1869 = vmatprep.subr.mxu0 0.0
    %v1870 = vand.u32 %v136, 4294901760
    %v1871 = vsub.f32 %v136, %v1870
    %v1872 = vand.u32 %v1871, 4294901760
    %1873 = vmatpush1.msra.mxu0 %v1872
    %1874 = vmatprep.subr.mxu0 0.0
    %v1875 = vand.u32 %v137, 4294901760
    %v1876 = vsub.f32 %v137, %v1875
    %v1877 = vand.u32 %v1876, 4294901760
    %1878 = vmatpush1.msra.mxu0 %v1877
    %1879 = vmatprep.subr.mxu0 0.0
    %v1880 = vand.u32 %v138, 4294901760
    %v1881 = vsub.f32 %v138, %v1880
    %v1882 = vand.u32 %v1881, 4294901760
    %1883 = vmatpush1.msra.mxu0 %v1882
    %1884 = vmatprep.subr.mxu0 0.0
    %v1885 = vand.u32 %v139, 4294901760
    %v1886 = vsub.f32 %v139, %v1885
    %v1887 = vand.u32 %v1886, 4294901760
    %1888 = vmatpush1.msra.mxu0 %v1887
    %1889 = vmatprep.subr.mxu0 0.0
    %v1890 = vand.u32 %v140, 4294901760
    %v1891 = vsub.f32 %v140, %v1890
    %v1892 = vand.u32 %v1891, 4294901760
    %1893 = vmatpush1.msra.mxu0 %v1892
    %1894 = vmatprep.subr.mxu0 0.0
    %v1895 = vand.u32 %v141, 4294901760
    %v1896 = vsub.f32 %v141, %v1895
    %v1897 = vand.u32 %v1896, 4294901760
    %1898 = vmatpush1.msra.mxu0 %v1897
    %1899 = vmatprep.subr.mxu0 0.0
    %v1900 = vand.u32 %v142, 4294901760
    %v1901 = vsub.f32 %v142, %v1900
    %v1902 = vand.u32 %v1901, 4294901760
    %1903 = vmatpush1.msra.mxu0 %v1902
    %1904 = vmatprep.subr.mxu0 0.0
    %v1905 = vand.u32 %v143, 4294901760
    %v1906 = vsub.f32 %v143, %v1905
    %v1907 = vand.u32 %v1906, 4294901760
    %1908 = vmatpush1.msra.mxu0 %v1907
    %1909 = vmatprep.subr.mxu0 0.0
    %v1910 = vand.u32 %v144, 4294901760
    %v1911 = vsub.f32 %v144, %v1910
    %v1912 = vand.u32 %v1911, 4294901760
    %1913 = vmatpush1.msra.mxu0 %v1912
    %1914 = vmatprep.subr.mxu0 0.0
    %v1915 = vand.u32 %v145, 4294901760
    %v1916 = vsub.f32 %v145, %v1915
    %v1917 = vand.u32 %v1916, 4294901760
    %1918 = vmatpush1.msra.mxu0 %v1917
    %1919 = vmatprep.subr.mxu0 0.0
    %v1920 = vand.u32 %v146, 4294901760
    %v1921 = vsub.f32 %v146, %v1920
    %v1922 = vand.u32 %v1921, 4294901760
    %1923 = vmatpush1.msra.mxu0 %v1922
    %1924 = vmatprep.subr.mxu0 0.0
    %v1925 = vand.u32 %v147, 4294901760
    %v1926 = vsub.f32 %v147, %v1925
    %v1927 = vand.u32 %v1926, 4294901760
    %1928 = vmatpush1.msra.mxu0 %v1927
    %1929 = vmatprep.subr.mxu0 0.0
    %v1930 = vand.u32 %v148, 4294901760
    %v1931 = vsub.f32 %v148, %v1930
    %v1932 = vand.u32 %v1931, 4294901760
    %1933 = vmatpush1.msra.mxu0 %v1932
    %1934 = vmatprep.subr.mxu0 0.0
    %v1935 = vand.u32 %v149, 4294901760
    %v1936 = vsub.f32 %v149, %v1935
    %v1937 = vand.u32 %v1936, 4294901760
    %1938 = vmatpush1.msra.mxu0 %v1937
    %1939 = vmatprep.subr.mxu0 0.0
    %v1940 = vand.u32 %v150, 4294901760
    %v1941 = vsub.f32 %v150, %v1940
    %v1942 = vand.u32 %v1941, 4294901760
    %1943 = vmatpush1.msra.mxu0 %v1942
    %1944 = vmatprep.subr.mxu0 0.0
    %v1945 = vand.u32 %v151, 4294901760
    %v1946 = vsub.f32 %v151, %v1945
    %v1947 = vand.u32 %v1946, 4294901760
    %1948 = vmatpush1.msra.mxu0 %v1947
    %1949 = vmatprep.subr.mxu0 0.0
    %v1950 = vand.u32 %v152, 4294901760
    %v1951 = vsub.f32 %v152, %v1950
    %v1952 = vand.u32 %v1951, 4294901760
    %1953 = vmatpush1.msra.mxu0 %v1952
    %1954 = vmatprep.subr.mxu0 0.0
    %v1955 = vand.u32 %v153, 4294901760
    %v1956 = vsub.f32 %v153, %v1955
    %v1957 = vand.u32 %v1956, 4294901760
    %1958 = vmatpush1.msra.mxu0 %v1957
    %1959 = vmatprep.subr.mxu0 0.0
    %v1960 = vand.u32 %v154, 4294901760
    %v1961 = vsub.f32 %v154, %v1960
    %v1962 = vand.u32 %v1961, 4294901760
    %1963 = vmatpush1.msra.mxu0 %v1962
    %1964 = vmatprep.subr.mxu0 0.0
    %v1965 = vand.u32 %v155, 4294901760
    %v1966 = vsub.f32 %v155, %v1965
    %v1967 = vand.u32 %v1966, 4294901760
    %1968 = vmatpush1.msra.mxu0 %v1967
    %1969 = vmatprep.subr.mxu0 0.0
    %v1970 = vand.u32 %v156, 4294901760
    %v1971 = vsub.f32 %v156, %v1970
    %v1972 = vand.u32 %v1971, 4294901760
    %1973 = vmatpush1.msra.mxu0 %v1972
    %1974 = vmatprep.subr.mxu0 0.0
    %v1975 = vand.u32 %v157, 4294901760
    %v1976 = vsub.f32 %v157, %v1975
    %v1977 = vand.u32 %v1976, 4294901760
    %1978 = vmatpush1.msra.mxu0 %v1977
    %1979 = vmatprep.subr.mxu0 0.0
    %v1980 = vand.u32 %v158, 4294901760
    %v1981 = vsub.f32 %v158, %v1980
    %v1982 = vand.u32 %v1981, 4294901760
    %1983 = vmatpush1.msra.mxu0 %v1982
    %1984 = vmatprep.subr.mxu0 0.0
    %v1985 = vand.u32 %v159, 4294901760
    %v1986 = vsub.f32 %v159, %v1985
    %v1987 = vand.u32 %v1986, 4294901760
    %1988 = vmatpush1.msra.mxu0 %v1987
    %1989 = vmatprep.subr.mxu0 0.0
    %v1990 = vand.u32 %v160, 4294901760
    %v1991 = vsub.f32 %v160, %v1990
    %v1992 = vand.u32 %v1991, 4294901760
    %1993 = vmatpush1.msra.mxu0 %v1992
    %v1994 = vand.u32 %v85, 4294901760
    %1995 = vmatprep.mubr.f32.mxu0 %v1994
    %v1996 = vand.u32 %v84, 4294901760
    %1997 = vmatmul.mubr.f32.gmra.mrb[0].mxu0 %v1996
    %v1998 = vpop.f32.mrb[0].mxu0
    %v1999 = vadd.f32 %v1809, %v1998
    %v2000 = vpop.f32.mrb[0].mxu0
    %v2001 = vand.u32 %v90, 4294901760
    %2002 = vmatprep.mubr.f32.mxu0 %v2001
    %v2003 = vand.u32 %v89, 4294901760
    %2004 = vmatmul.mubr.f32.gmra.mrb[0].mxu0 %v2003
    %v2005 = vpop.f32.mrb[0].mxu0
    %v2006 = vadd.f32 %v1820, %v2005
    %v2007 = vpop.f32.mrb[0].mxu0
    %v2008 = vand.u32 %v95, 4294901760
    %2009 = vmatprep.mubr.f32.mxu0 %v2008
    %v2010 = vand.u32 %v94, 4294901760
    %2011 = vmatmul.mubr.f32.gmra.mrb[0].mxu0 %v2010
    %v2012 = vpop.f32.mrb[0].mxu0
    %v2013 = vadd.f32 %v1831, %v2012
    %v2014 = vpop.f32.mrb[0].mxu0
    %2015 = vdwg.mxu0
    %2016 = vmatprep.subr.mxu0 0.0
    %v2017 = vand.u32 %v129, 4294901760
    %2018 = vmatpush1.msra.mxu0 %v2017
    %2019 = vmatprep.subr.mxu0 0.0
    %v2020 = vand.u32 %v130, 4294901760
    %2021 = vmatpush1.msra.mxu0 %v2020
    %2022 = vmatprep.subr.mxu0 0.0
    %v2023 = vand.u32 %v131, 4294901760
    %2024 = vmatpush1.msra.mxu0 %v2023
    %2025 = vmatprep.subr.mxu0 0.0
    %v2026 = vand.u32 %v132, 4294901760
    %2027 = vmatpush1.msra.mxu0 %v2026
    %2028 = vmatprep.subr.mxu0 0.0
    %v2029 = vand.u32 %v133, 4294901760
    %2030 = vmatpush1.msra.mxu0 %v2029
    %2031 = vmatprep.subr.mxu0 0.0
    %v2032 = vand.u32 %v134, 4294901760
    %2033 = vmatpush1.msra.mxu0 %v2032
    %2034 = vmatprep.subr.mxu0 0.0
    %v2035 = vand.u32 %v135, 4294901760
    %2036 = vmatpush1.msra.mxu0 %v2035
    %2037 = vmatprep.subr.mxu0 0.0
    %v2038 = vand.u32 %v136, 4294901760
    %2039 = vmatpush1.msra.mxu0 %v2038
    %2040 = vmatprep.subr.mxu0 0.0
    %v2041 = vand.u32 %v137, 4294901760
    %2042 = vmatpush1.msra.mxu0 %v2041
    %2043 = vmatprep.subr.mxu0 0.0
    %v2044 = vand.u32 %v138, 4294901760
    %2045 = vmatpush1.msra.mxu0 %v2044
    %2046 = vmatprep.subr.mxu0 0.0
    %v2047 = vand.u32 %v139, 4294901760
    %2048 = vmatpush1.msra.mxu0 %v2047
    %2049 = vmatprep.subr.mxu0 0.0
    %v2050 = vand.u32 %v140, 4294901760
    %2051 = vmatpush1.msra.mxu0 %v2050
    %2052 = vmatprep.subr.mxu0 0.0
    %v2053 = vand.u32 %v141, 4294901760
    %2054 = vmatpush1.msra.mxu0 %v2053
    %2055 = vmatprep.subr.mxu0 0.0
    %v2056 = vand.u32 %v142, 4294901760
    %2057 = vmatpush1.msra.mxu0 %v2056
    %2058 = vmatprep.subr.mxu0 0.0
    %v2059 = vand.u32 %v143, 4294901760
    %2060 = vmatpush1.msra.mxu0 %v2059
    %2061 = vmatprep.subr.mxu0 0.0
    %v2062 = vand.u32 %v144, 4294901760
    %2063 = vmatpush1.msra.mxu0 %v2062
    %2064 = vmatprep.subr.mxu0 0.0
    %v2065 = vand.u32 %v145, 4294901760
    %2066 = vmatpush1.msra.mxu0 %v2065
    %2067 = vmatprep.subr.mxu0 0.0
    %v2068 = vand.u32 %v146, 4294901760
    %2069 = vmatpush1.msra.mxu0 %v2068
    %2070 = vmatprep.subr.mxu0 0.0
    %v2071 = vand.u32 %v147, 4294901760
    %2072 = vmatpush1.msra.mxu0 %v2071
    %2073 = vmatprep.subr.mxu0 0.0
    %v2074 = vand.u32 %v148, 4294901760
    %2075 = vmatpush1.msra.mxu0 %v2074
    %2076 = vmatprep.subr.mxu0 0.0
    %v2077 = vand.u32 %v149, 4294901760
    %2078 = vmatpush1.msra.mxu0 %v2077
    %2079 = vmatprep.subr.mxu0 0.0
    %v2080 = vand.u32 %v150, 4294901760
    %2081 = vmatpush1.msra.mxu0 %v2080
    %2082 = vmatprep.subr.mxu0 0.0
    %v2083 = vand.u32 %v151, 4294901760
    %2084 = vmatpush1.msra.mxu0 %v2083
    %2085 = vmatprep.subr.mxu0 0.0
    %v2086 = vand.u32 %v152, 4294901760
    %2087 = vmatpush1.msra.mxu0 %v2086
    %2088 = vmatprep.subr.mxu0 0.0
    %v2089 = vand.u32 %v153, 4294901760
    %2090 = vmatpush1.msra.mxu0 %v2089
    %2091 = vmatprep.subr.mxu0 0.0
    %v2092 = vand.u32 %v154, 4294901760
    %2093 = vmatpush1.msra.mxu0 %v2092
    %2094 = vmatprep.subr.mxu0 0.0
    %v2095 = vand.u32 %v155, 4294901760
    %2096 = vmatpush1.msra.mxu0 %v2095
    %2097 = vmatprep.subr.mxu0 0.0
    %v2098 = vand.u32 %v156, 4294901760
    %2099 = vmatpush1.msra.mxu0 %v2098
    %2100 = vmatprep.subr.mxu0 0.0
    %v2101 = vand.u32 %v157, 4294901760
    %2102 = vmatpush1.msra.mxu0 %v2101
    %2103 = vmatprep.subr.mxu0 0.0
    %v2104 = vand.u32 %v158, 4294901760
    %2105 = vmatpush1.msra.mxu0 %v2104
    %2106 = vmatprep.subr.mxu0 0.0
    %v2107 = vand.u32 %v159, 4294901760
    %2108 = vmatpush1.msra.mxu0 %v2107
    %2109 = vmatprep.subr.mxu0 0.0
    %v2110 = vand.u32 %v160, 4294901760
    %2111 = vmatpush1.msra.mxu0 %v2110
    %v2112 = vand.u32 %v85, 4294901760
    %2113 = vmatprep.mubr.f32.mxu0 %v2112
    %v2114 = vand.u32 %v84, 4294901760
    %2115 = vmatmul.mubr.f32.gmra.mrb[0].mxu0 %v2114
    %v2116 = vpop.f32.mrb[0].mxu0
    %v2117 = vadd.f32 %v1999, %v2116
    %v2118 = vpop.f32.mrb[0].mxu0
    %v2119 = vand.u32 %v90, 4294901760
    %2120 = vmatprep.mubr.f32.mxu0 %v2119
    %v2121 = vand.u32 %v89, 4294901760
    %2122 = vmatmul.mubr.f32.gmra.mrb[0].mxu0 %v2121
    %v2123 = vpop.f32.mrb[0].mxu0
    %v2124 = vadd.f32 %v2006, %v2123
    %v2125 = vpop.f32.mrb[0].mxu0
    %v2126 = vand.u32 %v95, 4294901760
    %2127 = vmatprep.mubr.f32.mxu0 %v2126
    %v2128 = vand.u32 %v94, 4294901760
    %2129 = vmatmul.mubr.f32.gmra.mrb[0].mxu0 %v2128
    %v2130 = vpop.f32.mrb[0].mxu0
    %v2131 = vadd.f32 %v2013, %v2130
    %v2132 = vpop.f32.mrb[0].mxu0
    %2133 = vdwg.mxu0
    %2134 = vmatprep.subr.mxu0 0.0
    %v2135 = vand.u32 %v161, 4294901760
    %2136 = vmatpush1.msra.mxu0 %v2135
    %2137 = vmatprep.subr.mxu0 0.0
    %v2138 = vand.u32 %v162, 4294901760
    %2139 = vmatpush1.msra.mxu0 %v2138
    %2140 = vmatprep.subr.mxu0 0.0
    %v2141 = vand.u32 %v163, 4294901760
    %2142 = vmatpush1.msra.mxu0 %v2141
    %2143 = vmatprep.subr.mxu0 0.0
    %v2144 = vand.u32 %v164, 4294901760
    %2145 = vmatpush1.msra.mxu0 %v2144
    %2146 = vmatprep.subr.mxu0 0.0
    %v2147 = vand.u32 %v165, 4294901760
    %2148 = vmatpush1.msra.mxu0 %v2147
    %2149 = vmatprep.subr.mxu0 0.0
    %v2150 = vand.u32 %v166, 4294901760
    %2151 = vmatpush1.msra.mxu0 %v2150
    %2152 = vmatprep.subr.mxu0 0.0
    %v2153 = vand.u32 %v167, 4294901760
    %2154 = vmatpush1.msra.mxu0 %v2153
    %2155 = vmatprep.subr.mxu0 0.0
    %v2156 = vand.u32 %v168, 4294901760
    %2157 = vmatpush1.msra.mxu0 %v2156
    %2158 = vmatprep.subr.mxu0 0.0
    %2159 = vmatpush1.msra.mxu0 0.0
    %2160 = vmatprep.subr.mxu0 0.0
    %2161 = vmatpush1.msra.mxu0 0.0
    %2162 = vmatprep.subr.mxu0 0.0
    %2163 = vmatpush1.msra.mxu0 0.0
    %2164 = vmatprep.subr.mxu0 0.0
    %2165 = vmatpush1.msra.mxu0 0.0
    %2166 = vmatprep.subr.mxu0 0.0
    %2167 = vmatpush1.msra.mxu0 0.0
    %2168 = vmatprep.subr.mxu0 0.0
    %2169 = vmatpush1.msra.mxu0 0.0
    %2170 = vmatprep.subr.mxu0 0.0
    %2171 = vmatpush1.msra.mxu0 0.0
    %2172 = vmatprep.subr.mxu0 0.0
    %2173 = vmatpush1.msra.mxu0 0.0
    %2174 = vmatprep.subr.mxu0 0.0
    %2175 = vmatpush1.msra.mxu0 0.0
    %2176 = vmatprep.subr.mxu0 0.0
    %2177 = vmatpush1.msra.mxu0 0.0
    %2178 = vmatprep.subr.mxu0 0.0
    %2179 = vmatpush1.msra.mxu0 0.0
    %2180 = vmatprep.subr.mxu0 0.0
    %2181 = vmatpush1.msra.mxu0 0.0
    %2182 = vmatprep.subr.mxu0 0.0
    %2183 = vmatpush1.msra.mxu0 0.0
    %2184 = vmatprep.subr.mxu0 0.0
    %2185 = vmatpush1.msra.mxu0 0.0
    %2186 = vmatprep.subr.mxu0 0.0
    %2187 = vmatpush1.msra.mxu0 0.0
    %2188 = vmatprep.subr.mxu0 0.0
    %2189 = vmatpush1.msra.mxu0 0.0
    %2190 = vmatprep.subr.mxu0 0.0
    %2191 = vmatpush1.msra.mxu0 0.0
    %2192 = vmatprep.subr.mxu0 0.0
    %2193 = vmatpush1.msra.mxu0 0.0
    %2194 = vmatprep.subr.mxu0 0.0
    %2195 = vmatpush1.msra.mxu0 0.0
    %2196 = vmatprep.subr.mxu0 0.0
    %2197 = vmatpush1.msra.mxu0 0.0
    %2198 = vmatprep.subr.mxu0 0.0
    %2199 = vmatpush1.msra.mxu0 0.0
    %2200 = vmatprep.subr.mxu0 0.0
    %2201 = vmatpush1.msra.mxu0 0.0
    %2202 = vmatprep.subr.mxu0 0.0
    %2203 = vmatpush1.msra.mxu0 0.0
    %2204 = vmatprep.subr.mxu0 0.0
    %2205 = vmatpush1.msra.mxu0 0.0
    %2206 = vmatprep.mubr.f32.mxu0 0.0
    %v2207 = vand.u32 %v178, 4294901760
    %v2208 = vsub.f32 %v178, %v2207
    %v2209 = vand.u32 %v2208, 4294901760
    %v2210 = vsub.f32 %v2208, %v2209
    %v2211 = vand.u32 %v2210, 4294901760
    %2212 = vmatmul.mubr.f32.gmra.mrb[0].mxu0 %v2211
    %v2213 = vpop.f32.mrb[0].mxu0
    %v2214 = vadd.f32 %v2117, %v2213
    %v2215 = vpop.f32.mrb[0].mxu0
    %2216 = vmatprep.mubr.f32.mxu0 0.0
    %v2217 = vand.u32 %v181, 4294901760
    %v2218 = vsub.f32 %v181, %v2217
    %v2219 = vand.u32 %v2218, 4294901760
    %v2220 = vsub.f32 %v2218, %v2219
    %v2221 = vand.u32 %v2220, 4294901760
    %2222 = vmatmul.mubr.f32.gmra.mrb[0].mxu0 %v2221
    %v2223 = vpop.f32.mrb[0].mxu0
    %v2224 = vadd.f32 %v2124, %v2223
    %v2225 = vpop.f32.mrb[0].mxu0
    %2226 = vmatprep.mubr.f32.mxu0 0.0
    %v2227 = vand.u32 %v184, 4294901760
    %v2228 = vsub.f32 %v184, %v2227
    %v2229 = vand.u32 %v2228, 4294901760
    %v2230 = vsub.f32 %v2228, %v2229
    %v2231 = vand.u32 %v2230, 4294901760
    %2232 = vmatmul.mubr.f32.gmra.mrb[0].mxu0 %v2231
    %v2233 = vpop.f32.mrb[0].mxu0
    %v2234 = vadd.f32 %v2131, %v2233
    %v2235 = vpop.f32.mrb[0].mxu0
    %2236 = vdwg.mxu0
    %2237 = vmatprep.subr.mxu0 0.0
    %v2238 = vand.u32 %v161, 4294901760
    %v2239 = vsub.f32 %v161, %v2238
    %v2240 = vand.u32 %v2239, 4294901760
    %v2241 = vsub.f32 %v2239, %v2240
    %v2242 = vand.u32 %v2241, 4294901760
    %2243 = vmatpush1.msra.mxu0 %v2242
    %2244 = vmatprep.subr.mxu0 0.0
    %v2245 = vand.u32 %v162, 4294901760
    %v2246 = vsub.f32 %v162, %v2245
    %v2247 = vand.u32 %v2246, 4294901760
    %v2248 = vsub.f32 %v2246, %v2247
    %v2249 = vand.u32 %v2248, 4294901760
    %2250 = vmatpush1.msra.mxu0 %v2249
    %2251 = vmatprep.subr.mxu0 0.0
    %v2252 = vand.u32 %v163, 4294901760
    %v2253 = vsub.f32 %v163, %v2252
    %v2254 = vand.u32 %v2253, 4294901760
    %v2255 = vsub.f32 %v2253, %v2254
    %v2256 = vand.u32 %v2255, 4294901760
    %2257 = vmatpush1.msra.mxu0 %v2256
    %2258 = vmatprep.subr.mxu0 0.0
    %v2259 = vand.u32 %v164, 4294901760
    %v2260 = vsub.f32 %v164, %v2259
    %v2261 = vand.u32 %v2260, 4294901760
    %v2262 = vsub.f32 %v2260, %v2261
    %v2263 = vand.u32 %v2262, 4294901760
    %2264 = vmatpush1.msra.mxu0 %v2263
    %2265 = vmatprep.subr.mxu0 0.0
    %v2266 = vand.u32 %v165, 4294901760
    %v2267 = vsub.f32 %v165, %v2266
    %v2268 = vand.u32 %v2267, 4294901760
    %v2269 = vsub.f32 %v2267, %v2268
    %v2270 = vand.u32 %v2269, 4294901760
    %2271 = vmatpush1.msra.mxu0 %v2270
    %2272 = vmatprep.subr.mxu0 0.0
    %v2273 = vand.u32 %v166, 4294901760
    %v2274 = vsub.f32 %v166, %v2273
    %v2275 = vand.u32 %v2274, 4294901760
    %v2276 = vsub.f32 %v2274, %v2275
    %v2277 = vand.u32 %v2276, 4294901760
    %2278 = vmatpush1.msra.mxu0 %v2277
    %2279 = vmatprep.subr.mxu0 0.0
    %v2280 = vand.u32 %v167, 4294901760
    %v2281 = vsub.f32 %v167, %v2280
    %v2282 = vand.u32 %v2281, 4294901760
    %v2283 = vsub.f32 %v2281, %v2282
    %v2284 = vand.u32 %v2283, 4294901760
    %2285 = vmatpush1.msra.mxu0 %v2284
    %2286 = vmatprep.subr.mxu0 0.0
    %v2287 = vand.u32 %v168, 4294901760
    %v2288 = vsub.f32 %v168, %v2287
    %v2289 = vand.u32 %v2288, 4294901760
    %v2290 = vsub.f32 %v2288, %v2289
    %v2291 = vand.u32 %v2290, 4294901760
    %2292 = vmatpush1.msra.mxu0 %v2291
    %2293 = vmatprep.subr.mxu0 0.0
    %2294 = vmatpush1.msra.mxu0 0.0
    %2295 = vmatprep.subr.mxu0 0.0
    %2296 = vmatpush1.msra.mxu0 0.0
    %2297 = vmatprep.subr.mxu0 0.0
    %2298 = vmatpush1.msra.mxu0 0.0
    %2299 = vmatprep.subr.mxu0 0.0
    %2300 = vmatpush1.msra.mxu0 0.0
    %2301 = vmatprep.subr.mxu0 0.0
    %2302 = vmatpush1.msra.mxu0 0.0
    %2303 = vmatprep.subr.mxu0 0.0
    %2304 = vmatpush1.msra.mxu0 0.0
    %2305 = vmatprep.subr.mxu0 0.0
    %2306 = vmatpush1.msra.mxu0 0.0
    %2307 = vmatprep.subr.mxu0 0.0
    %2308 = vmatpush1.msra.mxu0 0.0
    %2309 = vmatprep.subr.mxu0 0.0
    %2310 = vmatpush1.msra.mxu0 0.0
    %2311 = vmatprep.subr.mxu0 0.0
    %2312 = vmatpush1.msra.mxu0 0.0
    %2313 = vmatprep.subr.mxu0 0.0
    %2314 = vmatpush1.msra.mxu0 0.0
    %2315 = vmatprep.subr.mxu0 0.0
    %2316 = vmatpush1.msra.mxu0 0.0
    %2317 = vmatprep.subr.mxu0 0.0
    %2318 = vmatpush1.msra.mxu0 0.0
    %2319 = vmatprep.subr.mxu0 0.0
    %2320 = vmatpush1.msra.mxu0 0.0
    %2321 = vmatprep.subr.mxu0 0.0
    %2322 = vmatpush1.msra.mxu0 0.0
    %2323 = vmatprep.subr.mxu0 0.0
    %2324 = vmatpush1.msra.mxu0 0.0
    %2325 = vmatprep.subr.mxu0 0.0
    %2326 = vmatpush1.msra.mxu0 0.0
    %2327 = vmatprep.subr.mxu0 0.0
    %2328 = vmatpush1.msra.mxu0 0.0
    %2329 = vmatprep.subr.mxu0 0.0
    %2330 = vmatpush1.msra.mxu0 0.0
    %2331 = vmatprep.subr.mxu0 0.0
    %2332 = vmatpush1.msra.mxu0 0.0
    %2333 = vmatprep.subr.mxu0 0.0
    %2334 = vmatpush1.msra.mxu0 0.0
    %2335 = vmatprep.subr.mxu0 0.0
    %2336 = vmatpush1.msra.mxu0 0.0
    %2337 = vmatprep.subr.mxu0 0.0
    %2338 = vmatpush1.msra.mxu0 0.0
    %2339 = vmatprep.subr.mxu0 0.0
    %2340 = vmatpush1.msra.mxu0 0.0
    %2341 = vmatprep.mubr.f32.mxu0 0.0
    %v2342 = vand.u32 %v178, 4294901760
    %2343 = vmatmul.mubr.f32.gmra.mrb[0].mxu0 %v2342
    %v2344 = vpop.f32.mrb[0].mxu0
    %v2345 = vadd.f32 %v2214, %v2344
    %v2346 = vpop.f32.mrb[0].mxu0
    %2347 = vmatprep.mubr.f32.mxu0 0.0
    %v2348 = vand.u32 %v181, 4294901760
    %2349 = vmatmul.mubr.f32.gmra.mrb[0].mxu0 %v2348
    %v2350 = vpop.f32.mrb[0].mxu0
    %v2351 = vadd.f32 %v2224, %v2350
    %v2352 = vpop.f32.mrb[0].mxu0
    %2353 = vmatprep.mubr.f32.mxu0 0.0
    %v2354 = vand.u32 %v184, 4294901760
    %2355 = vmatmul.mubr.f32.gmra.mrb[0].mxu0 %v2354
    %v2356 = vpop.f32.mrb[0].mxu0
    %v2357 = vadd.f32 %v2234, %v2356
    %v2358 = vpop.f32.mrb[0].mxu0
    %2359 = vdwg.mxu0
    %2360 = vmatprep.subr.mxu0 0.0
    %v2361 = vand.u32 %v161, 4294901760
    %v2362 = vsub.f32 %v161, %v2361
    %2363 = vmatpush1.msra.mxu0 %v2362
    %2364 = vmatprep.subr.mxu0 0.0
    %v2365 = vand.u32 %v162, 4294901760
    %v2366 = vsub.f32 %v162, %v2365
    %2367 = vmatpush1.msra.mxu0 %v2366
    %2368 = vmatprep.subr.mxu0 0.0
    %v2369 = vand.u32 %v163, 4294901760
    %v2370 = vsub.f32 %v163, %v2369
    %2371 = vmatpush1.msra.mxu0 %v2370
    %2372 = vmatprep.subr.mxu0 0.0
    %v2373 = vand.u32 %v164, 4294901760
    %v2374 = vsub.f32 %v164, %v2373
    %2375 = vmatpush1.msra.mxu0 %v2374
    %2376 = vmatprep.subr.mxu0 0.0
    %v2377 = vand.u32 %v165, 4294901760
    %v2378 = vsub.f32 %v165, %v2377
    %2379 = vmatpush1.msra.mxu0 %v2378
    %2380 = vmatprep.subr.mxu0 0.0
    %v2381 = vand.u32 %v166, 4294901760
    %v2382 = vsub.f32 %v166, %v2381
    %2383 = vmatpush1.msra.mxu0 %v2382
    %2384 = vmatprep.subr.mxu0 0.0
    %v2385 = vand.u32 %v167, 4294901760
    %v2386 = vsub.f32 %v167, %v2385
    %2387 = vmatpush1.msra.mxu0 %v2386
    %2388 = vmatprep.subr.mxu0 0.0
    %v2389 = vand.u32 %v168, 4294901760
    %v2390 = vsub.f32 %v168, %v2389
    %2391 = vmatpush1.msra.mxu0 %v2390
    %2392 = vmatprep.subr.mxu0 0.0
    %2393 = vmatpush1.msra.mxu0 0.0
    %2394 = vmatprep.subr.mxu0 0.0
    %2395 = vmatpush1.msra.mxu0 0.0
    %2396 = vmatprep.subr.mxu0 0.0
    %2397 = vmatpush1.msra.mxu0 0.0
    %2398 = vmatprep.subr.mxu0 0.0
    %2399 = vmatpush1.msra.mxu0 0.0
    %2400 = vmatprep.subr.mxu0 0.0
    %2401 = vmatpush1.msra.mxu0 0.0
    %2402 = vmatprep.subr.mxu0 0.0
    %2403 = vmatpush1.msra.mxu0 0.0
    %2404 = vmatprep.subr.mxu0 0.0
    %2405 = vmatpush1.msra.mxu0 0.0
    %2406 = vmatprep.subr.mxu0 0.0
    %2407 = vmatpush1.msra.mxu0 0.0
    %2408 = vmatprep.subr.mxu0 0.0
    %2409 = vmatpush1.msra.mxu0 0.0
    %2410 = vmatprep.subr.mxu0 0.0
    %2411 = vmatpush1.msra.mxu0 0.0
    %2412 = vmatprep.subr.mxu0 0.0
    %2413 = vmatpush1.msra.mxu0 0.0
    %2414 = vmatprep.subr.mxu0 0.0
    %2415 = vmatpush1.msra.mxu0 0.0
    %2416 = vmatprep.subr.mxu0 0.0
    %2417 = vmatpush1.msra.mxu0 0.0
    %2418 = vmatprep.subr.mxu0 0.0
    %2419 = vmatpush1.msra.mxu0 0.0
    %2420 = vmatprep.subr.mxu0 0.0
    %2421 = vmatpush1.msra.mxu0 0.0
    %2422 = vmatprep.subr.mxu0 0.0
    %2423 = vmatpush1.msra.mxu0 0.0
    %2424 = vmatprep.subr.mxu0 0.0
    %2425 = vmatpush1.msra.mxu0 0.0
    %2426 = vmatprep.subr.mxu0 0.0
    %2427 = vmatpush1.msra.mxu0 0.0
    %2428 = vmatprep.subr.mxu0 0.0
    %2429 = vmatpush1.msra.mxu0 0.0
    %2430 = vmatprep.subr.mxu0 0.0
    %2431 = vmatpush1.msra.mxu0 0.0
    %2432 = vmatprep.subr.mxu0 0.0
    %2433 = vmatpush1.msra.mxu0 0.0
    %2434 = vmatprep.subr.mxu0 0.0
    %2435 = vmatpush1.msra.mxu0 0.0
    %2436 = vmatprep.subr.mxu0 0.0
    %2437 = vmatpush1.msra.mxu0 0.0
    %2438 = vmatprep.subr.mxu0 0.0
    %2439 = vmatpush1.msra.mxu0 0.0
    %2440 = vmatprep.mubr.f32.mxu0 0.0
    %v2441 = vand.u32 %v178, 4294901760
    %v2442 = vsub.f32 %v178, %v2441
    %2443 = vmatmul.mubr.f32.gmra.mrb[0].mxu0 %v2442
    %v2444 = vpop.f32.mrb[0].mxu0
    %v2445 = vadd.f32 %v2345, %v2444
    %v2446 = vpop.f32.mrb[0].mxu0
    %2447 = vmatprep.mubr.f32.mxu0 0.0
    %v2448 = vand.u32 %v181, 4294901760
    %v2449 = vsub.f32 %v181, %v2448
    %2450 = vmatmul.mubr.f32.gmra.mrb[0].mxu0 %v2449
    %v2451 = vpop.f32.mrb[0].mxu0
    %v2452 = vadd.f32 %v2351, %v2451
    %v2453 = vpop.f32.mrb[0].mxu0
    %2454 = vmatprep.mubr.f32.mxu0 0.0
    %v2455 = vand.u32 %v184, 4294901760
    %v2456 = vsub.f32 %v184, %v2455
    %2457 = vmatmul.mubr.f32.gmra.mrb[0].mxu0 %v2456
    %v2458 = vpop.f32.mrb[0].mxu0
    %v2459 = vadd.f32 %v2357, %v2458
    %v2460 = vpop.f32.mrb[0].mxu0
    %2461 = vdwg.mxu0
    %2462 = vmatprep.subr.mxu0 0.0
    %v2463 = vand.u32 %v161, 4294901760
    %2464 = vmatpush1.msra.mxu0 %v2463
    %2465 = vmatprep.subr.mxu0 0.0
    %v2466 = vand.u32 %v162, 4294901760
    %2467 = vmatpush1.msra.mxu0 %v2466
    %2468 = vmatprep.subr.mxu0 0.0
    %v2469 = vand.u32 %v163, 4294901760
    %2470 = vmatpush1.msra.mxu0 %v2469
    %2471 = vmatprep.subr.mxu0 0.0
    %v2472 = vand.u32 %v164, 4294901760
    %2473 = vmatpush1.msra.mxu0 %v2472
    %2474 = vmatprep.subr.mxu0 0.0
    %v2475 = vand.u32 %v165, 4294901760
    %2476 = vmatpush1.msra.mxu0 %v2475
    %2477 = vmatprep.subr.mxu0 0.0
    %v2478 = vand.u32 %v166, 4294901760
    %2479 = vmatpush1.msra.mxu0 %v2478
    %2480 = vmatprep.subr.mxu0 0.0
    %v2481 = vand.u32 %v167, 4294901760
    %2482 = vmatpush1.msra.mxu0 %v2481
    %2483 = vmatprep.subr.mxu0 0.0
    %v2484 = vand.u32 %v168, 4294901760
    %2485 = vmatpush1.msra.mxu0 %v2484
    %2486 = vmatprep.subr.mxu0 0.0
    %2487 = vmatpush1.msra.mxu0 0.0
    %2488 = vmatprep.subr.mxu0 0.0
    %2489 = vmatpush1.msra.mxu0 0.0
    %2490 = vmatprep.subr.mxu0 0.0
    %2491 = vmatpush1.msra.mxu0 0.0
    %2492 = vmatprep.subr.mxu0 0.0
    %2493 = vmatpush1.msra.mxu0 0.0
    %2494 = vmatprep.subr.mxu0 0.0
    %2495 = vmatpush1.msra.mxu0 0.0
    %2496 = vmatprep.subr.mxu0 0.0
    %2497 = vmatpush1.msra.mxu0 0.0
    %2498 = vmatprep.subr.mxu0 0.0
    %2499 = vmatpush1.msra.mxu0 0.0
    %2500 = vmatprep.subr.mxu0 0.0
    %2501 = vmatpush1.msra.mxu0 0.0
    %2502 = vmatprep.subr.mxu0 0.0
    %2503 = vmatpush1.msra.mxu0 0.0
    %2504 = vmatprep.subr.mxu0 0.0
    %2505 = vmatpush1.msra.mxu0 0.0
    %2506 = vmatprep.subr.mxu0 0.0
    %2507 = vmatpush1.msra.mxu0 0.0
    %2508 = vmatprep.subr.mxu0 0.0
    %2509 = vmatpush1.msra.mxu0 0.0
    %2510 = vmatprep.subr.mxu0 0.0
    %2511 = vmatpush1.msra.mxu0 0.0
    %2512 = vmatprep.subr.mxu0 0.0
    %2513 = vmatpush1.msra.mxu0 0.0
    %2514 = vmatprep.subr.mxu0 0.0
    %2515 = vmatpush1.msra.mxu0 0.0
    %2516 = vmatprep.subr.mxu0 0.0
    %2517 = vmatpush1.msra.mxu0 0.0
    %2518 = vmatprep.subr.mxu0 0.0
    %2519 = vmatpush1.msra.mxu0 0.0
    %2520 = vmatprep.subr.mxu0 0.0
    %2521 = vmatpush1.msra.mxu0 0.0
    %2522 = vmatprep.subr.mxu0 0.0
    %2523 = vmatpush1.msra.mxu0 0.0
    %2524 = vmatprep.subr.mxu0 0.0
    %2525 = vmatpush1.msra.mxu0 0.0
    %2526 = vmatprep.subr.mxu0 0.0
    %2527 = vmatpush1.msra.mxu0 0.0
    %2528 = vmatprep.subr.mxu0 0.0
    %2529 = vmatpush1.msra.mxu0 0.0
    %2530 = vmatprep.subr.mxu0 0.0
    %2531 = vmatpush1.msra.mxu0 0.0
    %2532 = vmatprep.subr.mxu0 0.0
    %2533 = vmatpush1.msra.mxu0 0.0
    %2534 = vmatprep.mubr.f32.mxu0 0.0
    %v2535 = vand.u32 %v178, 4294901760
    %v2536 = vsub.f32 %v178, %v2535
    %v2537 = vand.u32 %v2536, 4294901760
    %2538 = vmatmul.mubr.f32.gmra.mrb[0].mxu0 %v2537
    %v2539 = vpop.f32.mrb[0].mxu0
    %v2540 = vadd.f32 %v2445, %v2539
    %v2541 = vpop.f32.mrb[0].mxu0
    %2542 = vmatprep.mubr.f32.mxu0 0.0
    %v2543 = vand.u32 %v181, 4294901760
    %v2544 = vsub.f32 %v181, %v2543
    %v2545 = vand.u32 %v2544, 4294901760
    %2546 = vmatmul.mubr.f32.gmra.mrb[0].mxu0 %v2545
    %v2547 = vpop.f32.mrb[0].mxu0
    %v2548 = vadd.f32 %v2452, %v2547
    %v2549 = vpop.f32.mrb[0].mxu0
    %2550 = vmatprep.mubr.f32.mxu0 0.0
    %v2551 = vand.u32 %v184, 4294901760
    %v2552 = vsub.f32 %v184, %v2551
    %v2553 = vand.u32 %v2552, 4294901760
    %2554 = vmatmul.mubr.f32.gmra.mrb[0].mxu0 %v2553
    %v2555 = vpop.f32.mrb[0].mxu0
    %v2556 = vadd.f32 %v2459, %v2555
    %v2557 = vpop.f32.mrb[0].mxu0
    %2558 = vdwg.mxu0
    %2559 = vmatprep.subr.mxu0 0.0
    %v2560 = vand.u32 %v161, 4294901760
    %v2561 = vsub.f32 %v161, %v2560
    %v2562 = vand.u32 %v2561, 4294901760
    %2563 = vmatpush1.msra.mxu0 %v2562
    %2564 = vmatprep.subr.mxu0 0.0
    %v2565 = vand.u32 %v162, 4294901760
    %v2566 = vsub.f32 %v162, %v2565
    %v2567 = vand.u32 %v2566, 4294901760
    %2568 = vmatpush1.msra.mxu0 %v2567
    %2569 = vmatprep.subr.mxu0 0.0
    %v2570 = vand.u32 %v163, 4294901760
    %v2571 = vsub.f32 %v163, %v2570
    %v2572 = vand.u32 %v2571, 4294901760
    %2573 = vmatpush1.msra.mxu0 %v2572
    %2574 = vmatprep.subr.mxu0 0.0
    %v2575 = vand.u32 %v164, 4294901760
    %v2576 = vsub.f32 %v164, %v2575
    %v2577 = vand.u32 %v2576, 4294901760
    %2578 = vmatpush1.msra.mxu0 %v2577
    %2579 = vmatprep.subr.mxu0 0.0
    %v2580 = vand.u32 %v165, 4294901760
    %v2581 = vsub.f32 %v165, %v2580
    %v2582 = vand.u32 %v2581, 4294901760
    %2583 = vmatpush1.msra.mxu0 %v2582
    %2584 = vmatprep.subr.mxu0 0.0
    %v2585 = vand.u32 %v166, 4294901760
    %v2586 = vsub.f32 %v166, %v2585
    %v2587 = vand.u32 %v2586, 4294901760
    %2588 = vmatpush1.msra.mxu0 %v2587
    %2589 = vmatprep.subr.mxu0 0.0
    %v2590 = vand.u32 %v167, 4294901760
    %v2591 = vsub.f32 %v167, %v2590
    %v2592 = vand.u32 %v2591, 4294901760
    %2593 = vmatpush1.msra.mxu0 %v2592
    %2594 = vmatprep.subr.mxu0 0.0
    %v2595 = vand.u32 %v168, 4294901760
    %v2596 = vsub.f32 %v168, %v2595
    %v2597 = vand.u32 %v2596, 4294901760
    %2598 = vmatpush1.msra.mxu0 %v2597
    %2599 = vmatprep.subr.mxu0 0.0
    %2600 = vmatpush1.msra.mxu0 0.0
    %2601 = vmatprep.subr.mxu0 0.0
    %2602 = vmatpush1.msra.mxu0 0.0
    %2603 = vmatprep.subr.mxu0 0.0
    %2604 = vmatpush1.msra.mxu0 0.0
    %2605 = vmatprep.subr.mxu0 0.0
    %2606 = vmatpush1.msra.mxu0 0.0
    %2607 = vmatprep.subr.mxu0 0.0
    %2608 = vmatpush1.msra.mxu0 0.0
    %2609 = vmatprep.subr.mxu0 0.0
    %2610 = vmatpush1.msra.mxu0 0.0
    %2611 = vmatprep.subr.mxu0 0.0
    %2612 = vmatpush1.msra.mxu0 0.0
    %2613 = vmatprep.subr.mxu0 0.0
    %2614 = vmatpush1.msra.mxu0 0.0
    %2615 = vmatprep.subr.mxu0 0.0
    %2616 = vmatpush1.msra.mxu0 0.0
    %2617 = vmatprep.subr.mxu0 0.0
    %2618 = vmatpush1.msra.mxu0 0.0
    %2619 = vmatprep.subr.mxu0 0.0
    %2620 = vmatpush1.msra.mxu0 0.0
    %2621 = vmatprep.subr.mxu0 0.0
    %2622 = vmatpush1.msra.mxu0 0.0
    %2623 = vmatprep.subr.mxu0 0.0
    %2624 = vmatpush1.msra.mxu0 0.0
    %2625 = vmatprep.subr.mxu0 0.0
    %2626 = vmatpush1.msra.mxu0 0.0
    %2627 = vmatprep.subr.mxu0 0.0
    %2628 = vmatpush1.msra.mxu0 0.0
    %2629 = vmatprep.subr.mxu0 0.0
    %2630 = vmatpush1.msra.mxu0 0.0
    %2631 = vmatprep.subr.mxu0 0.0
    %2632 = vmatpush1.msra.mxu0 0.0
    %2633 = vmatprep.subr.mxu0 0.0
    %2634 = vmatpush1.msra.mxu0 0.0
    %2635 = vmatprep.subr.mxu0 0.0
    %2636 = vmatpush1.msra.mxu0 0.0
    %2637 = vmatprep.subr.mxu0 0.0
    %2638 = vmatpush1.msra.mxu0 0.0
    %2639 = vmatprep.subr.mxu0 0.0
    %2640 = vmatpush1.msra.mxu0 0.0
    %2641 = vmatprep.subr.mxu0 0.0
    %2642 = vmatpush1.msra.mxu0 0.0
    %2643 = vmatprep.subr.mxu0 0.0
    %2644 = vmatpush1.msra.mxu0 0.0
    %2645 = vmatprep.subr.mxu0 0.0
    %2646 = vmatpush1.msra.mxu0 0.0
    %2647 = vmatprep.mubr.f32.mxu0 0.0
    %v2648 = vand.u32 %v178, 4294901760
    %2649 = vmatmul.mubr.f32.gmra.mrb[0].mxu0 %v2648
    %v2650 = vpop.f32.mrb[0].mxu0
    %v2651 = vadd.f32 %v2540, %v2650
    %v2652 = vpop.f32.mrb[0].mxu0
    %2653 = vmatprep.mubr.f32.mxu0 0.0
    %v2654 = vand.u32 %v181, 4294901760
    %2655 = vmatmul.mubr.f32.gmra.mrb[0].mxu0 %v2654
    %v2656 = vpop.f32.mrb[0].mxu0
    %v2657 = vadd.f32 %v2548, %v2656
    %v2658 = vpop.f32.mrb[0].mxu0
    %2659 = vmatprep.mubr.f32.mxu0 0.0
    %v2660 = vand.u32 %v184, 4294901760
    %2661 = vmatmul.mubr.f32.gmra.mrb[0].mxu0 %v2660
    %v2662 = vpop.f32.mrb[0].mxu0
    %v2663 = vadd.f32 %v2556, %v2662
    %v2664 = vpop.f32.mrb[0].mxu0
    %2665 = vdwg.mxu0
    %2666 = vmatprep.subr.mxu0 0.0
    %v2667 = vand.u32 %v161, 4294901760
    %2668 = vmatpush1.msra.mxu0 %v2667
    %2669 = vmatprep.subr.mxu0 0.0
    %v2670 = vand.u32 %v162, 4294901760
    %2671 = vmatpush1.msra.mxu0 %v2670
    %2672 = vmatprep.subr.mxu0 0.0
    %v2673 = vand.u32 %v163, 4294901760
    %2674 = vmatpush1.msra.mxu0 %v2673
    %2675 = vmatprep.subr.mxu0 0.0
    %v2676 = vand.u32 %v164, 4294901760
    %2677 = vmatpush1.msra.mxu0 %v2676
    %2678 = vmatprep.subr.mxu0 0.0
    %v2679 = vand.u32 %v165, 4294901760
    %2680 = vmatpush1.msra.mxu0 %v2679
    %2681 = vmatprep.subr.mxu0 0.0
    %v2682 = vand.u32 %v166, 4294901760
    %2683 = vmatpush1.msra.mxu0 %v2682
    %2684 = vmatprep.subr.mxu0 0.0
    %v2685 = vand.u32 %v167, 4294901760
    %2686 = vmatpush1.msra.mxu0 %v2685
    %2687 = vmatprep.subr.mxu0 0.0
    %v2688 = vand.u32 %v168, 4294901760
    %2689 = vmatpush1.msra.mxu0 %v2688
    %2690 = vmatprep.subr.mxu0 0.0
    %2691 = vmatpush1.msra.mxu0 0.0
    %2692 = vmatprep.subr.mxu0 0.0
    %2693 = vmatpush1.msra.mxu0 0.0
    %2694 = vmatprep.subr.mxu0 0.0
    %2695 = vmatpush1.msra.mxu0 0.0
    %2696 = vmatprep.subr.mxu0 0.0
    %2697 = vmatpush1.msra.mxu0 0.0
    %2698 = vmatprep.subr.mxu0 0.0
    %2699 = vmatpush1.msra.mxu0 0.0
    %2700 = vmatprep.subr.mxu0 0.0
    %2701 = vmatpush1.msra.mxu0 0.0
    %2702 = vmatprep.subr.mxu0 0.0
    %2703 = vmatpush1.msra.mxu0 0.0
    %2704 = vmatprep.subr.mxu0 0.0
    %2705 = vmatpush1.msra.mxu0 0.0
    %2706 = vmatprep.subr.mxu0 0.0
    %2707 = vmatpush1.msra.mxu0 0.0
    %2708 = vmatprep.subr.mxu0 0.0
    %2709 = vmatpush1.msra.mxu0 0.0
    %2710 = vmatprep.subr.mxu0 0.0
    %2711 = vmatpush1.msra.mxu0 0.0
    %2712 = vmatprep.subr.mxu0 0.0
    %2713 = vmatpush1.msra.mxu0 0.0
    %2714 = vmatprep.subr.mxu0 0.0
    %2715 = vmatpush1.msra.mxu0 0.0
    %2716 = vmatprep.subr.mxu0 0.0
    %2717 = vmatpush1.msra.mxu0 0.0
    %2718 = vmatprep.subr.mxu0 0.0
    %2719 = vmatpush1.msra.mxu0 0.0
    %2720 = vmatprep.subr.mxu0 0.0
    %2721 = vmatpush1.msra.mxu0 0.0
    %2722 = vmatprep.subr.mxu0 0.0
    %2723 = vmatpush1.msra.mxu0 0.0
    %2724 = vmatprep.subr.mxu0 0.0
    %2725 = vmatpush1.msra.mxu0 0.0
    %2726 = vmatprep.subr.mxu0 0.0
    %2727 = vmatpush1.msra.mxu0 0.0
    %2728 = vmatprep.subr.mxu0 0.0
    %2729 = vmatpush1.msra.mxu0 0.0
    %2730 = vmatprep.subr.mxu0 0.0
    %2731 = vmatpush1.msra.mxu0 0.0
    %2732 = vmatprep.subr.mxu0 0.0
    %2733 = vmatpush1.msra.mxu0 0.0
    %2734 = vmatprep.subr.mxu0 0.0
    %2735 = vmatpush1.msra.mxu0 0.0
    %2736 = vmatprep.subr.mxu0 0.0
    %2737 = vmatpush1.msra.mxu0 0.0
    %2738 = vmatprep.mubr.f32.mxu0 0.0
    %v2739 = vand.u32 %v178, 4294901760
    %2740 = vmatmul.mubr.f32.gmra.mrb[0].mxu0 %v2739
    %v2741 = vpop.f32.mrb[0].mxu0
    %v2742 = vadd.f32 %v2651, %v2741
    %v2743 = vpop.f32.mrb[0].mxu0
    %2744 = vmatprep.mubr.f32.mxu0 0.0
    %v2745 = vand.u32 %v181, 4294901760
    %2746 = vmatmul.mubr.f32.gmra.mrb[0].mxu0 %v2745
    %v2747 = vpop.f32.mrb[0].mxu0
    %v2748 = vadd.f32 %v2657, %v2747
    %v2749 = vpop.f32.mrb[0].mxu0
    %2750 = vmatprep.mubr.f32.mxu0 0.0
    %v2751 = vand.u32 %v184, 4294901760
    %2752 = vmatmul.mubr.f32.gmra.mrb[0].mxu0 %v2751
    %v2753 = vpop.f32.mrb[0].mxu0
    %v2754 = vadd.f32 %v2663, %v2753
    %v2755 = vpop.f32.mrb[0].mxu0
    %2756 = vdwg.mxu0
    %v2757 = vmax.f32 %v2742, 0.0
    %v2758 = vmax.f32 %v2748, 0.0
    %v2759 = vmax.f32 %v2754, 0.0
    %v2760 = vld [vmem:[#allocation7] sm:$0xff]
    %v2761 = vld [vmem:[#allocation7 + $0x8] sm:$0xff]
    %v2762 = vld [vmem:[#allocation7 + $0x10] sm:$0xff]
    %v2763 = vld [vmem:[#allocation7 + $0x18] sm:$0xff]
    %v2764 = vld [vmem:[#allocation7 + $0x20] sm:$0xff]
    %v2765 = vld [vmem:[#allocation7 + $0x28] sm:$0xff]
    %v2766 = vld [vmem:[#allocation7 + $0x30] sm:$0xff]
    %v2767 = vld [vmem:[#allocation7 + $0x38] sm:$0xff]
    %v2768 = vld [vmem:[#allocation7 + $0x40] sm:$0xff]
    %v2769 = vld [vmem:[#allocation7 + $0x48] sm:$0xff]
    %v2770 = vld [vmem:[#allocation7 + $0x50] sm:$0xff]
    %v2771 = vld [vmem:[#allocation7 + $0x58] sm:$0xff]
    %v2772 = vld [vmem:[#allocation7 + $0x60] sm:$0xff]
    %v2773 = vld [vmem:[#allocation7 + $0x68] sm:$0xff]
    %v2774 = vld [vmem:[#allocation7 + $0x70] sm:$0xff]
    %v2775 = vld [vmem:[#allocation7 + $0x78] sm:$0xff]
    %v2776 = vld [vmem:[%s4] sm:$0x1]
    %v2778 = vlaneseq
    %v2779 = vshrl.u32 %v2778, 7
    %v2780 = vsub.s32 0, %v2779
    %v2781 = vrot.slane %v2776, %v2780
    %2783 = vmatprep.subr.mxu0 0.0
    %v2784 = vand.u32 %v2760, 4294901760
    %2785 = vmatpush1.msra.mxu0 %v2784
    %2786 = vmatprep.subr.mxu0 0.0
    %v2787 = vand.u32 %v2761, 4294901760
    %2788 = vmatpush1.msra.mxu0 %v2787
    %2789 = vmatprep.subr.mxu0 0.0
    %v2790 = vand.u32 %v2762, 4294901760
    %2791 = vmatpush1.msra.mxu0 %v2790
    %2792 = vmatprep.subr.mxu0 0.0
    %v2793 = vand.u32 %v2763, 4294901760
    %2794 = vmatpush1.msra.mxu0 %v2793
    %2795 = vmatprep.subr.mxu0 0.0
    %v2796 = vand.u32 %v2764, 4294901760
    %2797 = vmatpush1.msra.mxu0 %v2796
    %2798 = vmatprep.subr.mxu0 0.0
    %v2799 = vand.u32 %v2765, 4294901760
    %2800 = vmatpush1.msra.mxu0 %v2799
    %2801 = vmatprep.subr.mxu0 0.0
    %v2802 = vand.u32 %v2766, 4294901760
    %2803 = vmatpush1.msra.mxu0 %v2802
    %2804 = vmatprep.subr.mxu0 0.0
    %v2805 = vand.u32 %v2767, 4294901760
    %2806 = vmatpush1.msra.mxu0 %v2805
    %2807 = vmatprep.subr.mxu0 0.0
    %v2808 = vand.u32 %v2768, 4294901760
    %2809 = vmatpush1.msra.mxu0 %v2808
    %2810 = vmatprep.subr.mxu0 0.0
    %v2811 = vand.u32 %v2769, 4294901760
    %2812 = vmatpush1.msra.mxu0 %v2811
    %2813 = vmatprep.subr.mxu0 0.0
    %v2814 = vand.u32 %v2770, 4294901760
    %2815 = vmatpush1.msra.mxu0 %v2814
    %2816 = vmatprep.subr.mxu0 0.0
    %v2817 = vand.u32 %v2771, 4294901760
    %2818 = vmatpush1.msra.mxu0 %v2817
    %2819 = vmatprep.subr.mxu0 0.0
    %v2820 = vand.u32 %v2772, 4294901760
    %2821 = vmatpush1.msra.mxu0 %v2820
    %2822 = vmatprep.subr.mxu0 0.0
    %v2823 = vand.u32 %v2773, 4294901760
    %2824 = vmatpush1.msra.mxu0 %v2823
    %2825 = vmatprep.subr.mxu0 0.0
    %v2826 = vand.u32 %v2774, 4294901760
    %2827 = vmatpush1.msra.mxu0 %v2826
    %2828 = vmatprep.subr.mxu0 0.0
    %v2829 = vand.u32 %v2775, 4294901760
    %2830 = vmatpush1.msra.mxu0 %v2829
    %2831 = vmatprep.subr.mxu0 0.0
    %2832 = vmatpush1.msra.mxu0 0.0
    %2833 = vmatprep.subr.mxu0 0.0
    %2834 = vmatpush1.msra.mxu0 0.0
    %2835 = vmatprep.subr.mxu0 0.0
    %2836 = vmatpush1.msra.mxu0 0.0
    %2837 = vmatprep.subr.mxu0 0.0
    %2838 = vmatpush1.msra.mxu0 0.0
    %2839 = vmatprep.subr.mxu0 0.0
    %2840 = vmatpush1.msra.mxu0 0.0
    %2841 = vmatprep.subr.mxu0 0.0
    %2842 = vmatpush1.msra.mxu0 0.0
    %2843 = vmatprep.subr.mxu0 0.0
    %2844 = vmatpush1.msra.mxu0 0.0
    %2845 = vmatprep.subr.mxu0 0.0
    %2846 = vmatpush1.msra.mxu0 0.0
    %2847 = vmatprep.subr.mxu0 0.0
    %2848 = vmatpush1.msra.mxu0 0.0
    %2849 = vmatprep.subr.mxu0 0.0
    %2850 = vmatpush1.msra.mxu0 0.0
    %2851 = vmatprep.subr.mxu0 0.0
    %2852 = vmatpush1.msra.mxu0 0.0
    %2853 = vmatprep.subr.mxu0 0.0
    %2854 = vmatpush1.msra.mxu0 0.0
    %2855 = vmatprep.subr.mxu0 0.0
    %2856 = vmatpush1.msra.mxu0 0.0
    %2857 = vmatprep.subr.mxu0 0.0
    %2858 = vmatpush1.msra.mxu0 0.0
    %2859 = vmatprep.subr.mxu0 0.0
    %2860 = vmatpush1.msra.mxu0 0.0
    %2861 = vmatprep.subr.mxu0 0.0
    %2862 = vmatpush1.msra.mxu0 0.0
    %2863 = vmatprep.mubr.f32.mxu0 0.0
    %v2864 = vand.u32 %v2757, 4294901760
    %v2865 = vsub.f32 %v2757, %v2864
    %v2866 = vand.u32 %v2865, 4294901760
    %v2867 = vsub.f32 %v2865, %v2866
    %v2868 = vand.u32 %v2867, 4294901760
    %2869 = vmatmul.mubr.f32.gmra.mrb[0].mxu0 %v2868
    %v2870 = vpop.f32.mrb[0].mxu0
    %v2871 = vadd.f32 %v2781, %v2870
    %v2872 = vpop.f32.mrb[0].mxu0
    %2873 = vmatprep.mubr.f32.mxu0 0.0
    %v2874 = vand.u32 %v2758, 4294901760
    %v2875 = vsub.f32 %v2758, %v2874
    %v2876 = vand.u32 %v2875, 4294901760
    %v2877 = vsub.f32 %v2875, %v2876
    %v2878 = vand.u32 %v2877, 4294901760
    %2879 = vmatmul.mubr.f32.gmra.mrb[0].mxu0 %v2878
    %v2880 = vpop.f32.mrb[0].mxu0
    %v2881 = vadd.f32 %v2781, %v2880
    %v2882 = vpop.f32.mrb[0].mxu0
    %2883 = vmatprep.mubr.f32.mxu0 0.0
    %v2884 = vand.u32 %v2759, 4294901760
    %v2885 = vsub.f32 %v2759, %v2884
    %v2886 = vand.u32 %v2885, 4294901760
    %v2887 = vsub.f32 %v2885, %v2886
    %v2888 = vand.u32 %v2887, 4294901760
    %2889 = vmatmul.mubr.f32.gmra.mrb[0].mxu0 %v2888
    %v2890 = vpop.f32.mrb[0].mxu0
    %v2891 = vadd.f32 %v2781, %v2890
    %v2892 = vpop.f32.mrb[0].mxu0
    %2893 = vdwg.mxu0
    %2894 = vmatprep.subr.mxu0 0.0
    %v2895 = vand.u32 %v2760, 4294901760
    %v2896 = vsub.f32 %v2760, %v2895
    %v2897 = vand.u32 %v2896, 4294901760
    %v2898 = vsub.f32 %v2896, %v2897
    %v2899 = vand.u32 %v2898, 4294901760
    %2900 = vmatpush1.msra.mxu0 %v2899
    %2901 = vmatprep.subr.mxu0 0.0
    %v2902 = vand.u32 %v2761, 4294901760
    %v2903 = vsub.f32 %v2761, %v2902
    %v2904 = vand.u32 %v2903, 4294901760
    %v2905 = vsub.f32 %v2903, %v2904
    %v2906 = vand.u32 %v2905, 4294901760
    %2907 = vmatpush1.msra.mxu0 %v2906
    %2908 = vmatprep.subr.mxu0 0.0
    %v2909 = vand.u32 %v2762, 4294901760
    %v2910 = vsub.f32 %v2762, %v2909
    %v2911 = vand.u32 %v2910, 4294901760
    %v2912 = vsub.f32 %v2910, %v2911
    %v2913 = vand.u32 %v2912, 4294901760
    %2914 = vmatpush1.msra.mxu0 %v2913
    %2915 = vmatprep.subr.mxu0 0.0
    %v2916 = vand.u32 %v2763, 4294901760
    %v2917 = vsub.f32 %v2763, %v2916
    %v2918 = vand.u32 %v2917, 4294901760
    %v2919 = vsub.f32 %v2917, %v2918
    %v2920 = vand.u32 %v2919, 4294901760
    %2921 = vmatpush1.msra.mxu0 %v2920
    %2922 = vmatprep.subr.mxu0 0.0
    %v2923 = vand.u32 %v2764, 4294901760
    %v2924 = vsub.f32 %v2764, %v2923
    %v2925 = vand.u32 %v2924, 4294901760
    %v2926 = vsub.f32 %v2924, %v2925
    %v2927 = vand.u32 %v2926, 4294901760
    %2928 = vmatpush1.msra.mxu0 %v2927
    %2929 = vmatprep.subr.mxu0 0.0
    %v2930 = vand.u32 %v2765, 4294901760
    %v2931 = vsub.f32 %v2765, %v2930
    %v2932 = vand.u32 %v2931, 4294901760
    %v2933 = vsub.f32 %v2931, %v2932
    %v2934 = vand.u32 %v2933, 4294901760
    %2935 = vmatpush1.msra.mxu0 %v2934
    %2936 = vmatprep.subr.mxu0 0.0
    %v2937 = vand.u32 %v2766, 4294901760
    %v2938 = vsub.f32 %v2766, %v2937
    %v2939 = vand.u32 %v2938, 4294901760
    %v2940 = vsub.f32 %v2938, %v2939
    %v2941 = vand.u32 %v2940, 4294901760
    %2942 = vmatpush1.msra.mxu0 %v2941
    %2943 = vmatprep.subr.mxu0 0.0
    %v2944 = vand.u32 %v2767, 4294901760
    %v2945 = vsub.f32 %v2767, %v2944
    %v2946 = vand.u32 %v2945, 4294901760
    %v2947 = vsub.f32 %v2945, %v2946
    %v2948 = vand.u32 %v2947, 4294901760
    %2949 = vmatpush1.msra.mxu0 %v2948
    %2950 = vmatprep.subr.mxu0 0.0
    %v2951 = vand.u32 %v2768, 4294901760
    %v2952 = vsub.f32 %v2768, %v2951
    %v2953 = vand.u32 %v2952, 4294901760
    %v2954 = vsub.f32 %v2952, %v2953
    %v2955 = vand.u32 %v2954, 4294901760
    %2956 = vmatpush1.msra.mxu0 %v2955
    %2957 = vmatprep.subr.mxu0 0.0
    %v2958 = vand.u32 %v2769, 4294901760
    %v2959 = vsub.f32 %v2769, %v2958
    %v2960 = vand.u32 %v2959, 4294901760
    %v2961 = vsub.f32 %v2959, %v2960
    %v2962 = vand.u32 %v2961, 4294901760
    %2963 = vmatpush1.msra.mxu0 %v2962
    %2964 = vmatprep.subr.mxu0 0.0
    %v2965 = vand.u32 %v2770, 4294901760
    %v2966 = vsub.f32 %v2770, %v2965
    %v2967 = vand.u32 %v2966, 4294901760
    %v2968 = vsub.f32 %v2966, %v2967
    %v2969 = vand.u32 %v2968, 4294901760
    %2970 = vmatpush1.msra.mxu0 %v2969
    %2971 = vmatprep.subr.mxu0 0.0
    %v2972 = vand.u32 %v2771, 4294901760
    %v2973 = vsub.f32 %v2771, %v2972
    %v2974 = vand.u32 %v2973, 4294901760
    %v2975 = vsub.f32 %v2973, %v2974
    %v2976 = vand.u32 %v2975, 4294901760
    %2977 = vmatpush1.msra.mxu0 %v2976
    %2978 = vmatprep.subr.mxu0 0.0
    %v2979 = vand.u32 %v2772, 4294901760
    %v2980 = vsub.f32 %v2772, %v2979
    %v2981 = vand.u32 %v2980, 4294901760
    %v2982 = vsub.f32 %v2980, %v2981
    %v2983 = vand.u32 %v2982, 4294901760
    %2984 = vmatpush1.msra.mxu0 %v2983
    %2985 = vmatprep.subr.mxu0 0.0
    %v2986 = vand.u32 %v2773, 4294901760
    %v2987 = vsub.f32 %v2773, %v2986
    %v2988 = vand.u32 %v2987, 4294901760
    %v2989 = vsub.f32 %v2987, %v2988
    %v2990 = vand.u32 %v2989, 4294901760
    %2991 = vmatpush1.msra.mxu0 %v2990
    %2992 = vmatprep.subr.mxu0 0.0
    %v2993 = vand.u32 %v2774, 4294901760
    %v2994 = vsub.f32 %v2774, %v2993
    %v2995 = vand.u32 %v2994, 4294901760
    %v2996 = vsub.f32 %v2994, %v2995
    %v2997 = vand.u32 %v2996, 4294901760
    %2998 = vmatpush1.msra.mxu0 %v2997
    %2999 = vmatprep.subr.mxu0 0.0
    %v3000 = vand.u32 %v2775, 4294901760
    %v3001 = vsub.f32 %v2775, %v3000
    %v3002 = vand.u32 %v3001, 4294901760
    %v3003 = vsub.f32 %v3001, %v3002
    %v3004 = vand.u32 %v3003, 4294901760
    %3005 = vmatpush1.msra.mxu0 %v3004
    %3006 = vmatprep.subr.mxu0 0.0
    %3007 = vmatpush1.msra.mxu0 0.0
    %3008 = vmatprep.subr.mxu0 0.0
    %3009 = vmatpush1.msra.mxu0 0.0
    %3010 = vmatprep.subr.mxu0 0.0
    %3011 = vmatpush1.msra.mxu0 0.0
    %3012 = vmatprep.subr.mxu0 0.0
    %3013 = vmatpush1.msra.mxu0 0.0
    %3014 = vmatprep.subr.mxu0 0.0
    %3015 = vmatpush1.msra.mxu0 0.0
    %3016 = vmatprep.subr.mxu0 0.0
    %3017 = vmatpush1.msra.mxu0 0.0
    %3018 = vmatprep.subr.mxu0 0.0
    %3019 = vmatpush1.msra.mxu0 0.0
    %3020 = vmatprep.subr.mxu0 0.0
    %3021 = vmatpush1.msra.mxu0 0.0
    %3022 = vmatprep.subr.mxu0 0.0
    %3023 = vmatpush1.msra.mxu0 0.0
    %3024 = vmatprep.subr.mxu0 0.0
    %3025 = vmatpush1.msra.mxu0 0.0
    %3026 = vmatprep.subr.mxu0 0.0
    %3027 = vmatpush1.msra.mxu0 0.0
    %3028 = vmatprep.subr.mxu0 0.0
    %3029 = vmatpush1.msra.mxu0 0.0
    %3030 = vmatprep.subr.mxu0 0.0
    %3031 = vmatpush1.msra.mxu0 0.0
    %3032 = vmatprep.subr.mxu0 0.0
    %3033 = vmatpush1.msra.mxu0 0.0
    %3034 = vmatprep.subr.mxu0 0.0
    %3035 = vmatpush1.msra.mxu0 0.0
    %3036 = vmatprep.subr.mxu0 0.0
    %3037 = vmatpush1.msra.mxu0 0.0
    %3038 = vmatprep.mubr.f32.mxu0 0.0
    %v3039 = vand.u32 %v2757, 4294901760
    %3040 = vmatmul.mubr.f32.gmra.mrb[0].mxu0 %v3039
    %v3041 = vpop.f32.mrb[0].mxu0
    %v3042 = vadd.f32 %v2871, %v3041
    %v3043 = vpop.f32.mrb[0].mxu0
    %3044 = vmatprep.mubr.f32.mxu0 0.0
    %v3045 = vand.u32 %v2758, 4294901760
    %3046 = vmatmul.mubr.f32.gmra.mrb[0].mxu0 %v3045
    %v3047 = vpop.f32.mrb[0].mxu0
    %v3048 = vadd.f32 %v2881, %v3047
    %v3049 = vpop.f32.mrb[0].mxu0
    %3050 = vmatprep.mubr.f32.mxu0 0.0
    %v3051 = vand.u32 %v2759, 4294901760
    %3052 = vmatmul.mubr.f32.gmra.mrb[0].mxu0 %v3051
    %v3053 = vpop.f32.mrb[0].mxu0
    %v3054 = vadd.f32 %v2891, %v3053
    %v3055 = vpop.f32.mrb[0].mxu0
    %3056 = vdwg.mxu0
    %3057 = vmatprep.subr.mxu0 0.0
    %v3058 = vand.u32 %v2760, 4294901760
    %v3059 = vsub.f32 %v2760, %v3058
    %3060 = vmatpush1.msra.mxu0 %v3059
    %3061 = vmatprep.subr.mxu0 0.0
    %v3062 = vand.u32 %v2761, 4294901760
    %v3063 = vsub.f32 %v2761, %v3062
    %3064 = vmatpush1.msra.mxu0 %v3063
    %3065 = vmatprep.subr.mxu0 0.0
    %v3066 = vand.u32 %v2762, 4294901760
    %v3067 = vsub.f32 %v2762, %v3066
    %3068 = vmatpush1.msra.mxu0 %v3067
    %3069 = vmatprep.subr.mxu0 0.0
    %v3070 = vand.u32 %v2763, 4294901760
    %v3071 = vsub.f32 %v2763, %v3070
    %3072 = vmatpush1.msra.mxu0 %v3071
    %3073 = vmatprep.subr.mxu0 0.0
    %v3074 = vand.u32 %v2764, 4294901760
    %v3075 = vsub.f32 %v2764, %v3074
    %3076 = vmatpush1.msra.mxu0 %v3075
    %3077 = vmatprep.subr.mxu0 0.0
    %v3078 = vand.u32 %v2765, 4294901760
    %v3079 = vsub.f32 %v2765, %v3078
    %3080 = vmatpush1.msra.mxu0 %v3079
    %3081 = vmatprep.subr.mxu0 0.0
    %v3082 = vand.u32 %v2766, 4294901760
    %v3083 = vsub.f32 %v2766, %v3082
    %3084 = vmatpush1.msra.mxu0 %v3083
    %3085 = vmatprep.subr.mxu0 0.0
    %v3086 = vand.u32 %v2767, 4294901760
    %v3087 = vsub.f32 %v2767, %v3086
    %3088 = vmatpush1.msra.mxu0 %v3087
    %3089 = vmatprep.subr.mxu0 0.0
    %v3090 = vand.u32 %v2768, 4294901760
    %v3091 = vsub.f32 %v2768, %v3090
    %3092 = vmatpush1.msra.mxu0 %v3091
    %3093 = vmatprep.subr.mxu0 0.0
    %v3094 = vand.u32 %v2769, 4294901760
    %v3095 = vsub.f32 %v2769, %v3094
    %3096 = vmatpush1.msra.mxu0 %v3095
    %3097 = vmatprep.subr.mxu0 0.0
    %v3098 = vand.u32 %v2770, 4294901760
    %v3099 = vsub.f32 %v2770, %v3098
    %3100 = vmatpush1.msra.mxu0 %v3099
    %3101 = vmatprep.subr.mxu0 0.0
    %v3102 = vand.u32 %v2771, 4294901760
    %v3103 = vsub.f32 %v2771, %v3102
    %3104 = vmatpush1.msra.mxu0 %v3103
    %3105 = vmatprep.subr.mxu0 0.0
    %v3106 = vand.u32 %v2772, 4294901760
    %v3107 = vsub.f32 %v2772, %v3106
    %3108 = vmatpush1.msra.mxu0 %v3107
    %3109 = vmatprep.subr.mxu0 0.0
    %v3110 = vand.u32 %v2773, 4294901760
    %v3111 = vsub.f32 %v2773, %v3110
    %3112 = vmatpush1.msra.mxu0 %v3111
    %3113 = vmatprep.subr.mxu0 0.0
    %v3114 = vand.u32 %v2774, 4294901760
    %v3115 = vsub.f32 %v2774, %v3114
    %3116 = vmatpush1.msra.mxu0 %v3115
    %3117 = vmatprep.subr.mxu0 0.0
    %v3118 = vand.u32 %v2775, 4294901760
    %v3119 = vsub.f32 %v2775, %v3118
    %3120 = vmatpush1.msra.mxu0 %v3119
    %3121 = vmatprep.subr.mxu0 0.0
    %3122 = vmatpush1.msra.mxu0 0.0
    %3123 = vmatprep.subr.mxu0 0.0
    %3124 = vmatpush1.msra.mxu0 0.0
    %3125 = vmatprep.subr.mxu0 0.0
    %3126 = vmatpush1.msra.mxu0 0.0
    %3127 = vmatprep.subr.mxu0 0.0
    %3128 = vmatpush1.msra.mxu0 0.0
    %3129 = vmatprep.subr.mxu0 0.0
    %3130 = vmatpush1.msra.mxu0 0.0
    %3131 = vmatprep.subr.mxu0 0.0
    %3132 = vmatpush1.msra.mxu0 0.0
    %3133 = vmatprep.subr.mxu0 0.0
    %3134 = vmatpush1.msra.mxu0 0.0
    %3135 = vmatprep.subr.mxu0 0.0
    %3136 = vmatpush1.msra.mxu0 0.0
    %3137 = vmatprep.subr.mxu0 0.0
    %3138 = vmatpush1.msra.mxu0 0.0
    %3139 = vmatprep.subr.mxu0 0.0
    %3140 = vmatpush1.msra.mxu0 0.0
    %3141 = vmatprep.subr.mxu0 0.0
    %3142 = vmatpush1.msra.mxu0 0.0
    %3143 = vmatprep.subr.mxu0 0.0
    %3144 = vmatpush1.msra.mxu0 0.0
    %3145 = vmatprep.subr.mxu0 0.0
    %3146 = vmatpush1.msra.mxu0 0.0
    %3147 = vmatprep.subr.mxu0 0.0
    %3148 = vmatpush1.msra.mxu0 0.0
    %3149 = vmatprep.subr.mxu0 0.0
    %3150 = vmatpush1.msra.mxu0 0.0
    %3151 = vmatprep.subr.mxu0 0.0
    %3152 = vmatpush1.msra.mxu0 0.0
    %3153 = vmatprep.mubr.f32.mxu0 0.0
    %v3154 = vand.u32 %v2757, 4294901760
    %v3155 = vsub.f32 %v2757, %v3154
    %3156 = vmatmul.mubr.f32.gmra.mrb[0].mxu0 %v3155
    %v3157 = vpop.f32.mrb[0].mxu0
    %v3158 = vadd.f32 %v3042, %v3157
    %v3159 = vpop.f32.mrb[0].mxu0
    %3160 = vmatprep.mubr.f32.mxu0 0.0
    %v3161 = vand.u32 %v2758, 4294901760
    %v3162 = vsub.f32 %v2758, %v3161
    %3163 = vmatmul.mubr.f32.gmra.mrb[0].mxu0 %v3162
    %v3164 = vpop.f32.mrb[0].mxu0
    %v3165 = vadd.f32 %v3048, %v3164
    %v3166 = vpop.f32.mrb[0].mxu0
    %3167 = vmatprep.mubr.f32.mxu0 0.0
    %v3168 = vand.u32 %v2759, 4294901760
    %v3169 = vsub.f32 %v2759, %v3168
    %3170 = vmatmul.mubr.f32.gmra.mrb[0].mxu0 %v3169
    %v3171 = vpop.f32.mrb[0].mxu0
    %v3172 = vadd.f32 %v3054, %v3171
    %v3173 = vpop.f32.mrb[0].mxu0
    %3174 = vdwg.mxu0
    %3175 = vmatprep.subr.mxu0 0.0
    %v3176 = vand.u32 %v2760, 4294901760
    %3177 = vmatpush1.msra.mxu0 %v3176
    %3178 = vmatprep.subr.mxu0 0.0
    %v3179 = vand.u32 %v2761, 4294901760
    %3180 = vmatpush1.msra.mxu0 %v3179
    %3181 = vmatprep.subr.mxu0 0.0
    %v3182 = vand.u32 %v2762, 4294901760
    %3183 = vmatpush1.msra.mxu0 %v3182
    %3184 = vmatprep.subr.mxu0 0.0
    %v3185 = vand.u32 %v2763, 4294901760
    %3186 = vmatpush1.msra.mxu0 %v3185
    %3187 = vmatprep.subr.mxu0 0.0
    %v3188 = vand.u32 %v2764, 4294901760
    %3189 = vmatpush1.msra.mxu0 %v3188
    %3190 = vmatprep.subr.mxu0 0.0
    %v3191 = vand.u32 %v2765, 4294901760
    %3192 = vmatpush1.msra.mxu0 %v3191
    %3193 = vmatprep.subr.mxu0 0.0
    %v3194 = vand.u32 %v2766, 4294901760
    %3195 = vmatpush1.msra.mxu0 %v3194
    %3196 = vmatprep.subr.mxu0 0.0
    %v3197 = vand.u32 %v2767, 4294901760
    %3198 = vmatpush1.msra.mxu0 %v3197
    %3199 = vmatprep.subr.mxu0 0.0
    %v3200 = vand.u32 %v2768, 4294901760
    %3201 = vmatpush1.msra.mxu0 %v3200
    %3202 = vmatprep.subr.mxu0 0.0
    %v3203 = vand.u32 %v2769, 4294901760
    %3204 = vmatpush1.msra.mxu0 %v3203
    %3205 = vmatprep.subr.mxu0 0.0
    %v3206 = vand.u32 %v2770, 4294901760
    %3207 = vmatpush1.msra.mxu0 %v3206
    %3208 = vmatprep.subr.mxu0 0.0
    %v3209 = vand.u32 %v2771, 4294901760
    %3210 = vmatpush1.msra.mxu0 %v3209
    %3211 = vmatprep.subr.mxu0 0.0
    %v3212 = vand.u32 %v2772, 4294901760
    %3213 = vmatpush1.msra.mxu0 %v3212
    %3214 = vmatprep.subr.mxu0 0.0
    %v3215 = vand.u32 %v2773, 4294901760
    %3216 = vmatpush1.msra.mxu0 %v3215
    %3217 = vmatprep.subr.mxu0 0.0
    %v3218 = vand.u32 %v2774, 4294901760
    %3219 = vmatpush1.msra.mxu0 %v3218
    %3220 = vmatprep.subr.mxu0 0.0
    %v3221 = vand.u32 %v2775, 4294901760
    %3222 = vmatpush1.msra.mxu0 %v3221
    %3223 = vmatprep.subr.mxu0 0.0
    %3224 = vmatpush1.msra.mxu0 0.0
    %3225 = vmatprep.subr.mxu0 0.0
    %3226 = vmatpush1.msra.mxu0 0.0
    %3227 = vmatprep.subr.mxu0 0.0
    %3228 = vmatpush1.msra.mxu0 0.0
    %3229 = vmatprep.subr.mxu0 0.0
    %3230 = vmatpush1.msra.mxu0 0.0
    %3231 = vmatprep.subr.mxu0 0.0
    %3232 = vmatpush1.msra.mxu0 0.0
    %3233 = vmatprep.subr.mxu0 0.0
    %3234 = vmatpush1.msra.mxu0 0.0
    %3235 = vmatprep.subr.mxu0 0.0
    %3236 = vmatpush1.msra.mxu0 0.0
    %3237 = vmatprep.subr.mxu0 0.0
    %3238 = vmatpush1.msra.mxu0 0.0
    %3239 = vmatprep.subr.mxu0 0.0
    %3240 = vmatpush1.msra.mxu0 0.0
    %3241 = vmatprep.subr.mxu0 0.0
    %3242 = vmatpush1.msra.mxu0 0.0
    %3243 = vmatprep.subr.mxu0 0.0
    %3244 = vmatpush1.msra.mxu0 0.0
    %3245 = vmatprep.subr.mxu0 0.0
    %3246 = vmatpush1.msra.mxu0 0.0
    %3247 = vmatprep.subr.mxu0 0.0
    %3248 = vmatpush1.msra.mxu0 0.0
    %3249 = vmatprep.subr.mxu0 0.0
    %3250 = vmatpush1.msra.mxu0 0.0
    %3251 = vmatprep.subr.mxu0 0.0
    %3252 = vmatpush1.msra.mxu0 0.0
    %3253 = vmatprep.subr.mxu0 0.0
    %3254 = vmatpush1.msra.mxu0 0.0
    %3255 = vmatprep.mubr.f32.mxu0 0.0
    %v3256 = vand.u32 %v2757, 4294901760
    %v3257 = vsub.f32 %v2757, %v3256
    %v3258 = vand.u32 %v3257, 4294901760
    %3259 = vmatmul.mubr.f32.gmra.mrb[0].mxu0 %v3258
    %v3260 = vpop.f32.mrb[0].mxu0
    %v3261 = vadd.f32 %v3158, %v3260
    %v3262 = vpop.f32.mrb[0].mxu0
    %3263 = vmatprep.mubr.f32.mxu0 0.0
    %v3264 = vand.u32 %v2758, 4294901760
    %v3265 = vsub.f32 %v2758, %v3264
    %v3266 = vand.u32 %v3265, 4294901760
    %3267 = vmatmul.mubr.f32.gmra.mrb[0].mxu0 %v3266
    %v3268 = vpop.f32.mrb[0].mxu0
    %v3269 = vadd.f32 %v3165, %v3268
    %v3270 = vpop.f32.mrb[0].mxu0
    %3271 = vmatprep.mubr.f32.mxu0 0.0
    %v3272 = vand.u32 %v2759, 4294901760
    %v3273 = vsub.f32 %v2759, %v3272
    %v3274 = vand.u32 %v3273, 4294901760
    %3275 = vmatmul.mubr.f32.gmra.mrb[0].mxu0 %v3274
    %v3276 = vpop.f32.mrb[0].mxu0
    %v3277 = vadd.f32 %v3172, %v3276
    %v3278 = vpop.f32.mrb[0].mxu0
    %3279 = vdwg.mxu0
    %3280 = vmatprep.subr.mxu0 0.0
    %v3281 = vand.u32 %v2760, 4294901760
    %v3282 = vsub.f32 %v2760, %v3281
    %v3283 = vand.u32 %v3282, 4294901760
    %3284 = vmatpush1.msra.mxu0 %v3283
    %3285 = vmatprep.subr.mxu0 0.0
    %v3286 = vand.u32 %v2761, 4294901760
    %v3287 = vsub.f32 %v2761, %v3286
    %v3288 = vand.u32 %v3287, 4294901760
    %3289 = vmatpush1.msra.mxu0 %v3288
    %3290 = vmatprep.subr.mxu0 0.0
    %v3291 = vand.u32 %v2762, 4294901760
    %v3292 = vsub.f32 %v2762, %v3291
    %v3293 = vand.u32 %v3292, 4294901760
    %3294 = vmatpush1.msra.mxu0 %v3293
    %3295 = vmatprep.subr.mxu0 0.0
    %v3296 = vand.u32 %v2763, 4294901760
    %v3297 = vsub.f32 %v2763, %v3296
    %v3298 = vand.u32 %v3297, 4294901760
    %3299 = vmatpush1.msra.mxu0 %v3298
    %3300 = vmatprep.subr.mxu0 0.0
    %v3301 = vand.u32 %v2764, 4294901760
    %v3302 = vsub.f32 %v2764, %v3301
    %v3303 = vand.u32 %v3302, 4294901760
    %3304 = vmatpush1.msra.mxu0 %v3303
    %3305 = vmatprep.subr.mxu0 0.0
    %v3306 = vand.u32 %v2765, 4294901760
    %v3307 = vsub.f32 %v2765, %v3306
    %v3308 = vand.u32 %v3307, 4294901760
    %3309 = vmatpush1.msra.mxu0 %v3308
    %3310 = vmatprep.subr.mxu0 0.0
    %v3311 = vand.u32 %v2766, 4294901760
    %v3312 = vsub.f32 %v2766, %v3311
    %v3313 = vand.u32 %v3312, 4294901760
    %3314 = vmatpush1.msra.mxu0 %v3313
    %3315 = vmatprep.subr.mxu0 0.0
    %v3316 = vand.u32 %v2767, 4294901760
    %v3317 = vsub.f32 %v2767, %v3316
    %v3318 = vand.u32 %v3317, 4294901760
    %3319 = vmatpush1.msra.mxu0 %v3318
    %3320 = vmatprep.subr.mxu0 0.0
    %v3321 = vand.u32 %v2768, 4294901760
    %v3322 = vsub.f32 %v2768, %v3321
    %v3323 = vand.u32 %v3322, 4294901760
    %3324 = vmatpush1.msra.mxu0 %v3323
    %3325 = vmatprep.subr.mxu0 0.0
    %v3326 = vand.u32 %v2769, 4294901760
    %v3327 = vsub.f32 %v2769, %v3326
    %v3328 = vand.u32 %v3327, 4294901760
    %3329 = vmatpush1.msra.mxu0 %v3328
    %3330 = vmatprep.subr.mxu0 0.0
    %v3331 = vand.u32 %v2770, 4294901760
    %v3332 = vsub.f32 %v2770, %v3331
    %v3333 = vand.u32 %v3332, 4294901760
    %3334 = vmatpush1.msra.mxu0 %v3333
    %3335 = vmatprep.subr.mxu0 0.0
    %v3336 = vand.u32 %v2771, 4294901760
    %v3337 = vsub.f32 %v2771, %v3336
    %v3338 = vand.u32 %v3337, 4294901760
    %3339 = vmatpush1.msra.mxu0 %v3338
    %3340 = vmatprep.subr.mxu0 0.0
    %v3341 = vand.u32 %v2772, 4294901760
    %v3342 = vsub.f32 %v2772, %v3341
    %v3343 = vand.u32 %v3342, 4294901760
    %3344 = vmatpush1.msra.mxu0 %v3343
    %3345 = vmatprep.subr.mxu0 0.0
    %v3346 = vand.u32 %v2773, 4294901760
    %v3347 = vsub.f32 %v2773, %v3346
    %v3348 = vand.u32 %v3347, 4294901760
    %3349 = vmatpush1.msra.mxu0 %v3348
    %3350 = vmatprep.subr.mxu0 0.0
    %v3351 = vand.u32 %v2774, 4294901760
    %v3352 = vsub.f32 %v2774, %v3351
    %v3353 = vand.u32 %v3352, 4294901760
    %3354 = vmatpush1.msra.mxu0 %v3353
    %3355 = vmatprep.subr.mxu0 0.0
    %v3356 = vand.u32 %v2775, 4294901760
    %v3357 = vsub.f32 %v2775, %v3356
    %v3358 = vand.u32 %v3357, 4294901760
    %3359 = vmatpush1.msra.mxu0 %v3358
    %3360 = vmatprep.subr.mxu0 0.0
    %3361 = vmatpush1.msra.mxu0 0.0
    %3362 = vmatprep.subr.mxu0 0.0
    %3363 = vmatpush1.msra.mxu0 0.0
    %3364 = vmatprep.subr.mxu0 0.0
    %3365 = vmatpush1.msra.mxu0 0.0
    %3366 = vmatprep.subr.mxu0 0.0
    %3367 = vmatpush1.msra.mxu0 0.0
    %3368 = vmatprep.subr.mxu0 0.0
    %3369 = vmatpush1.msra.mxu0 0.0
    %3370 = vmatprep.subr.mxu0 0.0
    %3371 = vmatpush1.msra.mxu0 0.0
    %3372 = vmatprep.subr.mxu0 0.0
    %3373 = vmatpush1.msra.mxu0 0.0
    %3374 = vmatprep.subr.mxu0 0.0
    %3375 = vmatpush1.msra.mxu0 0.0
    %3376 = vmatprep.subr.mxu0 0.0
    %3377 = vmatpush1.msra.mxu0 0.0
    %3378 = vmatprep.subr.mxu0 0.0
    %3379 = vmatpush1.msra.mxu0 0.0
    %3380 = vmatprep.subr.mxu0 0.0
    %3381 = vmatpush1.msra.mxu0 0.0
    %3382 = vmatprep.subr.mxu0 0.0
    %3383 = vmatpush1.msra.mxu0 0.0
    %3384 = vmatprep.subr.mxu0 0.0
    %3385 = vmatpush1.msra.mxu0 0.0
    %3386 = vmatprep.subr.mxu0 0.0
    %3387 = vmatpush1.msra.mxu0 0.0
    %3388 = vmatprep.subr.mxu0 0.0
    %3389 = vmatpush1.msra.mxu0 0.0
    %3390 = vmatprep.subr.mxu0 0.0
    %3391 = vmatpush1.msra.mxu0 0.0
    %3392 = vmatprep.mubr.f32.mxu0 0.0
    %v3393 = vand.u32 %v2757, 4294901760
    %3394 = vmatmul.mubr.f32.gmra.mrb[0].mxu0 %v3393
    %v3395 = vpop.f32.mrb[0].mxu0
    %v3396 = vadd.f32 %v3261, %v3395
    %v3397 = vpop.f32.mrb[0].mxu0
    %3398 = vmatprep.mubr.f32.mxu0 0.0
    %v3399 = vand.u32 %v2758, 4294901760
    %3400 = vmatmul.mubr.f32.gmra.mrb[0].mxu0 %v3399
    %v3401 = vpop.f32.mrb[0].mxu0
    %v3402 = vadd.f32 %v3269, %v3401
    %v3403 = vpop.f32.mrb[0].mxu0
    %3404 = vmatprep.mubr.f32.mxu0 0.0
    %v3405 = vand.u32 %v2759, 4294901760
    %3406 = vmatmul.mubr.f32.gmra.mrb[0].mxu0 %v3405
    %v3407 = vpop.f32.mrb[0].mxu0
    %v3408 = vadd.f32 %v3277, %v3407
    %v3409 = vpop.f32.mrb[0].mxu0
    %3410 = vdwg.mxu0
    %3411 = vmatprep.subr.mxu0 0.0
    %v3412 = vand.u32 %v2760, 4294901760
    %3413 = vmatpush1.msra.mxu0 %v3412
    %3414 = vmatprep.subr.mxu0 0.0
    %v3415 = vand.u32 %v2761, 4294901760
    %3416 = vmatpush1.msra.mxu0 %v3415
    %3417 = vmatprep.subr.mxu0 0.0
    %v3418 = vand.u32 %v2762, 4294901760
    %3419 = vmatpush1.msra.mxu0 %v3418
    %3420 = vmatprep.subr.mxu0 0.0
    %v3421 = vand.u32 %v2763, 4294901760
    %3422 = vmatpush1.msra.mxu0 %v3421
    %3423 = vmatprep.subr.mxu0 0.0
    %v3424 = vand.u32 %v2764, 4294901760
    %3425 = vmatpush1.msra.mxu0 %v3424
    %3426 = vmatprep.subr.mxu0 0.0
    %v3427 = vand.u32 %v2765, 4294901760
    %3428 = vmatpush1.msra.mxu0 %v3427
    %3429 = vmatprep.subr.mxu0 0.0
    %v3430 = vand.u32 %v2766, 4294901760
    %3431 = vmatpush1.msra.mxu0 %v3430
    %3432 = vmatprep.subr.mxu0 0.0
    %v3433 = vand.u32 %v2767, 4294901760
    %3434 = vmatpush1.msra.mxu0 %v3433
    %3435 = vmatprep.subr.mxu0 0.0
    %v3436 = vand.u32 %v2768, 4294901760
    %3437 = vmatpush1.msra.mxu0 %v3436
    %3438 = vmatprep.subr.mxu0 0.0
    %v3439 = vand.u32 %v2769, 4294901760
    %3440 = vmatpush1.msra.mxu0 %v3439
    %3441 = vmatprep.subr.mxu0 0.0
    %v3442 = vand.u32 %v2770, 4294901760
    %3443 = vmatpush1.msra.mxu0 %v3442
    %3444 = vmatprep.subr.mxu0 0.0
    %v3445 = vand.u32 %v2771, 4294901760
    %3446 = vmatpush1.msra.mxu0 %v3445
    %3447 = vmatprep.subr.mxu0 0.0
    %v3448 = vand.u32 %v2772, 4294901760
    %3449 = vmatpush1.msra.mxu0 %v3448
    %3450 = vmatprep.subr.mxu0 0.0
    %v3451 = vand.u32 %v2773, 4294901760
    %3452 = vmatpush1.msra.mxu0 %v3451
    %3453 = vmatprep.subr.mxu0 0.0
    %v3454 = vand.u32 %v2774, 4294901760
    %3455 = vmatpush1.msra.mxu0 %v3454
    %3456 = vmatprep.subr.mxu0 0.0
    %v3457 = vand.u32 %v2775, 4294901760
    %3458 = vmatpush1.msra.mxu0 %v3457
    %3459 = vmatprep.subr.mxu0 0.0
    %3460 = vmatpush1.msra.mxu0 0.0
    %3461 = vmatprep.subr.mxu0 0.0
    %3462 = vmatpush1.msra.mxu0 0.0
    %3463 = vmatprep.subr.mxu0 0.0
    %3464 = vmatpush1.msra.mxu0 0.0
    %3465 = vmatprep.subr.mxu0 0.0
    %3466 = vmatpush1.msra.mxu0 0.0
    %3467 = vmatprep.subr.mxu0 0.0
    %3468 = vmatpush1.msra.mxu0 0.0
    %3469 = vmatprep.subr.mxu0 0.0
    %3470 = vmatpush1.msra.mxu0 0.0
    %3471 = vmatprep.subr.mxu0 0.0
    %3472 = vmatpush1.msra.mxu0 0.0
    %3473 = vmatprep.subr.mxu0 0.0
    %3474 = vmatpush1.msra.mxu0 0.0
    %3475 = vmatprep.subr.mxu0 0.0
    %3476 = vmatpush1.msra.mxu0 0.0
    %3477 = vmatprep.subr.mxu0 0.0
    %3478 = vmatpush1.msra.mxu0 0.0
    %3479 = vmatprep.subr.mxu0 0.0
    %3480 = vmatpush1.msra.mxu0 0.0
    %3481 = vmatprep.subr.mxu0 0.0
    %3482 = vmatpush1.msra.mxu0 0.0
    %3483 = vmatprep.subr.mxu0 0.0
    %3484 = vmatpush1.msra.mxu0 0.0
    %3485 = vmatprep.subr.mxu0 0.0
    %3486 = vmatpush1.msra.mxu0 0.0
    %3487 = vmatprep.subr.mxu0 0.0
    %3488 = vmatpush1.msra.mxu0 0.0
    %3489 = vmatprep.subr.mxu0 0.0
    %3490 = vmatpush1.msra.mxu0 0.0
    %3491 = vmatprep.mubr.f32.mxu0 0.0
    %v3492 = vand.u32 %v2757, 4294901760
    %3493 = vmatmul.mubr.f32.gmra.mrb[0].mxu0 %v3492
    %v3494 = vpop.f32.mrb[0].mxu0
    %v3495 = vadd.f32 %v3396, %v3494
    %v3496 = vpop.f32.mrb[0].mxu0
    %3497 = vmatprep.mubr.f32.mxu0 0.0
    %v3498 = vand.u32 %v2758, 4294901760
    %3499 = vmatmul.mubr.f32.gmra.mrb[0].mxu0 %v3498
    %v3500 = vpop.f32.mrb[0].mxu0
    %v3501 = vadd.f32 %v3402, %v3500
    %v3502 = vpop.f32.mrb[0].mxu0
    %3503 = vmatprep.mubr.f32.mxu0 0.0
    %v3504 = vand.u32 %v2759, 4294901760
    %3505 = vmatmul.mubr.f32.gmra.mrb[0].mxu0 %v3504
    %v3506 = vpop.f32.mrb[0].mxu0
    %v3507 = vadd.f32 %v3408, %v3506
    %v3508 = vpop.f32.mrb[0].mxu0
    %3509 = vdwg.mxu0
    %v3510 = vmax.f32 %v3495, 0.0
    %v3511 = vmax.f32 %v3501, 0.0
    %v3512 = vmax.f32 %v3507, 0.0
    %v3513 = vld [vmem:[#allocation8] sm:$0xff]
    %v3514 = vld [vmem:[#allocation8 + $0x8] sm:$0xff]
    %v3515 = vld [vmem:[#allocation8 + $0x10] sm:$0xff]
    %v3516 = vld [vmem:[#allocation8 + $0x18] sm:$0xff]
    %v3517 = vld [vmem:[#allocation8 + $0x20] sm:$0xff]
    %v3518 = vld [vmem:[#allocation8 + $0x28] sm:$0xff]
    %v3519 = vld [vmem:[#allocation8 + $0x30] sm:$0xff]
    %v3520 = vld [vmem:[#allocation8 + $0x38] sm:$0xff]
    %v3521 = vld [vmem:[#allocation8 + $0x40] sm:$0xff]
    %v3522 = vld [vmem:[#allocation8 + $0x48] sm:$0xff]
    %v3523 = vld [vmem:[#allocation8 + $0x50] sm:$0xff]
    %v3524 = vld [vmem:[#allocation8 + $0x58] sm:$0xff]
    %v3525 = vld [vmem:[#allocation8 + $0x60] sm:$0xff]
    %v3526 = vld [vmem:[#allocation8 + $0x68] sm:$0xff]
    %v3527 = vld [vmem:[#allocation8 + $0x70] sm:$0xff]
    %v3528 = vld [vmem:[#allocation8 + $0x78] sm:$0xff]
    %v3529 = vld [vmem:[%s6] sm:$0x1]
    %v3531 = vlaneseq
    %v3532 = vshrl.u32 %v3531, 7
    %v3533 = vsub.s32 0, %v3532
    %v3534 = vrot.slane %v3529, %v3533
    %3536 = vmatprep.subr.mxu0 0.0
    %v3537 = vand.u32 %v3513, 4294901760
    %3538 = vmatpush1.msra.mxu0 %v3537
    %3539 = vmatprep.subr.mxu0 0.0
    %v3540 = vand.u32 %v3514, 4294901760
    %3541 = vmatpush1.msra.mxu0 %v3540
    %3542 = vmatprep.subr.mxu0 0.0
    %v3543 = vand.u32 %v3515, 4294901760
    %3544 = vmatpush1.msra.mxu0 %v3543
    %3545 = vmatprep.subr.mxu0 0.0
    %v3546 = vand.u32 %v3516, 4294901760
    %3547 = vmatpush1.msra.mxu0 %v3546
    %3548 = vmatprep.subr.mxu0 0.0
    %v3549 = vand.u32 %v3517, 4294901760
    %3550 = vmatpush1.msra.mxu0 %v3549
    %3551 = vmatprep.subr.mxu0 0.0
    %v3552 = vand.u32 %v3518, 4294901760
    %3553 = vmatpush1.msra.mxu0 %v3552
    %3554 = vmatprep.subr.mxu0 0.0
    %v3555 = vand.u32 %v3519, 4294901760
    %3556 = vmatpush1.msra.mxu0 %v3555
    %3557 = vmatprep.subr.mxu0 0.0
    %v3558 = vand.u32 %v3520, 4294901760
    %3559 = vmatpush1.msra.mxu0 %v3558
    %3560 = vmatprep.subr.mxu0 0.0
    %v3561 = vand.u32 %v3521, 4294901760
    %3562 = vmatpush1.msra.mxu0 %v3561
    %3563 = vmatprep.subr.mxu0 0.0
    %v3564 = vand.u32 %v3522, 4294901760
    %3565 = vmatpush1.msra.mxu0 %v3564
    %3566 = vmatprep.subr.mxu0 0.0
    %v3567 = vand.u32 %v3523, 4294901760
    %3568 = vmatpush1.msra.mxu0 %v3567
    %3569 = vmatprep.subr.mxu0 0.0
    %v3570 = vand.u32 %v3524, 4294901760
    %3571 = vmatpush1.msra.mxu0 %v3570
    %3572 = vmatprep.subr.mxu0 0.0
    %v3573 = vand.u32 %v3525, 4294901760
    %3574 = vmatpush1.msra.mxu0 %v3573
    %3575 = vmatprep.subr.mxu0 0.0
    %v3576 = vand.u32 %v3526, 4294901760
    %3577 = vmatpush1.msra.mxu0 %v3576
    %3578 = vmatprep.subr.mxu0 0.0
    %v3579 = vand.u32 %v3527, 4294901760
    %3580 = vmatpush1.msra.mxu0 %v3579
    %3581 = vmatprep.subr.mxu0 0.0
    %v3582 = vand.u32 %v3528, 4294901760
    %3583 = vmatpush1.msra.mxu0 %v3582
    %3584 = vmatprep.subr.mxu0 0.0
    %3585 = vmatpush1.msra.mxu0 0.0
    %3586 = vmatprep.subr.mxu0 0.0
    %3587 = vmatpush1.msra.mxu0 0.0
    %3588 = vmatprep.subr.mxu0 0.0
    %3589 = vmatpush1.msra.mxu0 0.0
    %3590 = vmatprep.subr.mxu0 0.0
    %3591 = vmatpush1.msra.mxu0 0.0
    %3592 = vmatprep.subr.mxu0 0.0
    %3593 = vmatpush1.msra.mxu0 0.0
    %3594 = vmatprep.subr.mxu0 0.0
    %3595 = vmatpush1.msra.mxu0 0.0
    %3596 = vmatprep.subr.mxu0 0.0
    %3597 = vmatpush1.msra.mxu0 0.0
    %3598 = vmatprep.subr.mxu0 0.0
    %3599 = vmatpush1.msra.mxu0 0.0
    %3600 = vmatprep.subr.mxu0 0.0
    %3601 = vmatpush1.msra.mxu0 0.0
    %3602 = vmatprep.subr.mxu0 0.0
    %3603 = vmatpush1.msra.mxu0 0.0
    %3604 = vmatprep.subr.mxu0 0.0
    %3605 = vmatpush1.msra.mxu0 0.0
    %3606 = vmatprep.subr.mxu0 0.0
    %3607 = vmatpush1.msra.mxu0 0.0
    %3608 = vmatprep.subr.mxu0 0.0
    %3609 = vmatpush1.msra.mxu0 0.0
    %3610 = vmatprep.subr.mxu0 0.0
    %3611 = vmatpush1.msra.mxu0 0.0
    %3612 = vmatprep.subr.mxu0 0.0
    %3613 = vmatpush1.msra.mxu0 0.0
    %3614 = vmatprep.subr.mxu0 0.0
    %3615 = vmatpush1.msra.mxu0 0.0
    %3616 = vmatprep.mubr.f32.mxu0 0.0
    %v3617 = vand.u32 %v3510, 4294901760
    %v3618 = vsub.f32 %v3510, %v3617
    %v3619 = vand.u32 %v3618, 4294901760
    %v3620 = vsub.f32 %v3618, %v3619
    %v3621 = vand.u32 %v3620, 4294901760
    %3622 = vmatmul.mubr.f32.gmra.mrb[0].mxu0 %v3621
    %v3623 = vpop.f32.mrb[0].mxu0
    %v3624 = vadd.f32 %v3534, %v3623
    %v3625 = vpop.f32.mrb[0].mxu0
    %3626 = vmatprep.mubr.f32.mxu0 0.0
    %v3627 = vand.u32 %v3511, 4294901760
    %v3628 = vsub.f32 %v3511, %v3627
    %v3629 = vand.u32 %v3628, 4294901760
    %v3630 = vsub.f32 %v3628, %v3629
    %v3631 = vand.u32 %v3630, 4294901760
    %3632 = vmatmul.mubr.f32.gmra.mrb[0].mxu0 %v3631
    %v3633 = vpop.f32.mrb[0].mxu0
    %v3634 = vadd.f32 %v3534, %v3633
    %v3635 = vpop.f32.mrb[0].mxu0
    %3636 = vmatprep.mubr.f32.mxu0 0.0
    %v3637 = vand.u32 %v3512, 4294901760
    %v3638 = vsub.f32 %v3512, %v3637
    %v3639 = vand.u32 %v3638, 4294901760
    %v3640 = vsub.f32 %v3638, %v3639
    %v3641 = vand.u32 %v3640, 4294901760
    %3642 = vmatmul.mubr.f32.gmra.mrb[0].mxu0 %v3641
    %v3643 = vpop.f32.mrb[0].mxu0
    %v3644 = vadd.f32 %v3534, %v3643
    %v3645 = vpop.f32.mrb[0].mxu0
    %3646 = vdwg.mxu0
    %3647 = vmatprep.subr.mxu0 0.0
    %v3648 = vand.u32 %v3513, 4294901760
    %v3649 = vsub.f32 %v3513, %v3648
    %v3650 = vand.u32 %v3649, 4294901760
    %v3651 = vsub.f32 %v3649, %v3650
    %v3652 = vand.u32 %v3651, 4294901760
    %3653 = vmatpush1.msra.mxu0 %v3652
    %3654 = vmatprep.subr.mxu0 0.0
    %v3655 = vand.u32 %v3514, 4294901760
    %v3656 = vsub.f32 %v3514, %v3655
    %v3657 = vand.u32 %v3656, 4294901760
    %v3658 = vsub.f32 %v3656, %v3657
    %v3659 = vand.u32 %v3658, 4294901760
    %3660 = vmatpush1.msra.mxu0 %v3659
    %3661 = vmatprep.subr.mxu0 0.0
    %v3662 = vand.u32 %v3515, 4294901760
    %v3663 = vsub.f32 %v3515, %v3662
    %v3664 = vand.u32 %v3663, 4294901760
    %v3665 = vsub.f32 %v3663, %v3664
    %v3666 = vand.u32 %v3665, 4294901760
    %3667 = vmatpush1.msra.mxu0 %v3666
    %3668 = vmatprep.subr.mxu0 0.0
    %v3669 = vand.u32 %v3516, 4294901760
    %v3670 = vsub.f32 %v3516, %v3669
    %v3671 = vand.u32 %v3670, 4294901760
    %v3672 = vsub.f32 %v3670, %v3671
    %v3673 = vand.u32 %v3672, 4294901760
    %3674 = vmatpush1.msra.mxu0 %v3673
    %3675 = vmatprep.subr.mxu0 0.0
    %v3676 = vand.u32 %v3517, 4294901760
    %v3677 = vsub.f32 %v3517, %v3676
    %v3678 = vand.u32 %v3677, 4294901760
    %v3679 = vsub.f32 %v3677, %v3678
    %v3680 = vand.u32 %v3679, 4294901760
    %3681 = vmatpush1.msra.mxu0 %v3680
    %3682 = vmatprep.subr.mxu0 0.0
    %v3683 = vand.u32 %v3518, 4294901760
    %v3684 = vsub.f32 %v3518, %v3683
    %v3685 = vand.u32 %v3684, 4294901760
    %v3686 = vsub.f32 %v3684, %v3685
    %v3687 = vand.u32 %v3686, 4294901760
    %3688 = vmatpush1.msra.mxu0 %v3687
    %3689 = vmatprep.subr.mxu0 0.0
    %v3690 = vand.u32 %v3519, 4294901760
    %v3691 = vsub.f32 %v3519, %v3690
    %v3692 = vand.u32 %v3691, 4294901760
    %v3693 = vsub.f32 %v3691, %v3692
    %v3694 = vand.u32 %v3693, 4294901760
    %3695 = vmatpush1.msra.mxu0 %v3694
    %3696 = vmatprep.subr.mxu0 0.0
    %v3697 = vand.u32 %v3520, 4294901760
    %v3698 = vsub.f32 %v3520, %v3697
    %v3699 = vand.u32 %v3698, 4294901760
    %v3700 = vsub.f32 %v3698, %v3699
    %v3701 = vand.u32 %v3700, 4294901760
    %3702 = vmatpush1.msra.mxu0 %v3701
    %3703 = vmatprep.subr.mxu0 0.0
    %v3704 = vand.u32 %v3521, 4294901760
    %v3705 = vsub.f32 %v3521, %v3704
    %v3706 = vand.u32 %v3705, 4294901760
    %v3707 = vsub.f32 %v3705, %v3706
    %v3708 = vand.u32 %v3707, 4294901760
    %3709 = vmatpush1.msra.mxu0 %v3708
    %3710 = vmatprep.subr.mxu0 0.0
    %v3711 = vand.u32 %v3522, 4294901760
    %v3712 = vsub.f32 %v3522, %v3711
    %v3713 = vand.u32 %v3712, 4294901760
    %v3714 = vsub.f32 %v3712, %v3713
    %v3715 = vand.u32 %v3714, 4294901760
    %3716 = vmatpush1.msra.mxu0 %v3715
    %3717 = vmatprep.subr.mxu0 0.0
    %v3718 = vand.u32 %v3523, 4294901760
    %v3719 = vsub.f32 %v3523, %v3718
    %v3720 = vand.u32 %v3719, 4294901760
    %v3721 = vsub.f32 %v3719, %v3720
    %v3722 = vand.u32 %v3721, 4294901760
    %3723 = vmatpush1.msra.mxu0 %v3722
    %3724 = vmatprep.subr.mxu0 0.0
    %v3725 = vand.u32 %v3524, 4294901760
    %v3726 = vsub.f32 %v3524, %v3725
    %v3727 = vand.u32 %v3726, 4294901760
    %v3728 = vsub.f32 %v3726, %v3727
    %v3729 = vand.u32 %v3728, 4294901760
    %3730 = vmatpush1.msra.mxu0 %v3729
    %3731 = vmatprep.subr.mxu0 0.0
    %v3732 = vand.u32 %v3525, 4294901760
    %v3733 = vsub.f32 %v3525, %v3732
    %v3734 = vand.u32 %v3733, 4294901760
    %v3735 = vsub.f32 %v3733, %v3734
    %v3736 = vand.u32 %v3735, 4294901760
    %3737 = vmatpush1.msra.mxu0 %v3736
    %3738 = vmatprep.subr.mxu0 0.0
    %v3739 = vand.u32 %v3526, 4294901760
    %v3740 = vsub.f32 %v3526, %v3739
    %v3741 = vand.u32 %v3740, 4294901760
    %v3742 = vsub.f32 %v3740, %v3741
    %v3743 = vand.u32 %v3742, 4294901760
    %3744 = vmatpush1.msra.mxu0 %v3743
    %3745 = vmatprep.subr.mxu0 0.0
    %v3746 = vand.u32 %v3527, 4294901760
    %v3747 = vsub.f32 %v3527, %v3746
    %v3748 = vand.u32 %v3747, 4294901760
    %v3749 = vsub.f32 %v3747, %v3748
    %v3750 = vand.u32 %v3749, 4294901760
    %3751 = vmatpush1.msra.mxu0 %v3750
    %3752 = vmatprep.subr.mxu0 0.0
    %v3753 = vand.u32 %v3528, 4294901760
    %v3754 = vsub.f32 %v3528, %v3753
    %v3755 = vand.u32 %v3754, 4294901760
    %v3756 = vsub.f32 %v3754, %v3755
    %v3757 = vand.u32 %v3756, 4294901760
    %3758 = vmatpush1.msra.mxu0 %v3757
    %3759 = vmatprep.subr.mxu0 0.0
    %3760 = vmatpush1.msra.mxu0 0.0
    %3761 = vmatprep.subr.mxu0 0.0
    %3762 = vmatpush1.msra.mxu0 0.0
    %3763 = vmatprep.subr.mxu0 0.0
    %3764 = vmatpush1.msra.mxu0 0.0
    %3765 = vmatprep.subr.mxu0 0.0
    %3766 = vmatpush1.msra.mxu0 0.0
    %3767 = vmatprep.subr.mxu0 0.0
    %3768 = vmatpush1.msra.mxu0 0.0
    %3769 = vmatprep.subr.mxu0 0.0
    %3770 = vmatpush1.msra.mxu0 0.0
    %3771 = vmatprep.subr.mxu0 0.0
    %3772 = vmatpush1.msra.mxu0 0.0
    %3773 = vmatprep.subr.mxu0 0.0
    %3774 = vmatpush1.msra.mxu0 0.0
    %3775 = vmatprep.subr.mxu0 0.0
    %3776 = vmatpush1.msra.mxu0 0.0
    %3777 = vmatprep.subr.mxu0 0.0
    %3778 = vmatpush1.msra.mxu0 0.0
    %3779 = vmatprep.subr.mxu0 0.0
    %3780 = vmatpush1.msra.mxu0 0.0
    %3781 = vmatprep.subr.mxu0 0.0
    %3782 = vmatpush1.msra.mxu0 0.0
    %3783 = vmatprep.subr.mxu0 0.0
    %3784 = vmatpush1.msra.mxu0 0.0
    %3785 = vmatprep.subr.mxu0 0.0
    %3786 = vmatpush1.msra.mxu0 0.0
    %3787 = vmatprep.subr.mxu0 0.0
    %3788 = vmatpush1.msra.mxu0 0.0
    %3789 = vmatprep.subr.mxu0 0.0
    %3790 = vmatpush1.msra.mxu0 0.0
    %3791 = vmatprep.mubr.f32.mxu0 0.0
    %v3792 = vand.u32 %v3510, 4294901760
    %3793 = vmatmul.mubr.f32.gmra.mrb[0].mxu0 %v3792
    %v3794 = vpop.f32.mrb[0].mxu0
    %v3795 = vadd.f32 %v3624, %v3794
    %v3796 = vpop.f32.mrb[0].mxu0
    %3797 = vmatprep.mubr.f32.mxu0 0.0
    %v3798 = vand.u32 %v3511, 4294901760
    %3799 = vmatmul.mubr.f32.gmra.mrb[0].mxu0 %v3798
    %v3800 = vpop.f32.mrb[0].mxu0
    %v3801 = vadd.f32 %v3634, %v3800
    %v3802 = vpop.f32.mrb[0].mxu0
    %3803 = vmatprep.mubr.f32.mxu0 0.0
    %v3804 = vand.u32 %v3512, 4294901760
    %3805 = vmatmul.mubr.f32.gmra.mrb[0].mxu0 %v3804
    %v3806 = vpop.f32.mrb[0].mxu0
    %v3807 = vadd.f32 %v3644, %v3806
    %v3808 = vpop.f32.mrb[0].mxu0
    %3809 = vdwg.mxu0
    %3810 = vmatprep.subr.mxu0 0.0
    %v3811 = vand.u32 %v3513, 4294901760
    %v3812 = vsub.f32 %v3513, %v3811
    %3813 = vmatpush1.msra.mxu0 %v3812
    %3814 = vmatprep.subr.mxu0 0.0
    %v3815 = vand.u32 %v3514, 4294901760
    %v3816 = vsub.f32 %v3514, %v3815
    %3817 = vmatpush1.msra.mxu0 %v3816
    %3818 = vmatprep.subr.mxu0 0.0
    %v3819 = vand.u32 %v3515, 4294901760
    %v3820 = vsub.f32 %v3515, %v3819
    %3821 = vmatpush1.msra.mxu0 %v3820
    %3822 = vmatprep.subr.mxu0 0.0
    %v3823 = vand.u32 %v3516, 4294901760
    %v3824 = vsub.f32 %v3516, %v3823
    %3825 = vmatpush1.msra.mxu0 %v3824
    %3826 = vmatprep.subr.mxu0 0.0
    %v3827 = vand.u32 %v3517, 4294901760
    %v3828 = vsub.f32 %v3517, %v3827
    %3829 = vmatpush1.msra.mxu0 %v3828
    %3830 = vmatprep.subr.mxu0 0.0
    %v3831 = vand.u32 %v3518, 4294901760
    %v3832 = vsub.f32 %v3518, %v3831
    %3833 = vmatpush1.msra.mxu0 %v3832
    %3834 = vmatprep.subr.mxu0 0.0
    %v3835 = vand.u32 %v3519, 4294901760
    %v3836 = vsub.f32 %v3519, %v3835
    %3837 = vmatpush1.msra.mxu0 %v3836
    %3838 = vmatprep.subr.mxu0 0.0
    %v3839 = vand.u32 %v3520, 4294901760
    %v3840 = vsub.f32 %v3520, %v3839
    %3841 = vmatpush1.msra.mxu0 %v3840
    %3842 = vmatprep.subr.mxu0 0.0
    %v3843 = vand.u32 %v3521, 4294901760
    %v3844 = vsub.f32 %v3521, %v3843
    %3845 = vmatpush1.msra.mxu0 %v3844
    %3846 = vmatprep.subr.mxu0 0.0
    %v3847 = vand.u32 %v3522, 4294901760
    %v3848 = vsub.f32 %v3522, %v3847
    %3849 = vmatpush1.msra.mxu0 %v3848
    %3850 = vmatprep.subr.mxu0 0.0
    %v3851 = vand.u32 %v3523, 4294901760
    %v3852 = vsub.f32 %v3523, %v3851
    %3853 = vmatpush1.msra.mxu0 %v3852
    %3854 = vmatprep.subr.mxu0 0.0
    %v3855 = vand.u32 %v3524, 4294901760
    %v3856 = vsub.f32 %v3524, %v3855
    %3857 = vmatpush1.msra.mxu0 %v3856
    %3858 = vmatprep.subr.mxu0 0.0
    %v3859 = vand.u32 %v3525, 4294901760
    %v3860 = vsub.f32 %v3525, %v3859
    %3861 = vmatpush1.msra.mxu0 %v3860
    %3862 = vmatprep.subr.mxu0 0.0
    %v3863 = vand.u32 %v3526, 4294901760
    %v3864 = vsub.f32 %v3526, %v3863
    %3865 = vmatpush1.msra.mxu0 %v3864
    %3866 = vmatprep.subr.mxu0 0.0
    %v3867 = vand.u32 %v3527, 4294901760
    %v3868 = vsub.f32 %v3527, %v3867
    %3869 = vmatpush1.msra.mxu0 %v3868
    %3870 = vmatprep.subr.mxu0 0.0
    %v3871 = vand.u32 %v3528, 4294901760
    %v3872 = vsub.f32 %v3528, %v3871
    %3873 = vmatpush1.msra.mxu0 %v3872
    %3874 = vmatprep.subr.mxu0 0.0
    %3875 = vmatpush1.msra.mxu0 0.0
    %3876 = vmatprep.subr.mxu0 0.0
    %3877 = vmatpush1.msra.mxu0 0.0
    %3878 = vmatprep.subr.mxu0 0.0
    %3879 = vmatpush1.msra.mxu0 0.0
    %3880 = vmatprep.subr.mxu0 0.0
    %3881 = vmatpush1.msra.mxu0 0.0
    %3882 = vmatprep.subr.mxu0 0.0
    %3883 = vmatpush1.msra.mxu0 0.0
    %3884 = vmatprep.subr.mxu0 0.0
    %3885 = vmatpush1.msra.mxu0 0.0
    %3886 = vmatprep.subr.mxu0 0.0
    %3887 = vmatpush1.msra.mxu0 0.0
    %3888 = vmatprep.subr.mxu0 0.0
    %3889 = vmatpush1.msra.mxu0 0.0
    %3890 = vmatprep.subr.mxu0 0.0
    %3891 = vmatpush1.msra.mxu0 0.0
    %3892 = vmatprep.subr.mxu0 0.0
    %3893 = vmatpush1.msra.mxu0 0.0
    %3894 = vmatprep.subr.mxu0 0.0
    %3895 = vmatpush1.msra.mxu0 0.0
    %3896 = vmatprep.subr.mxu0 0.0
    %3897 = vmatpush1.msra.mxu0 0.0
    %3898 = vmatprep.subr.mxu0 0.0
    %3899 = vmatpush1.msra.mxu0 0.0
    %3900 = vmatprep.subr.mxu0 0.0
    %3901 = vmatpush1.msra.mxu0 0.0
    %3902 = vmatprep.subr.mxu0 0.0
    %3903 = vmatpush1.msra.mxu0 0.0
    %3904 = vmatprep.subr.mxu0 0.0
    %3905 = vmatpush1.msra.mxu0 0.0
    %3906 = vmatprep.mubr.f32.mxu0 0.0
    %v3907 = vand.u32 %v3510, 4294901760
    %v3908 = vsub.f32 %v3510, %v3907
    %3909 = vmatmul.mubr.f32.gmra.mrb[0].mxu0 %v3908
    %v3910 = vpop.f32.mrb[0].mxu0
    %v3911 = vadd.f32 %v3795, %v3910
    %v3912 = vpop.f32.mrb[0].mxu0
    %3913 = vmatprep.mubr.f32.mxu0 0.0
    %v3914 = vand.u32 %v3511, 4294901760
    %v3915 = vsub.f32 %v3511, %v3914
    %3916 = vmatmul.mubr.f32.gmra.mrb[0].mxu0 %v3915
    %v3917 = vpop.f32.mrb[0].mxu0
    %v3918 = vadd.f32 %v3801, %v3917
    %v3919 = vpop.f32.mrb[0].mxu0
    %3920 = vmatprep.mubr.f32.mxu0 0.0
    %v3921 = vand.u32 %v3512, 4294901760
    %v3922 = vsub.f32 %v3512, %v3921
    %3923 = vmatmul.mubr.f32.gmra.mrb[0].mxu0 %v3922
    %v3924 = vpop.f32.mrb[0].mxu0
    %v3925 = vadd.f32 %v3807, %v3924
    %v3926 = vpop.f32.mrb[0].mxu0
    %3927 = vdwg.mxu0
    %3928 = vmatprep.subr.mxu0 0.0
    %v3929 = vand.u32 %v3513, 4294901760
    %3930 = vmatpush1.msra.mxu0 %v3929
    %3931 = vmatprep.subr.mxu0 0.0
    %v3932 = vand.u32 %v3514, 4294901760
    %3933 = vmatpush1.msra.mxu0 %v3932
    %3934 = vmatprep.subr.mxu0 0.0
    %v3935 = vand.u32 %v3515, 4294901760
    %3936 = vmatpush1.msra.mxu0 %v3935
    %3937 = vmatprep.subr.mxu0 0.0
    %v3938 = vand.u32 %v3516, 4294901760
    %3939 = vmatpush1.msra.mxu0 %v3938
    %3940 = vmatprep.subr.mxu0 0.0
    %v3941 = vand.u32 %v3517, 4294901760
    %3942 = vmatpush1.msra.mxu0 %v3941
    %3943 = vmatprep.subr.mxu0 0.0
    %v3944 = vand.u32 %v3518, 4294901760
    %3945 = vmatpush1.msra.mxu0 %v3944
    %3946 = vmatprep.subr.mxu0 0.0
    %v3947 = vand.u32 %v3519, 4294901760
    %3948 = vmatpush1.msra.mxu0 %v3947
    %3949 = vmatprep.subr.mxu0 0.0
    %v3950 = vand.u32 %v3520, 4294901760
    %3951 = vmatpush1.msra.mxu0 %v3950
    %3952 = vmatprep.subr.mxu0 0.0
    %v3953 = vand.u32 %v3521, 4294901760
    %3954 = vmatpush1.msra.mxu0 %v3953
    %3955 = vmatprep.subr.mxu0 0.0
    %v3956 = vand.u32 %v3522, 4294901760
    %3957 = vmatpush1.msra.mxu0 %v3956
    %3958 = vmatprep.subr.mxu0 0.0
    %v3959 = vand.u32 %v3523, 4294901760
    %3960 = vmatpush1.msra.mxu0 %v3959
    %3961 = vmatprep.subr.mxu0 0.0
    %v3962 = vand.u32 %v3524, 4294901760
    %3963 = vmatpush1.msra.mxu0 %v3962
    %3964 = vmatprep.subr.mxu0 0.0
    %v3965 = vand.u32 %v3525, 4294901760
    %3966 = vmatpush1.msra.mxu0 %v3965
    %3967 = vmatprep.subr.mxu0 0.0
    %v3968 = vand.u32 %v3526, 4294901760
    %3969 = vmatpush1.msra.mxu0 %v3968
    %3970 = vmatprep.subr.mxu0 0.0
    %v3971 = vand.u32 %v3527, 4294901760
    %3972 = vmatpush1.msra.mxu0 %v3971
    %3973 = vmatprep.subr.mxu0 0.0
    %v3974 = vand.u32 %v3528, 4294901760
    %3975 = vmatpush1.msra.mxu0 %v3974
    %3976 = vmatprep.subr.mxu0 0.0
    %3977 = vmatpush1.msra.mxu0 0.0
    %3978 = vmatprep.subr.mxu0 0.0
    %3979 = vmatpush1.msra.mxu0 0.0
    %3980 = vmatprep.subr.mxu0 0.0
    %3981 = vmatpush1.msra.mxu0 0.0
    %3982 = vmatprep.subr.mxu0 0.0
    %3983 = vmatpush1.msra.mxu0 0.0
    %3984 = vmatprep.subr.mxu0 0.0
    %3985 = vmatpush1.msra.mxu0 0.0
    %3986 = vmatprep.subr.mxu0 0.0
    %3987 = vmatpush1.msra.mxu0 0.0
    %3988 = vmatprep.subr.mxu0 0.0
    %3989 = vmatpush1.msra.mxu0 0.0
    %3990 = vmatprep.subr.mxu0 0.0
    %3991 = vmatpush1.msra.mxu0 0.0
    %3992 = vmatprep.subr.mxu0 0.0
    %3993 = vmatpush1.msra.mxu0 0.0
    %3994 = vmatprep.subr.mxu0 0.0
    %3995 = vmatpush1.msra.mxu0 0.0
    %3996 = vmatprep.subr.mxu0 0.0
    %3997 = vmatpush1.msra.mxu0 0.0
    %3998 = vmatprep.subr.mxu0 0.0
    %3999 = vmatpush1.msra.mxu0 0.0
    %4000 = vmatprep.subr.mxu0 0.0
    %4001 = vmatpush1.msra.mxu0 0.0
    %4002 = vmatprep.subr.mxu0 0.0
    %4003 = vmatpush1.msra.mxu0 0.0
    %4004 = vmatprep.subr.mxu0 0.0
    %4005 = vmatpush1.msra.mxu0 0.0
    %4006 = vmatprep.subr.mxu0 0.0
    %4007 = vmatpush1.msra.mxu0 0.0
    %4008 = vmatprep.mubr.f32.mxu0 0.0
    %v4009 = vand.u32 %v3510, 4294901760
    %v4010 = vsub.f32 %v3510, %v4009
    %v4011 = vand.u32 %v4010, 4294901760
    %4012 = vmatmul.mubr.f32.gmra.mrb[0].mxu0 %v4011
    %v4013 = vpop.f32.mrb[0].mxu0
    %v4014 = vadd.f32 %v3911, %v4013
    %v4015 = vpop.f32.mrb[0].mxu0
    %4016 = vmatprep.mubr.f32.mxu0 0.0
    %v4017 = vand.u32 %v3511, 4294901760
    %v4018 = vsub.f32 %v3511, %v4017
    %v4019 = vand.u32 %v4018, 4294901760
    %4020 = vmatmul.mubr.f32.gmra.mrb[0].mxu0 %v4019
    %v4021 = vpop.f32.mrb[0].mxu0
    %v4022 = vadd.f32 %v3918, %v4021
    %v4023 = vpop.f32.mrb[0].mxu0
    %4024 = vmatprep.mubr.f32.mxu0 0.0
    %v4025 = vand.u32 %v3512, 4294901760
    %v4026 = vsub.f32 %v3512, %v4025
    %v4027 = vand.u32 %v4026, 4294901760
    %4028 = vmatmul.mubr.f32.gmra.mrb[0].mxu0 %v4027
    %v4029 = vpop.f32.mrb[0].mxu0
    %v4030 = vadd.f32 %v3925, %v4029
    %v4031 = vpop.f32.mrb[0].mxu0
    %4032 = vdwg.mxu0
    %4033 = vmatprep.subr.mxu0 0.0
    %v4034 = vand.u32 %v3513, 4294901760
    %v4035 = vsub.f32 %v3513, %v4034
    %v4036 = vand.u32 %v4035, 4294901760
    %4037 = vmatpush1.msra.mxu0 %v4036
    %4038 = vmatprep.subr.mxu0 0.0
    %v4039 = vand.u32 %v3514, 4294901760
    %v4040 = vsub.f32 %v3514, %v4039
    %v4041 = vand.u32 %v4040, 4294901760
    %4042 = vmatpush1.msra.mxu0 %v4041
    %4043 = vmatprep.subr.mxu0 0.0
    %v4044 = vand.u32 %v3515, 4294901760
    %v4045 = vsub.f32 %v3515, %v4044
    %v4046 = vand.u32 %v4045, 4294901760
    %4047 = vmatpush1.msra.mxu0 %v4046
    %4048 = vmatprep.subr.mxu0 0.0
    %v4049 = vand.u32 %v3516, 4294901760
    %v4050 = vsub.f32 %v3516, %v4049
    %v4051 = vand.u32 %v4050, 4294901760
    %4052 = vmatpush1.msra.mxu0 %v4051
    %4053 = vmatprep.subr.mxu0 0.0
    %v4054 = vand.u32 %v3517, 4294901760
    %v4055 = vsub.f32 %v3517, %v4054
    %v4056 = vand.u32 %v4055, 4294901760
    %4057 = vmatpush1.msra.mxu0 %v4056
    %4058 = vmatprep.subr.mxu0 0.0
    %v4059 = vand.u32 %v3518, 4294901760
    %v4060 = vsub.f32 %v3518, %v4059
    %v4061 = vand.u32 %v4060, 4294901760
    %4062 = vmatpush1.msra.mxu0 %v4061
    %4063 = vmatprep.subr.mxu0 0.0
    %v4064 = vand.u32 %v3519, 4294901760
    %v4065 = vsub.f32 %v3519, %v4064
    %v4066 = vand.u32 %v4065, 4294901760
    %4067 = vmatpush1.msra.mxu0 %v4066
    %4068 = vmatprep.subr.mxu0 0.0
    %v4069 = vand.u32 %v3520, 4294901760
    %v4070 = vsub.f32 %v3520, %v4069
    %v4071 = vand.u32 %v4070, 4294901760
    %4072 = vmatpush1.msra.mxu0 %v4071
    %4073 = vmatprep.subr.mxu0 0.0
    %v4074 = vand.u32 %v3521, 4294901760
    %v4075 = vsub.f32 %v3521, %v4074
    %v4076 = vand.u32 %v4075, 4294901760
    %4077 = vmatpush1.msra.mxu0 %v4076
    %4078 = vmatprep.subr.mxu0 0.0
    %v4079 = vand.u32 %v3522, 4294901760
    %v4080 = vsub.f32 %v3522, %v4079
    %v4081 = vand.u32 %v4080, 4294901760
    %4082 = vmatpush1.msra.mxu0 %v4081
    %4083 = vmatprep.subr.mxu0 0.0
    %v4084 = vand.u32 %v3523, 4294901760
    %v4085 = vsub.f32 %v3523, %v4084
    %v4086 = vand.u32 %v4085, 4294901760
    %4087 = vmatpush1.msra.mxu0 %v4086
    %4088 = vmatprep.subr.mxu0 0.0
    %v4089 = vand.u32 %v3524, 4294901760
    %v4090 = vsub.f32 %v3524, %v4089
    %v4091 = vand.u32 %v4090, 4294901760
    %4092 = vmatpush1.msra.mxu0 %v4091
    %4093 = vmatprep.subr.mxu0 0.0
    %v4094 = vand.u32 %v3525, 4294901760
    %v4095 = vsub.f32 %v3525, %v4094
    %v4096 = vand.u32 %v4095, 4294901760
    %4097 = vmatpush1.msra.mxu0 %v4096
    %4098 = vmatprep.subr.mxu0 0.0
    %v4099 = vand.u32 %v3526, 4294901760
    %v4100 = vsub.f32 %v3526, %v4099
    %v4101 = vand.u32 %v4100, 4294901760
    %4102 = vmatpush1.msra.mxu0 %v4101
    %4103 = vmatprep.subr.mxu0 0.0
    %v4104 = vand.u32 %v3527, 4294901760
    %v4105 = vsub.f32 %v3527, %v4104
    %v4106 = vand.u32 %v4105, 4294901760
    %4107 = vmatpush1.msra.mxu0 %v4106
    %4108 = vmatprep.subr.mxu0 0.0
    %v4109 = vand.u32 %v3528, 4294901760
    %v4110 = vsub.f32 %v3528, %v4109
    %v4111 = vand.u32 %v4110, 4294901760
    %4112 = vmatpush1.msra.mxu0 %v4111
    %4113 = vmatprep.subr.mxu0 0.0
    %4114 = vmatpush1.msra.mxu0 0.0
    %4115 = vmatprep.subr.mxu0 0.0
    %4116 = vmatpush1.msra.mxu0 0.0
    %4117 = vmatprep.subr.mxu0 0.0
    %4118 = vmatpush1.msra.mxu0 0.0
    %4119 = vmatprep.subr.mxu0 0.0
    %4120 = vmatpush1.msra.mxu0 0.0
    %4121 = vmatprep.subr.mxu0 0.0
    %4122 = vmatpush1.msra.mxu0 0.0
    %4123 = vmatprep.subr.mxu0 0.0
    %4124 = vmatpush1.msra.mxu0 0.0
    %4125 = vmatprep.subr.mxu0 0.0
    %4126 = vmatpush1.msra.mxu0 0.0
    %4127 = vmatprep.subr.mxu0 0.0
    %4128 = vmatpush1.msra.mxu0 0.0
    %4129 = vmatprep.subr.mxu0 0.0
    %4130 = vmatpush1.msra.mxu0 0.0
    %4131 = vmatprep.subr.mxu0 0.0
    %4132 = vmatpush1.msra.mxu0 0.0
    %4133 = vmatprep.subr.mxu0 0.0
    %4134 = vmatpush1.msra.mxu0 0.0
    %4135 = vmatprep.subr.mxu0 0.0
    %4136 = vmatpush1.msra.mxu0 0.0
    %4137 = vmatprep.subr.mxu0 0.0
    %4138 = vmatpush1.msra.mxu0 0.0
    %4139 = vmatprep.subr.mxu0 0.0
    %4140 = vmatpush1.msra.mxu0 0.0
    %4141 = vmatprep.subr.mxu0 0.0
    %4142 = vmatpush1.msra.mxu0 0.0
    %4143 = vmatprep.subr.mxu0 0.0
    %4144 = vmatpush1.msra.mxu0 0.0
    %4145 = vmatprep.mubr.f32.mxu0 0.0
    %v4146 = vand.u32 %v3510, 4294901760
    %4147 = vmatmul.mubr.f32.gmra.mrb[0].mxu0 %v4146
    %v4148 = vpop.f32.mrb[0].mxu0
    %v4149 = vadd.f32 %v4014, %v4148
    %v4150 = vpop.f32.mrb[0].mxu0
    %4151 = vmatprep.mubr.f32.mxu0 0.0
    %v4152 = vand.u32 %v3511, 4294901760
    %4153 = vmatmul.mubr.f32.gmra.mrb[0].mxu0 %v4152
    %v4154 = vpop.f32.mrb[0].mxu0
    %v4155 = vadd.f32 %v4022, %v4154
    %v4156 = vpop.f32.mrb[0].mxu0
    %4157 = vmatprep.mubr.f32.mxu0 0.0
    %v4158 = vand.u32 %v3512, 4294901760
    %4159 = vmatmul.mubr.f32.gmra.mrb[0].mxu0 %v4158
    %v4160 = vpop.f32.mrb[0].mxu0
    %v4161 = vadd.f32 %v4030, %v4160
    %v4162 = vpop.f32.mrb[0].mxu0
    %4163 = vdwg.mxu0
    %4164 = vmatprep.subr.mxu0 0.0
    %v4165 = vand.u32 %v3513, 4294901760
    %4166 = vmatpush1.msra.mxu0 %v4165
    %4167 = vmatprep.subr.mxu0 0.0
    %v4168 = vand.u32 %v3514, 4294901760
    %4169 = vmatpush1.msra.mxu0 %v4168
    %4170 = vmatprep.subr.mxu0 0.0
    %v4171 = vand.u32 %v3515, 4294901760
    %4172 = vmatpush1.msra.mxu0 %v4171
    %4173 = vmatprep.subr.mxu0 0.0
    %v4174 = vand.u32 %v3516, 4294901760
    %4175 = vmatpush1.msra.mxu0 %v4174
    %4176 = vmatprep.subr.mxu0 0.0
    %v4177 = vand.u32 %v3517, 4294901760
    %4178 = vmatpush1.msra.mxu0 %v4177
    %4179 = vmatprep.subr.mxu0 0.0
    %v4180 = vand.u32 %v3518, 4294901760
    %4181 = vmatpush1.msra.mxu0 %v4180
    %4182 = vmatprep.subr.mxu0 0.0
    %v4183 = vand.u32 %v3519, 4294901760
    %4184 = vmatpush1.msra.mxu0 %v4183
    %4185 = vmatprep.subr.mxu0 0.0
    %v4186 = vand.u32 %v3520, 4294901760
    %4187 = vmatpush1.msra.mxu0 %v4186
    %4188 = vmatprep.subr.mxu0 0.0
    %v4189 = vand.u32 %v3521, 4294901760
    %4190 = vmatpush1.msra.mxu0 %v4189
    %4191 = vmatprep.subr.mxu0 0.0
    %v4192 = vand.u32 %v3522, 4294901760
    %4193 = vmatpush1.msra.mxu0 %v4192
    %4194 = vmatprep.subr.mxu0 0.0
    %v4195 = vand.u32 %v3523, 4294901760
    %4196 = vmatpush1.msra.mxu0 %v4195
    %4197 = vmatprep.subr.mxu0 0.0
    %v4198 = vand.u32 %v3524, 4294901760
    %4199 = vmatpush1.msra.mxu0 %v4198
    %4200 = vmatprep.subr.mxu0 0.0
    %v4201 = vand.u32 %v3525, 4294901760
    %4202 = vmatpush1.msra.mxu0 %v4201
    %4203 = vmatprep.subr.mxu0 0.0
    %v4204 = vand.u32 %v3526, 4294901760
    %4205 = vmatpush1.msra.mxu0 %v4204
    %4206 = vmatprep.subr.mxu0 0.0
    %v4207 = vand.u32 %v3527, 4294901760
    %4208 = vmatpush1.msra.mxu0 %v4207
    %4209 = vmatprep.subr.mxu0 0.0
    %v4210 = vand.u32 %v3528, 4294901760
    %4211 = vmatpush1.msra.mxu0 %v4210
    %4212 = vmatprep.subr.mxu0 0.0
    %4213 = vmatpush1.msra.mxu0 0.0
    %4214 = vmatprep.subr.mxu0 0.0
    %4215 = vmatpush1.msra.mxu0 0.0
    %4216 = vmatprep.subr.mxu0 0.0
    %4217 = vmatpush1.msra.mxu0 0.0
    %4218 = vmatprep.subr.mxu0 0.0
    %4219 = vmatpush1.msra.mxu0 0.0
    %4220 = vmatprep.subr.mxu0 0.0
    %4221 = vmatpush1.msra.mxu0 0.0
    %4222 = vmatprep.subr.mxu0 0.0
    %4223 = vmatpush1.msra.mxu0 0.0
    %4224 = vmatprep.subr.mxu0 0.0
    %4225 = vmatpush1.msra.mxu0 0.0
    %4226 = vmatprep.subr.mxu0 0.0
    %4227 = vmatpush1.msra.mxu0 0.0
    %4228 = vmatprep.subr.mxu0 0.0
    %4229 = vmatpush1.msra.mxu0 0.0
    %4230 = vmatprep.subr.mxu0 0.0
    %4231 = vmatpush1.msra.mxu0 0.0
    %4232 = vmatprep.subr.mxu0 0.0
    %4233 = vmatpush1.msra.mxu0 0.0
    %4234 = vmatprep.subr.mxu0 0.0
    %4235 = vmatpush1.msra.mxu0 0.0
    %4236 = vmatprep.subr.mxu0 0.0
    %4237 = vmatpush1.msra.mxu0 0.0
    %4238 = vmatprep.subr.mxu0 0.0
    %4239 = vmatpush1.msra.mxu0 0.0
    %4240 = vmatprep.subr.mxu0 0.0
    %4241 = vmatpush1.msra.mxu0 0.0
    %4242 = vmatprep.subr.mxu0 0.0
    %4243 = vmatpush1.msra.mxu0 0.0
    %4244 = vmatprep.mubr.f32.mxu0 0.0
    %v4245 = vand.u32 %v3510, 4294901760
    %4246 = vmatmul.mubr.f32.gmra.mrb[0].mxu0 %v4245
    %v4247 = vpop.f32.mrb[0].mxu0
    %v4248 = vadd.f32 %v4149, %v4247
    %v4249 = vpop.f32.mrb[0].mxu0
    %4250 = vmatprep.mubr.f32.mxu0 0.0
    %v4251 = vand.u32 %v3511, 4294901760
    %4252 = vmatmul.mubr.f32.gmra.mrb[0].mxu0 %v4251
    %v4253 = vpop.f32.mrb[0].mxu0
    %v4254 = vadd.f32 %v4155, %v4253
    %v4255 = vpop.f32.mrb[0].mxu0
    %4256 = vmatprep.mubr.f32.mxu0 0.0
    %v4257 = vand.u32 %v3512, 4294901760
    %4258 = vmatmul.mubr.f32.gmra.mrb[0].mxu0 %v4257
    %v4259 = vpop.f32.mrb[0].mxu0
    %v4260 = vadd.f32 %v4161, %v4259
    %v4261 = vpop.f32.mrb[0].mxu0
    %4262 = vdwg.mxu0
    %4263 = vst [vmem:[#allocation10] sm:$0xff] %v4248
    %4264 = vst [vmem:[#allocation10 + $0x8] sm:$0xff] %v4254
    %4265 = vst [vmem:[#allocation10 + $0x10] sm:$0xf] %v4260
    // Predicated region
    $region46: #{tpu_custom_call.1} parent=1 // pred_check
      _
    $region47: #{tpu_custom_call.1} parent=1 // pred_check_branch
      %4267 = sbr.rel (0) target = $region49
    $region48: #{tpu_custom_call.1} parent=1 // pred_region
      %s4269 = ssub.s32 384, 384
      %4270 = vsyncadd [#allocation4], %s4269
      %s4271 = sshll.u32 [#allocation10], 4
      %s4272 = int_to_ptr.vmem [resolvable:$true] %s4271
      %4277 = dma.vmem_to_hbm [thread:$0]  %s4272, 384, %s7, [#allocation4], 128, 128, 8
    $region49: #{tpu_custom_call.1} parent=1 // pred_fallthru
      _
    // Predicated region
    $region50: #{tpu_custom_call.1} parent=1 // pred_check
      _
    $region51: #{tpu_custom_call.1} parent=1 // pred_check_branch
      %4279 = sbr.rel (0) target = $region53
    $region52: #{tpu_custom_call.1} parent=1 // pred_region
      %4280 = dma.done [#allocation4], 384
    $region53: #{tpu_custom_call.1} parent=1 // pred_fallthru
      _
    %4281 = vsyncpa [#allocation3], 1
    %4282 = vsyncpa [#allocation6], 1
    %4283 = vsyncpa [#allocation9], 1
    %4284 = vsyncpa [#allocation4], 1

</llo_original>
